<compile_context>
chip_gen: v7x
topology: tpu7x:2x2x1
jax: 0.10.0
libtpu: 0.0.40
codegen_flags: <defaults>
</compile_context>

<pallas_src>
import functools
import math

import jax
import jax.numpy as jnp
import numpy as np
from jax import lax
from jax.experimental import pallas as pl
from jax.experimental.pallas import tpu as pltpu


# --------------------------------------------------------------------------- #
# Pallas kernel
# --------------------------------------------------------------------------- #
def _lstm_from_gates(gates, c_prev):
    """PyTorch LSTMCell gate order: i, f, g, o."""
    d = c_prev.shape[1]
    i = jax.nn.sigmoid(gates[:, 0:d])
    f = jax.nn.sigmoid(gates[:, d:2 * d])
    g = jnp.tanh(gates[:, 2 * d:3 * d])
    o = jax.nn.sigmoid(gates[:, 3 * d:4 * d])
    c_new = f * c_prev + i * g
    h_new = o * jnp.tanh(c_new)
    return h_new, c_new


def _decoder_kernel(
    bsz_ref,                                        # SMEM (maxT,) int32 (scalar prefetch)
    feats_ref, imgatt_ref, pre1_ref,                # per-batch-half / per-step inputs
    w_td_h2_ref, w_td_h1_ref,                       # TD LSTM split recurrent weights
    w_lang_aw_ref, w_lang_h1_ref, w_lang_h2_ref,    # language LSTM split weights
    w_hl_x_ref, w_hl_h_ref,                         # ARNet hidden LSTM split weights
    b_lang_ref, b_hl_ref,                           # biases (b_td folded into pre1)
    w_ad_ref, b_ad_ref, w_a_ref,                    # attention (img_att hoisted, b_a dropped)
    w_ar_ref, b_ar_ref,                             # arnet_linear
    h2out_ref, loss_ref,                            # outputs (h2 stream + ARNet loss)
    h1, c1, h2, c2, arh, arc, prev_h1, loss_acc,    # VMEM scratch (state + loss acc)
    *, att_in_bf16,
):
    b = pl.program_id(0)
    t = pl.program_id(1)
    hB, D = h1.shape
    f32 = jnp.float32
    bf = jnp.bfloat16
    att_dt = bf if att_in_bf16 else f32
    bsz = bsz_ref[t]

    row = lax.broadcasted_iota(jnp.int32, (hB, 1), 0) + b * hB
    active = row < bsz                               # (hB, 1) mask of the live prefix

    @pl.when(t == 0)
    def _init():
        for r in (h1, c1, h2, c2, arh, arc, prev_h1):
            r[...] = jnp.zeros_like(r)
        loss_acc[...] = jnp.zeros_like(loss_acc)

    h1_p, c1_p = h1[...], c1[...]
    h2_p, c2_p = h2[...], c2[...]
    arh_p, arc_p = arh[...], arc[...]
    prev_h1_v = prev_h1[...]

    # ---- top-down LSTM: accumulated dots (no concat) + hoisted (favg/emb/bias) term ----
    gates1 = (jnp.dot(h2_p.astype(bf), w_td_h2_ref[...], preferred_element_type=f32)
              + jnp.dot(h1_p.astype(bf), w_td_h1_ref[...], preferred_element_type=f32)
              + pre1_ref[0].astype(f32))
    h1_n, c1_n = _lstm_from_gates(gates1, c1_p)

    # ---- additive attention; img_att precomputed; lane-dense (hB, R) softmax ----
    h1_att = (jnp.dot(h1_n.astype(bf), w_ad_ref[...], preferred_element_type=f32)
              + b_ad_ref[...])                                              # (hB, A) f32
    att1 = jnp.maximum(imgatt_ref[...].astype(att_dt)
                       + h1_att.astype(att_dt)[:, None, :], 0)              # (hB, R, A)
    scores = jnp.sum(att1 * w_a_ref[...].astype(att_dt)[None, :, :],
                     axis=-1, dtype=f32)                                    # (hB, R)
    scores = scores - jnp.max(scores, axis=-1, keepdims=True)
    e = jnp.exp(scores)
    inv_den = pl.reciprocal(jnp.sum(e, axis=-1, keepdims=True), approx=True)
    alpha = e * inv_den                                                     # (hB, R) f32
    aw = jnp.sum(feats_ref[...].astype(att_dt) * alpha.astype(att_dt)[:, :, None],
                 axis=1, dtype=f32)                                         # (hB, F) f32

    # ---- language LSTM: accumulated dots over pre-split weights ----
    gates2 = (jnp.dot(aw.astype(bf), w_lang_aw_ref[...], preferred_element_type=f32)
              + jnp.dot(h1_n.astype(bf), w_lang_h1_ref[...], preferred_element_type=f32)
              + jnp.dot(h2_p.astype(bf), w_lang_h2_ref[...], preferred_element_type=f32)
              + b_lang_ref[...])
    h2_n, c2_n = _lstm_from_gates(gates2, c2_p)

    # ---- ARNet hidden LSTM + reconstruction loss (bf16 MXU operands, f32 loss math) ----
    gates3 = (jnp.dot(h1_n.astype(bf), w_hl_x_ref[...], preferred_element_type=f32)
              + jnp.dot(arh_p.astype(bf), w_hl_h_ref[...], preferred_element_type=f32)
              + b_hl_ref[...])
    arh_n, arc_n = _lstm_from_gates(gates3, arc_p)
    pred_prev = (jnp.dot(arh_n.astype(bf), w_ar_ref[...], preferred_element_type=f32)
                 + b_ar_ref[...])
    diff = pred_prev - prev_h1_v
    sq = jnp.sum(diff * diff, axis=1, keepdims=True)                        # (hB, 1)
    sq = jnp.where(active, sq, 0.0)
    step_loss = jnp.sum(sq, axis=0, keepdims=True) * (0.005 / bsz.astype(f32))

    @pl.when(t != 0)
    def _acc():
        loss_acc[...] = loss_acc[...] + step_loss

    @pl.when(t == pl.num_programs(1) - 1)
    def _emit_loss():
        loss_ref[...] = loss_acc[...].reshape(1, 1, 1)

    # ---- masked state carry: rows >= bsz are frozen and never read again ----
    h1_c = jnp.where(active, h1_n, h1_p)
    c1_c = jnp.where(active, c1_n, c1_p)
    h2_c = jnp.where(active, h2_n, h2_p)
    c2_c = jnp.where(active, c2_n, c2_p)
    arh_c = jnp.where(active, arh_n, arh_p)
    arc_c = jnp.where(active, arc_n, arc_p)
    h1[...] = h1_c
    c1[...] = c1_c
    h2[...] = h2_c
    c2[...] = c2_c
    arh[...] = arh_c
    arc[...] = arc_c
    prev_h1[...] = jnp.where(active, h1_n, prev_h1_v)

    # ---- emit h2 (vocab projection hoisted to the wrapper; masked there) ----
    h2out_ref[0] = h2_c.astype(bf)


# --------------------------------------------------------------------------- #
# Chip detection helpers (cached; safe defaults)
# --------------------------------------------------------------------------- #
@functools.lru_cache(maxsize=None)
def _device_kind():
    try:
        return jax.devices()[0].device_kind.lower()
    except Exception:
        return ""


def _select_num_batch_splits(batch_size):
    # Two halves only on v7x (2 TensorCores) and only with >=64 real rows per half.
    if "v7" in _device_kind() and batch_size >= 128:
        return 2
    return 1


def _att_elementwise_in_bf16():
    # v5e / older VPUs have no native bf16 elementwise; keep f32 there (always correct).
    kind = _device_kind()
    return ("v6" in kind) or ("v7" in kind)


def _vmem_limit_bytes():
    # v7x has 64 MiB physical VMEM per TensorCore; leave headroom. 128 MiB parts get 96.
    if "v7" in _device_kind():
        return 48 * 1024 * 1024
    return 96 * 1024 * 1024


# --------------------------------------------------------------------------- #
# Jitted forward core: hoisted precompute + pallas_call + hoisted vocab projection
# --------------------------------------------------------------------------- #
@functools.partial(jax.jit,
                   static_argnames=("maxT", "nb", "att_in_bf16", "vmem_limit"))
def _forward_core(params, feats, sequences, sizes_flat, *, maxT, nb, att_in_bf16,
                  vmem_limit):
    f32, bf = jnp.float32, jnp.bfloat16
    B, R, F = feats.shape
    D = params["w_td_h"].shape[0]
    V = params["w_lin"].shape[1]

    featsAvg = jnp.mean(feats, axis=1)
    positions = jnp.argsort(-sizes_flat)                  # descending sort
    sizes_sorted = sizes_flat[positions]
    decode_lengths = sizes_sorted - 1
    sequences_s = sequences[positions]
    feats_s = feats[positions]
    favg_s = featsAvg[positions]

    bsizes = jnp.sum(decode_lengths[None, :] > jnp.arange(maxT)[:, None],
                     axis=1).astype(jnp.int32)

    # ---- pad batch so each half is a multiple of 16 rows (sublane-dense bf16) ----
    mult = 16 * nb
    B_pad = ((B + mult - 1) // mult) * mult
    hB = B_pad // nb
    pb = B_pad - B

    feats_p = jnp.pad(feats_s, ((0, pb), (0, 0), (0, 0)))
    favg_p = jnp.pad(favg_s, ((0, pb), (0, 0)))
    seq_p = jnp.pad(sequences_s, ((0, pb), (0, 0)))

    # ---- hoisted, time-invariant precomputation (single big matmuls) ----
    w_td_x = params["w_td_x"]                             # (D + F + E, 4D)
    W_h2, W_f, W_e = w_td_x[:D], w_td_x[D:D + F], w_td_x[D + F:]
    emb = params["embedding"][seq_p[:, :maxT]]            # (B_pad, T, E) f32
    pre_gate1 = (jnp.einsum("bte,eg->tbg", emb, W_e)
                 + (favg_p @ W_f)[None]
                 + params["b_td"][None]).astype(bf)        # (T, B_pad, 4D) bf16
    img_att = (jnp.einsum("brf,fa->bra", feats_p, params["w_af"])
               + params["b_af"]).astype(bf)                # (B_pad, R, A) bf16
    feats_bf = feats_p.astype(bf)
    # NOTE: b_a (scalar added to every score) is softmax-invariant -> dropped.

    w_lang_x = params["w_lang_x"]                          # (F + D, 4D)
    weight_inputs = [
        W_h2.astype(bf), params["w_td_h"].astype(bf),                     # TD
        w_lang_x[:F].astype(bf), w_lang_x[F:].astype(bf),                 # language
        params["w_lang_h"].astype(bf),
        params["w_hl_x"].astype(bf), params["w_hl_h"].astype(bf),         # ARNet LSTM
        params["b_lang"].astype(f32), params["b_hl"].astype(f32),
        params["w_ad"].astype(bf), params["b_ad"].astype(f32),
        params["w_a"].astype(f32),
        params["w_ar"].astype(bf), params["b_ar"].astype(f32),
    ]

    def _batch_spec(arr):
        return pl.BlockSpec((hB,) + arr.shape[1:], lambda b, t, bs: (b, 0, 0))

    def _inv_spec(arr):
        nd = arr.ndim
        return pl.BlockSpec(arr.shape, lambda b, t, bs, _nd=nd: (0,) * _nd)

    in_specs = [
        _batch_spec(feats_bf),
        _batch_spec(img_att),
        pl.BlockSpec((1, hB, 4 * D), lambda b, t, bs: (t, b, 0)),
    ] + [_inv_spec(w) for w in weight_inputs]

    out_specs = [
        pl.BlockSpec((1, hB, D), lambda b, t, bs: (t, b, 0)),   # h2 stream
        pl.BlockSpec((1, 1, 1), lambda b, t, bs: (b, 0, 0)),    # per-half loss
    ]

    grid_spec = pltpu.PrefetchScalarGridSpec(
        num_scalar_prefetch=1,
        grid=(nb, maxT),
        in_specs=in_specs,
        out_specs=out_specs,
        scratch_shapes=[pltpu.VMEM((hB, D), f32) for _ in range(7)]
                       + [pltpu.VMEM((1, 1), f32)],
    )

    kernel = functools.partial(_decoder_kernel, att_in_bf16=att_in_bf16)
    h2_tbd, loss_pb = pl.pallas_call(
        kernel,
        out_shape=(jax.ShapeDtypeStruct((maxT, B_pad, D), bf),
                   jax.ShapeDtypeStruct((nb, 1, 1), f32)),
        grid_spec=grid_spec,
        compiler_params=pltpu.CompilerParams(
            dimension_semantics=("parallel", "arbitrary"),
            vmem_limit_bytes=vmem_limit,
        ),
    )(bsizes, feats_bf, img_att, pre_gate1, *weight_inputs)

    # ---- hoisted vocab projection: one big bf16 matmul at full MXU row fill ----
    h2_btd = jnp.transpose(h2_tbd, (1, 0, 2))[:B]                    # (B, T, D) bf16
    logits = (jnp.dot(h2_btd.reshape(B * maxT, D), params["w_lin"].astype(bf),
                      preferred_element_type=f32)
              + params["b_lin"]).reshape(B, maxT, V)
    valid = jnp.arange(maxT)[None, :] < decode_lengths[:, None]      # (B, T)
    preds = jnp.where(valid[:, :, None], logits, 0.0)

    loss_ar = jnp.sum(loss_pb)
    return preds, sequences_s, positions, decode_lengths, loss_ar


def decoder_att_module_forward(params, feats, sequences, sizes):
    sizes_flat = jnp.squeeze(sizes, axis=1)
    maxT = int(np.max(np.asarray(sizes_flat))) - 1          # static for jit
    nb = _select_num_batch_splits(int(feats.shape[0]))
    preds, sequences_s, positions, decode_lengths, loss_ar = _forward_core(
        params, feats, sequences, sizes_flat,
        maxT=maxT, nb=nb, att_in_bf16=_att_elementwise_in_bf16(),
        vmem_limit=_vmem_limit_bytes())
    decode_lengths_list = [int(x) for x in np.asarray(decode_lengths)]
    return preds, sequences_s, decode_lengths_list, positions, loss_ar


# --------------------------------------------------------------------------- #
# Deterministic synthetic parameters (shapes follow the module's __init__)
# --------------------------------------------------------------------------- #
def init_params(key, attSize, embedSize, decodeSize, vocabSize, featureSize):
    ks = iter(jax.random.split(key, 32))

    def nxt():
        return next(ks)

    def wn_linear(out_d, in_d):
        # weight_norm reparam: W = g * v / ||v||_row
        v = jax.random.normal(nxt(), (out_d, in_d), jnp.float32) * 0.1
        g = jax.random.uniform(nxt(), (out_d, 1), jnp.float32, minval=0.5, maxval=1.5)
        w = g * v / jnp.linalg.norm(v, axis=1, keepdims=True)
        b = jax.random.normal(nxt(), (out_d,), jnp.float32) * 0.05
        return jnp.transpose(w), b[None, :]              # (in, out), (1, out)

    def lstm_cell(in_d, hid):
        bound = 1.0 / math.sqrt(hid)
        w_ih = jax.random.uniform(nxt(), (4 * hid, in_d), jnp.float32, -bound, bound)
        w_hh = jax.random.uniform(nxt(), (4 * hid, hid), jnp.float32, -bound, bound)
        b = (jax.random.uniform(nxt(), (4 * hid,), jnp.float32, -bound, bound)
             + jax.random.uniform(nxt(), (4 * hid,), jnp.float32, -bound, bound))
        return jnp.transpose(w_ih), jnp.transpose(w_hh), b[None, :]

    p = {}
    # AttModule (weight-normed linears)
    p["w_af"], p["b_af"] = wn_linear(attSize, featureSize)
    p["w_ad"], p["b_ad"] = wn_linear(attSize, decodeSize)
    w_a, b_a = wn_linear(1, attSize)
    p["w_a"] = jnp.transpose(w_a)                        # (1, attSize)
    p["b_a"] = b_a.reshape(1, 1)
    # embedding (init_weights: uniform(-0.1, 0.1))
    p["embedding"] = jax.random.uniform(nxt(), (vocabSize, embedSize),
                                        jnp.float32, -0.1, 0.1)
    # LSTM cells
    p["w_td_x"], p["w_td_h"], p["b_td"] = lstm_cell(
        decodeSize + featureSize + embedSize, decodeSize)
    p["w_lang_x"], p["w_lang_h"], p["b_lang"] = lstm_cell(
        featureSize + decodeSize, decodeSize)
    p["w_hl_x"], p["w_hl_h"], p["b_hl"] = lstm_cell(decodeSize, decodeSize)
    # output projection (init_weights: weight uniform(-0.1, 0.1), bias 0)
    w_lin = jax.random.uniform(nxt(), (vocabSize, decodeSize), jnp.float32, -0.1, 0.1)
    p["w_lin"] = jnp.transpose(w_lin)
    p["b_lin"] = jnp.zeros((1, vocabSize), jnp.float32)
    # arnet_linear (plain nn.Linear default init)
    bound = 1.0 / math.sqrt(decodeSize)
    p["w_ar"] = jnp.transpose(
        jax.random.uniform(nxt(), (decodeSize, decodeSize), jnp.float32, -bound, bound))
    p["b_ar"] = jax.random.uniform(nxt(), (1, decodeSize), jnp.float32, -bound, bound)
    return p


# --------------------------------------------------------------------------- #
# Pure-JAX reference (mirrors the PyTorch loop with real shrinking batches)
# --------------------------------------------------------------------------- #
def reference_forward(p, feats, sequences, sizes):
    B = feats.shape[0]
    D = p["w_td_h"].shape[0]
    V = p["w_lin"].shape[1]

    featsAvg = jnp.mean(feats, axis=1)
    sizes_flat = jnp.squeeze(sizes, axis=1)
    positions = jnp.argsort(-sizes_flat)
    sizes_sorted = sizes_flat[positions]
    decode_lengths = [int(s) - 1 for s in np.asarray(sizes_sorted)]
    sequences_s = sequences[positions]
    feats_s = feats[positions]
    favg_s = featsAvg[positions]
    embeddings = p["embedding"][sequences_s]

    def lstm_cell(x, h, c, w_x, w_h, b):
        g = x @ w_x + h @ w_h + b
        d = h.shape[1]
        i = jax.nn.sigmoid(g[:, :d])
        f = jax.nn.sigmoid(g[:, d:2 * d])
        gg = jnp.tanh(g[:, 2 * d:3 * d])
        o = jax.nn.sigmoid(g[:, 3 * d:])
        c_new = f * c + i * gg
        return o * jnp.tanh(c_new), c_new

    hidden1 = jnp.zeros((B, D)); cell1 = jnp.zeros((B, D))
    hidden2 = jnp.zeros((B, D)); cell2 = jnp.zeros((B, D))
    maxT = max(decode_lengths)
    preds = jnp.zeros((B, maxT, V))
    hidden_states1 = []
    loss_ar = jnp.float32(0.0)

    for t in range(maxT):
        bsz = sum(l > t for l in decode_lengths)
        x1 = jnp.concatenate(
            [hidden2[:bsz], favg_s[:bsz], embeddings[:bsz, t, :]], axis=1)
        hidden1, cell1 = lstm_cell(x1, hidden1[:bsz], cell1[:bsz],
                                   p["w_td_x"], p["w_td_h"], p["b_td"])
        # attention
        h1_att = hidden1 @ p["w_ad"] + p["b_ad"]
        img_att = jnp.einsum("brf,fa->bra", feats_s[:bsz], p["w_af"]) + p["b_af"]
        att1 = jax.nn.relu(h1_att[:, None, :] + img_att)
        att2 = jnp.sum(att1 * p["w_a"][None], axis=2) + p["b_a"][0, 0]
        alpha = jax.nn.softmax(att2, axis=1)
        aw = jnp.sum(feats_s[:bsz] * alpha[:, :, None], axis=1)
        x2 = jnp.concatenate([aw, hidden1], axis=1)
        hidden2, cell2 = lstm_cell(x2, hidden2[:bsz], cell2[:bsz],
                                   p["w_lang_x"], p["w_lang_h"], p["b_lang"])
        if t != 0:
            prev_ac = hidden_states1[t - 1][2][:bsz]
            prev_ah = hidden_states1[t - 1][1][:bsz]
            prev_h1 = hidden_states1[t - 1][0][:bsz]
            arnet_h, arnet_c = lstm_cell(hidden1, prev_ah, prev_ac,
                                         p["w_hl_x"], p["w_hl_h"], p["b_hl"])
            pred_prev = arnet_h @ p["w_ar"] + p["b_ar"]
            diff = pred_prev - prev_h1
            loss_ar = loss_ar + jnp.sum(diff * diff) / bsz * 0.005
        else:
            arnet_h, arnet_c = lstm_cell(hidden1, jnp.zeros((bsz, D)),
                                         jnp.zeros((bsz, D)),
                                         p["w_hl_x"], p["w_hl_h"], p["b_hl"])
        hidden_states1.append((hidden1, arnet_h, arnet_c))
        logits = hidden2 @ p["w_lin"] + p["b_lin"]
        preds = preds.at[:bsz, t, :].set(logits)
    return preds, loss_ar


# --------------------------------------------------------------------------- #
if __name__ == "__main__":
    key = jax.random.PRNGKey(0)
    B, R = 4, 8
    featureSize, decodeSize, attSize, embedSize, vocabSize = 32, 16, 16, 16, 32
    L = 7

    kp, kf, kq = jax.random.split(key, 3)
    params = init_params(kp, attSize, embedSize, decodeSize, vocabSize, featureSize)
    feats = jax.random.normal(kf, (B, R, featureSize), jnp.float32)
    sequences = jax.random.randint(kq, (B, L), 0, vocabSize, dtype=jnp.int32)
    sizes = jnp.array([[4], [7], [3], [6]], dtype=jnp.int32)

    preds, seq_sorted, decode_lengths, positions, loss_ar = \
        decoder_att_module_forward(params, feats, sequences, sizes)
    jax.block_until_ready((preds, loss_ar))

    preds_ref, loss_ref = reference_forward(params, feats, sequences, sizes)
    # bf16 weights/activations in the kernel -> slightly looser tolerance than pure f32
    np.testing.assert_allclose(np.asarray(preds), np.asarray(preds_ref),
                               atol=5e-2, rtol=5e-2)
    np.testing.assert_allclose(float(loss_ar), float(loss_ref),
                               atol=5e-2, rtol=5e-2)
    print("KERNEL_OK")
</pallas_src>

<mosaic_0001>
module attributes {stable_mosaic.version = 11 : i64} {
  func.func @_decoder_kernel(%arg0: i32, %arg1: i32, %arg2: memref<6xi32, #tpu.memory_space<smem>>, %arg3: memref<16x8x32xbf16, #tpu.memory_space<vmem>>, %arg4: memref<16x8x16xbf16, #tpu.memory_space<vmem>>, %arg5: memref<1x16x64xbf16, #tpu.memory_space<vmem>>, %arg6: memref<16x64xbf16, #tpu.memory_space<vmem>>, %arg7: memref<16x64xbf16, #tpu.memory_space<vmem>>, %arg8: memref<32x64xbf16, #tpu.memory_space<vmem>>, %arg9: memref<16x64xbf16, #tpu.memory_space<vmem>>, %arg10: memref<16x64xbf16, #tpu.memory_space<vmem>>, %arg11: memref<16x64xbf16, #tpu.memory_space<vmem>>, %arg12: memref<16x64xbf16, #tpu.memory_space<vmem>>, %arg13: memref<1x64xf32, #tpu.memory_space<vmem>>, %arg14: memref<1x64xf32, #tpu.memory_space<vmem>>, %arg15: memref<16x16xbf16, #tpu.memory_space<vmem>>, %arg16: memref<1x16xf32, #tpu.memory_space<vmem>>, %arg17: memref<1x16xf32, #tpu.memory_space<vmem>>, %arg18: memref<16x16xbf16, #tpu.memory_space<vmem>>, %arg19: memref<1x16xf32, #tpu.memory_space<vmem>>, %arg20: memref<1x16x16xbf16, #tpu.memory_space<vmem>>, %arg21: memref<1x1x1xf32, #tpu.memory_space<vmem>>, %arg22: memref<16x16xf32, #tpu.memory_space<vmem>>, %arg23: memref<16x16xf32, #tpu.memory_space<vmem>>, %arg24: memref<16x16xf32, #tpu.memory_space<vmem>>, %arg25: memref<16x16xf32, #tpu.memory_space<vmem>>, %arg26: memref<16x16xf32, #tpu.memory_space<vmem>>, %arg27: memref<16x16xf32, #tpu.memory_space<vmem>>, %arg28: memref<16x16xf32, #tpu.memory_space<vmem>>, %arg29: memref<1x1xf32, #tpu.memory_space<vmem>>) attributes {dimension_semantics = [#tpu.dimension_semantics<parallel>, #tpu.dimension_semantics<arbitrary>], iteration_bounds = array<i64: 1, 6>, scalar_prefetch = 1 : i64, scratch_operands = 8 : i64, tpu.core_type = #tpu.core_type<tc>, window_params = [{transform_indices = @transform_0, window_bounds = array<i64: 16, 8, 32>}, {transform_indices = @transform_1, window_bounds = array<i64: 16, 8, 16>}, {transform_indices = @transform_2, window_bounds = array<i64: 1, 16, 64>}, {pipeline_mode = #tpu.pipeline_mode<synchronous>, transform_indices = @transform_3, window_bounds = array<i64: 16, 64>}, {pipeline_mode = #tpu.pipeline_mode<synchronous>, transform_indices = @transform_4, window_bounds = array<i64: 16, 64>}, {pipeline_mode = #tpu.pipeline_mode<synchronous>, transform_indices = @transform_5, window_bounds = array<i64: 32, 64>}, {pipeline_mode = #tpu.pipeline_mode<synchronous>, transform_indices = @transform_6, window_bounds = array<i64: 16, 64>}, {pipeline_mode = #tpu.pipeline_mode<synchronous>, transform_indices = @transform_7, window_bounds = array<i64: 16, 64>}, {pipeline_mode = #tpu.pipeline_mode<synchronous>, transform_indices = @transform_8, window_bounds = array<i64: 16, 64>}, {pipeline_mode = #tpu.pipeline_mode<synchronous>, transform_indices = @transform_9, window_bounds = array<i64: 16, 64>}, {pipeline_mode = #tpu.pipeline_mode<synchronous>, transform_indices = @transform_10, window_bounds = array<i64: 1, 64>}, {pipeline_mode = #tpu.pipeline_mode<synchronous>, transform_indices = @transform_11, window_bounds = array<i64: 1, 64>}, {pipeline_mode = #tpu.pipeline_mode<synchronous>, transform_indices = @transform_12, window_bounds = array<i64: 16, 16>}, {pipeline_mode = #tpu.pipeline_mode<synchronous>, transform_indices = @transform_13, window_bounds = array<i64: 1, 16>}, {pipeline_mode = #tpu.pipeline_mode<synchronous>, transform_indices = @transform_14, window_bounds = array<i64: 1, 16>}, {pipeline_mode = #tpu.pipeline_mode<synchronous>, transform_indices = @transform_15, window_bounds = array<i64: 16, 16>}, {pipeline_mode = #tpu.pipeline_mode<synchronous>, transform_indices = @transform_16, window_bounds = array<i64: 1, 16>}, {transform_indices = @transform_17, window_bounds = array<i64: 1, 16, 16>}, {transform_indices = @transform_18, window_bounds = array<i64: 1, 1, 1>}]} {
    %0 = arith.index_cast %arg1 : i32 to index
    %1 = memref.load %arg2[%0] : memref<6xi32, #tpu.memory_space<smem>>
    %2 = tpu.iota {dimensions = array<i32: 0>} : vector<16x1xi32>
    %c16_i32 = arith.constant 16 : i32
    %3 = arith.muli %arg0, %c16_i32 : i32
    %4 = vector.broadcast %3 : i32 to vector<16x1xi32>
    %5 = arith.addi %2, %4 : vector<16x1xi32>
    %6 = vector.broadcast %1 : i32 to vector<16x1xi32>
    %7 = arith.cmpi slt, %5, %6 : vector<16x1xi32>
    %c0_i32 = arith.constant 0 : i32
    %8 = arith.cmpi eq, %arg1, %c0_i32 : i32
    %9 = arith.extui %8 : i1 to i32
    %c0_i32_0 = arith.constant 0 : i32
    %10 = arith.cmpi ne, %9, %c0_i32_0 : i32
    scf.if %10 {
      %cst_97 = arith.constant 0.000000e+00 : f32
      %218 = vector.broadcast %cst_97 : f32 to vector<16x16xf32>
      %c0_98 = arith.constant 0 : index
      %c0_99 = arith.constant 0 : index
      %219 = vector.load %arg22[%c0_98, %c0_99] : memref<16x16xf32, #tpu.memory_space<vmem>>, vector<16x16xf32>
      tpu.vector_store %arg22[%c0_98, %c0_99], %218 {strides = array<i32>} : memref<16x16xf32, #tpu.memory_space<vmem>>, vector<16x16xf32>,
      %cst_100 = arith.constant 0.000000e+00 : f32
      %220 = vector.broadcast %cst_100 : f32 to vector<16x16xf32>
      %c0_101 = arith.constant 0 : index
      %c0_102 = arith.constant 0 : index
      %221 = vector.load %arg23[%c0_101, %c0_102] : memref<16x16xf32, #tpu.memory_space<vmem>>, vector<16x16xf32>
      tpu.vector_store %arg23[%c0_101, %c0_102], %220 {strides = array<i32>} : memref<16x16xf32, #tpu.memory_space<vmem>>, vector<16x16xf32>,
      %cst_103 = arith.constant 0.000000e+00 : f32
      %222 = vector.broadcast %cst_103 : f32 to vector<16x16xf32>
      %c0_104 = arith.constant 0 : index
      %c0_105 = arith.constant 0 : index
      %223 = vector.load %arg24[%c0_104, %c0_105] : memref<16x16xf32, #tpu.memory_space<vmem>>, vector<16x16xf32>
      tpu.vector_store %arg24[%c0_104, %c0_105], %222 {strides = array<i32>} : memref<16x16xf32, #tpu.memory_space<vmem>>, vector<16x16xf32>,
      %cst_106 = arith.constant 0.000000e+00 : f32
      %224 = vector.broadcast %cst_106 : f32 to vector<16x16xf32>
      %c0_107 = arith.constant 0 : index
      %c0_108 = arith.constant 0 : index
      %225 = vector.load %arg25[%c0_107, %c0_108] : memref<16x16xf32, #tpu.memory_space<vmem>>, vector<16x16xf32>
      tpu.vector_store %arg25[%c0_107, %c0_108], %224 {strides = array<i32>} : memref<16x16xf32, #tpu.memory_space<vmem>>, vector<16x16xf32>,
      %cst_109 = arith.constant 0.000000e+00 : f32
      %226 = vector.broadcast %cst_109 : f32 to vector<16x16xf32>
      %c0_110 = arith.constant 0 : index
      %c0_111 = arith.constant 0 : index
      %227 = vector.load %arg26[%c0_110, %c0_111] : memref<16x16xf32, #tpu.memory_space<vmem>>, vector<16x16xf32>
      tpu.vector_store %arg26[%c0_110, %c0_111], %226 {strides = array<i32>} : memref<16x16xf32, #tpu.memory_space<vmem>>, vector<16x16xf32>,
      %cst_112 = arith.constant 0.000000e+00 : f32
      %228 = vector.broadcast %cst_112 : f32 to vector<16x16xf32>
      %c0_113 = arith.constant 0 : index
      %c0_114 = arith.constant 0 : index
      %229 = vector.load %arg27[%c0_113, %c0_114] : memref<16x16xf32, #tpu.memory_space<vmem>>, vector<16x16xf32>
      tpu.vector_store %arg27[%c0_113, %c0_114], %228 {strides = array<i32>} : memref<16x16xf32, #tpu.memory_space<vmem>>, vector<16x16xf32>,
      %cst_115 = arith.constant 0.000000e+00 : f32
      %230 = vector.broadcast %cst_115 : f32 to vector<16x16xf32>
      %c0_116 = arith.constant 0 : index
      %c0_117 = arith.constant 0 : index
      %231 = vector.load %arg28[%c0_116, %c0_117] : memref<16x16xf32, #tpu.memory_space<vmem>>, vector<16x16xf32>
      tpu.vector_store %arg28[%c0_116, %c0_117], %230 {strides = array<i32>} : memref<16x16xf32, #tpu.memory_space<vmem>>, vector<16x16xf32>,
      %cst_118 = arith.constant 0.000000e+00 : f32
      %232 = vector.broadcast %cst_118 : f32 to vector<1x1xf32>
      %c0_119 = arith.constant 0 : index
      %c0_120 = arith.constant 0 : index
      %233 = vector.load %arg29[%c0_119, %c0_120] : memref<1x1xf32, #tpu.memory_space<vmem>>, vector<1x1xf32>
      tpu.vector_store %arg29[%c0_119, %c0_120], %232 {strides = array<i32>} : memref<1x1xf32, #tpu.memory_space<vmem>>, vector<1x1xf32>,
    } else {
    }
    %c0 = arith.constant 0 : index
    %c0_1 = arith.constant 0 : index
    %11 = vector.load %arg22[%c0, %c0_1] : memref<16x16xf32, #tpu.memory_space<vmem>>, vector<16x16xf32>
    %c0_2 = arith.constant 0 : index
    %c0_3 = arith.constant 0 : index
    %12 = vector.load %arg23[%c0_2, %c0_3] : memref<16x16xf32, #tpu.memory_space<vmem>>, vector<16x16xf32>
    %c0_4 = arith.constant 0 : index
    %c0_5 = arith.constant 0 : index
    %13 = vector.load %arg24[%c0_4, %c0_5] : memref<16x16xf32, #tpu.memory_space<vmem>>, vector<16x16xf32>
    %c0_6 = arith.constant 0 : index
    %c0_7 = arith.constant 0 : index
    %14 = vector.load %arg25[%c0_6, %c0_7] : memref<16x16xf32, #tpu.memory_space<vmem>>, vector<16x16xf32>
    %c0_8 = arith.constant 0 : index
    %c0_9 = arith.constant 0 : index
    %15 = vector.load %arg26[%c0_8, %c0_9] : memref<16x16xf32, #tpu.memory_space<vmem>>, vector<16x16xf32>
    %c0_10 = arith.constant 0 : index
    %c0_11 = arith.constant 0 : index
    %16 = vector.load %arg27[%c0_10, %c0_11] : memref<16x16xf32, #tpu.memory_space<vmem>>, vector<16x16xf32>
    %c0_12 = arith.constant 0 : index
    %c0_13 = arith.constant 0 : index
    %17 = vector.load %arg28[%c0_12, %c0_13] : memref<16x16xf32, #tpu.memory_space<vmem>>, vector<16x16xf32>
    %18 = arith.truncf %13 : vector<16x16xf32> to vector<16x16xbf16>
    %c0_14 = arith.constant 0 : index
    %c0_15 = arith.constant 0 : index
    %19 = vector.load %arg6[%c0_14, %c0_15] : memref<16x64xbf16, #tpu.memory_space<vmem>>, vector<16x64xbf16>
    %cst = arith.constant dense<0.000000e+00> : vector<16x64xf32>
    %20 = tpu.matmul %18, %19, %cst {dimension_numbers = #tpu.dot_dimension_numbers<[1], [0], [0], [1], [0, 0, 1, 1], [], []>} : vector<16x16xbf16>, vector<16x64xbf16>, vector<16x64xf32> -> vector<16x64xf32>
    %21 = arith.truncf %11 : vector<16x16xf32> to vector<16x16xbf16>
    %c0_16 = arith.constant 0 : index
    %c0_17 = arith.constant 0 : index
    %22 = vector.load %arg7[%c0_16, %c0_17] : memref<16x64xbf16, #tpu.memory_space<vmem>>, vector<16x64xbf16>
    %cst_18 = arith.constant dense<0.000000e+00> : vector<16x64xf32>
    %23 = tpu.matmul %21, %22, %cst_18 {dimension_numbers = #tpu.dot_dimension_numbers<[1], [0], [0], [1], [0, 0, 1, 1], [], []>} : vector<16x16xbf16>, vector<16x64xbf16>, vector<16x64xf32> -> vector<16x64xf32>
    %24 = arith.addf %20, %23 : vector<16x64xf32>
    %c0_19 = arith.constant 0 : index
    %c0_20 = arith.constant 0 : index
    %c0_21 = arith.constant 0 : index
    %25 = vector.load %arg5[%c0_19, %c0_20, %c0_21] : memref<1x16x64xbf16, #tpu.memory_space<vmem>>, vector<1x16x64xbf16>
    %26 = vector.shape_cast %25 : vector<1x16x64xbf16> to vector<16x64xbf16>
    %27 = arith.extf %26 : vector<16x64xbf16> to vector<16x64xf32>
    %28 = arith.addf %24, %27 : vector<16x64xf32>
    %29 = vector.extract_strided_slice %28 {offsets = [0, 0], sizes = [16, 16], strides = [1, 1]} : vector<16x64xf32> to vector<16x16xf32>
    %30 = arith.negf %29 : vector<16x16xf32>
    %31 = math.exp %30 : vector<16x16xf32>
    %cst_22 = arith.constant 1.000000e+00 : f32
    %32 = vector.broadcast %cst_22 : f32 to vector<16x16xf32>
    %33 = arith.addf %32, %31 : vector<16x16xf32>
    %34 = arith.divf %32, %33 : vector<16x16xf32>
    %35 = vector.extract_strided_slice %28 {offsets = [0, 16], sizes = [16, 16], strides = [1, 1]} : vector<16x64xf32> to vector<16x16xf32>
    %36 = arith.negf %35 : vector<16x16xf32>
    %37 = math.exp %36 : vector<16x16xf32>
    %cst_23 = arith.constant 1.000000e+00 : f32
    %38 = vector.broadcast %cst_23 : f32 to vector<16x16xf32>
    %39 = arith.addf %38, %37 : vector<16x16xf32>
    %40 = arith.divf %38, %39 : vector<16x16xf32>
    %41 = vector.extract_strided_slice %28 {offsets = [0, 32], sizes = [16, 16], strides = [1, 1]} : vector<16x64xf32> to vector<16x16xf32>
    %42 = math.tanh %41 : vector<16x16xf32>
    %43 = vector.extract_strided_slice %28 {offsets = [0, 48], sizes = [16, 16], strides = [1, 1]} : vector<16x64xf32> to vector<16x16xf32>
    %44 = arith.negf %43 : vector<16x16xf32>
    %45 = math.exp %44 : vector<16x16xf32>
    %cst_24 = arith.constant 1.000000e+00 : f32
    %46 = vector.broadcast %cst_24 : f32 to vector<16x16xf32>
    %47 = arith.addf %46, %45 : vector<16x16xf32>
    %48 = arith.divf %46, %47 : vector<16x16xf32>
    %49 = arith.mulf %40, %12 : vector<16x16xf32>
    %50 = arith.mulf %34, %42 : vector<16x16xf32>
    %51 = arith.addf %49, %50 : vector<16x16xf32>
    %52 = math.tanh %51 : vector<16x16xf32>
    %53 = arith.mulf %48, %52 : vector<16x16xf32>
    %54 = arith.truncf %53 : vector<16x16xf32> to vector<16x16xbf16>
    %c0_25 = arith.constant 0 : index
    %c0_26 = arith.constant 0 : index
    %55 = vector.load %arg15[%c0_25, %c0_26] : memref<16x16xbf16, #tpu.memory_space<vmem>>, vector<16x16xbf16>
    %cst_27 = arith.constant dense<0.000000e+00> : vector<16x16xf32>
    %56 = tpu.matmul %54, %55, %cst_27 {dimension_numbers = #tpu.dot_dimension_numbers<[1], [0], [0], [1], [0, 0, 1, 1], [], []>} : vector<16x16xbf16>, vector<16x16xbf16>, vector<16x16xf32> -> vector<16x16xf32>
    %c0_28 = arith.constant 0 : index
    %c0_29 = arith.constant 0 : index
    %57 = vector.load %arg16[%c0_28, %c0_29] : memref<1x16xf32, #tpu.memory_space<vmem>>, vector<1x16xf32>
    %58 = vector.broadcast %57 : vector<1x16xf32> to vector<16x16xf32>
    %59 = arith.addf %56, %58 : vector<16x16xf32>
    %c0_30 = arith.constant 0 : index
    %c0_31 = arith.constant 0 : index
    %c0_32 = arith.constant 0 : index
    %60 = vector.load %arg4[%c0_30, %c0_31, %c0_32] : memref<16x8x16xbf16, #tpu.memory_space<vmem>>, vector<16x8x16xbf16>
    %61 = arith.extf %60 : vector<16x8x16xbf16> to vector<16x8x16xf32>
    %62 = vector.shape_cast %59 : vector<16x16xf32> to vector<16x1x16xf32>
    %63 = vector.broadcast %62 : vector<16x1x16xf32> to vector<16x8x16xf32>
    %64 = arith.addf %61, %63 : vector<16x8x16xf32>
    %cst_33 = arith.constant 0.000000e+00 : f32
    %65 = vector.broadcast %cst_33 : f32 to vector<16x8x16xf32>
    %66 = arith.maximumf %64, %65 : vector<16x8x16xf32>
    %c0_34 = arith.constant 0 : index
    %c0_35 = arith.constant 0 : index
    %67 = vector.load %arg17[%c0_34, %c0_35] : memref<1x16xf32, #tpu.memory_space<vmem>>, vector<1x16xf32>
    %68 = vector.shape_cast %67 : vector<1x16xf32> to vector<1x1x16xf32>
    %69 = vector.broadcast %68 : vector<1x1x16xf32> to vector<16x8x16xf32>
    %70 = arith.mulf %66, %69 : vector<16x8x16xf32>
    %cst_36 = arith.constant dense<0.000000e+00> : vector<16x8xf32>
    %71 = vector.multi_reduction <add>, %70, %cst_36 [2] : vector<16x8x16xf32> to vector<16x8xf32>
    %cst_37 = arith.constant dense<0xFF800000> : vector<16xf32>
    %72 = vector.multi_reduction <maximumf>, %71, %cst_37 [1] : vector<16x8xf32> to vector<16xf32>
    %73 = vector.shape_cast %72 : vector<16xf32> to vector<16x1xf32>
    %74 = vector.broadcast %73 : vector<16x1xf32> to vector<16x8xf32>
    %75 = arith.subf %71, %74 : vector<16x8xf32>
    %76 = math.exp %75 : vector<16x8xf32>
    %cst_38 = arith.constant dense<0.000000e+00> : vector<16xf32>
    %77 = vector.multi_reduction <add>, %76, %cst_38 [1] : vector<16x8xf32> to vector<16xf32>
    %78 = vector.shape_cast %77 : vector<16xf32> to vector<16x1xf32>
    %79 = tpu.reciprocal %78 {approx = true} : vector<16x1xf32> -> vector<16x1xf32>
    %80 = vector.broadcast %79 : vector<16x1xf32> to vector<16x8xf32>
    %81 = arith.mulf %76, %80 : vector<16x8xf32>
    %c0_39 = arith.constant 0 : index
    %c0_40 = arith.constant 0 : index
    %c0_41 = arith.constant 0 : index
    %82 = vector.load %arg3[%c0_39, %c0_40, %c0_41] : memref<16x8x32xbf16, #tpu.memory_space<vmem>>, vector<16x8x32xbf16>
    %83 = arith.extf %82 : vector<16x8x32xbf16> to vector<16x8x32xf32>
    %84 = vector.shape_cast %81 : vector<16x8xf32> to vector<16x8x1xf32>
    %85 = vector.broadcast %84 : vector<16x8x1xf32> to vector<16x8x32xf32>
    %86 = arith.mulf %83, %85 : vector<16x8x32xf32>
    %cst_42 = arith.constant dense<0.000000e+00> : vector<16x32xf32>
    %87 = vector.multi_reduction <add>, %86, %cst_42 [1] : vector<16x8x32xf32> to vector<16x32xf32>
    %88 = arith.truncf %87 : vector<16x32xf32> to vector<16x32xbf16>
    %c0_43 = arith.constant 0 : index
    %c0_44 = arith.constant 0 : index
    %89 = vector.load %arg8[%c0_43, %c0_44] : memref<32x64xbf16, #tpu.memory_space<vmem>>, vector<32x64xbf16>
    %cst_45 = arith.constant dense<0.000000e+00> : vector<16x64xf32>
    %90 = tpu.matmul %88, %89, %cst_45 {dimension_numbers = #tpu.dot_dimension_numbers<[1], [0], [0], [1], [0, 0, 1, 1], [], []>} : vector<16x32xbf16>, vector<32x64xbf16>, vector<16x64xf32> -> vector<16x64xf32>
    %91 = arith.truncf %53 : vector<16x16xf32> to vector<16x16xbf16>
    %c0_46 = arith.constant 0 : index
    %c0_47 = arith.constant 0 : index
    %92 = vector.load %arg9[%c0_46, %c0_47] : memref<16x64xbf16, #tpu.memory_space<vmem>>, vector<16x64xbf16>
    %cst_48 = arith.constant dense<0.000000e+00> : vector<16x64xf32>
    %93 = tpu.matmul %91, %92, %cst_48 {dimension_numbers = #tpu.dot_dimension_numbers<[1], [0], [0], [1], [0, 0, 1, 1], [], []>} : vector<16x16xbf16>, vector<16x64xbf16>, vector<16x64xf32> -> vector<16x64xf32>
    %94 = arith.addf %90, %93 : vector<16x64xf32>
    %95 = arith.truncf %13 : vector<16x16xf32> to vector<16x16xbf16>
    %c0_49 = arith.constant 0 : index
    %c0_50 = arith.constant 0 : index
    %96 = vector.load %arg10[%c0_49, %c0_50] : memref<16x64xbf16, #tpu.memory_space<vmem>>, vector<16x64xbf16>
    %cst_51 = arith.constant dense<0.000000e+00> : vector<16x64xf32>
    %97 = tpu.matmul %95, %96, %cst_51 {dimension_numbers = #tpu.dot_dimension_numbers<[1], [0], [0], [1], [0, 0, 1, 1], [], []>} : vector<16x16xbf16>, vector<16x64xbf16>, vector<16x64xf32> -> vector<16x64xf32>
    %98 = arith.addf %94, %97 : vector<16x64xf32>
    %c0_52 = arith.constant 0 : index
    %c0_53 = arith.constant 0 : index
    %99 = vector.load %arg13[%c0_52, %c0_53] : memref<1x64xf32, #tpu.memory_space<vmem>>, vector<1x64xf32>
    %100 = vector.broadcast %99 : vector<1x64xf32> to vector<16x64xf32>
    %101 = arith.addf %98, %100 : vector<16x64xf32>
    %102 = vector.extract_strided_slice %101 {offsets = [0, 0], sizes = [16, 16], strides = [1, 1]} : vector<16x64xf32> to vector<16x16xf32>
    %103 = arith.negf %102 : vector<16x16xf32>
    %104 = math.exp %103 : vector<16x16xf32>
    %cst_54 = arith.constant 1.000000e+00 : f32
    %105 = vector.broadcast %cst_54 : f32 to vector<16x16xf32>
    %106 = arith.addf %105, %104 : vector<16x16xf32>
    %107 = arith.divf %105, %106 : vector<16x16xf32>
    %108 = vector.extract_strided_slice %101 {offsets = [0, 16], sizes = [16, 16], strides = [1, 1]} : vector<16x64xf32> to vector<16x16xf32>
    %109 = arith.negf %108 : vector<16x16xf32>
    %110 = math.exp %109 : vector<16x16xf32>
    %cst_55 = arith.constant 1.000000e+00 : f32
    %111 = vector.broadcast %cst_55 : f32 to vector<16x16xf32>
    %112 = arith.addf %111, %110 : vector<16x16xf32>
    %113 = arith.divf %111, %112 : vector<16x16xf32>
    %114 = vector.extract_strided_slice %101 {offsets = [0, 32], sizes = [16, 16], strides = [1, 1]} : vector<16x64xf32> to vector<16x16xf32>
    %115 = math.tanh %114 : vector<16x16xf32>
    %116 = vector.extract_strided_slice %101 {offsets = [0, 48], sizes = [16, 16], strides = [1, 1]} : vector<16x64xf32> to vector<16x16xf32>
    %117 = arith.negf %116 : vector<16x16xf32>
    %118 = math.exp %117 : vector<16x16xf32>
    %cst_56 = arith.constant 1.000000e+00 : f32
    %119 = vector.broadcast %cst_56 : f32 to vector<16x16xf32>
    %120 = arith.addf %119, %118 : vector<16x16xf32>
    %121 = arith.divf %119, %120 : vector<16x16xf32>
    %122 = arith.mulf %113, %14 : vector<16x16xf32>
    %123 = arith.mulf %107, %115 : vector<16x16xf32>
    %124 = arith.addf %122, %123 : vector<16x16xf32>
    %125 = math.tanh %124 : vector<16x16xf32>
    %126 = arith.mulf %121, %125 : vector<16x16xf32>
    %127 = arith.truncf %53 : vector<16x16xf32> to vector<16x16xbf16>
    %c0_57 = arith.constant 0 : index
    %c0_58 = arith.constant 0 : index
    %128 = vector.load %arg11[%c0_57, %c0_58] : memref<16x64xbf16, #tpu.memory_space<vmem>>, vector<16x64xbf16>
    %cst_59 = arith.constant dense<0.000000e+00> : vector<16x64xf32>
    %129 = tpu.matmul %127, %128, %cst_59 {dimension_numbers = #tpu.dot_dimension_numbers<[1], [0], [0], [1], [0, 0, 1, 1], [], []>} : vector<16x16xbf16>, vector<16x64xbf16>, vector<16x64xf32> -> vector<16x64xf32>
    %130 = arith.truncf %15 : vector<16x16xf32> to vector<16x16xbf16>
    %c0_60 = arith.constant 0 : index
    %c0_61 = arith.constant 0 : index
    %131 = vector.load %arg12[%c0_60, %c0_61] : memref<16x64xbf16, #tpu.memory_space<vmem>>, vector<16x64xbf16>
    %cst_62 = arith.constant dense<0.000000e+00> : vector<16x64xf32>
    %132 = tpu.matmul %130, %131, %cst_62 {dimension_numbers = #tpu.dot_dimension_numbers<[1], [0], [0], [1], [0, 0, 1, 1], [], []>} : vector<16x16xbf16>, vector<16x64xbf16>, vector<16x64xf32> -> vector<16x64xf32>
    %133 = arith.addf %129, %132 : vector<16x64xf32>
    %c0_63 = arith.constant 0 : index
    %c0_64 = arith.constant 0 : index
    %134 = vector.load %arg14[%c0_63, %c0_64] : memref<1x64xf32, #tpu.memory_space<vmem>>, vector<1x64xf32>
    %135 = vector.broadcast %134 : vector<1x64xf32> to vector<16x64xf32>
    %136 = arith.addf %133, %135 : vector<16x64xf32>
    %137 = vector.extract_strided_slice %136 {offsets = [0, 0], sizes = [16, 16], strides = [1, 1]} : vector<16x64xf32> to vector<16x16xf32>
    %138 = arith.negf %137 : vector<16x16xf32>
    %139 = math.exp %138 : vector<16x16xf32>
    %cst_65 = arith.constant 1.000000e+00 : f32
    %140 = vector.broadcast %cst_65 : f32 to vector<16x16xf32>
    %141 = arith.addf %140, %139 : vector<16x16xf32>
    %142 = arith.divf %140, %141 : vector<16x16xf32>
    %143 = vector.extract_strided_slice %136 {offsets = [0, 16], sizes = [16, 16], strides = [1, 1]} : vector<16x64xf32> to vector<16x16xf32>
    %144 = arith.negf %143 : vector<16x16xf32>
    %145 = math.exp %144 : vector<16x16xf32>
    %cst_66 = arith.constant 1.000000e+00 : f32
    %146 = vector.broadcast %cst_66 : f32 to vector<16x16xf32>
    %147 = arith.addf %146, %145 : vector<16x16xf32>
    %148 = arith.divf %146, %147 : vector<16x16xf32>
    %149 = vector.extract_strided_slice %136 {offsets = [0, 32], sizes = [16, 16], strides = [1, 1]} : vector<16x64xf32> to vector<16x16xf32>
    %150 = math.tanh %149 : vector<16x16xf32>
    %151 = vector.extract_strided_slice %136 {offsets = [0, 48], sizes = [16, 16], strides = [1, 1]} : vector<16x64xf32> to vector<16x16xf32>
    %152 = arith.negf %151 : vector<16x16xf32>
    %153 = math.exp %152 : vector<16x16xf32>
    %cst_67 = arith.constant 1.000000e+00 : f32
    %154 = vector.broadcast %cst_67 : f32 to vector<16x16xf32>
    %155 = arith.addf %154, %153 : vector<16x16xf32>
    %156 = arith.divf %154, %155 : vector<16x16xf32>
    %157 = arith.mulf %148, %16 : vector<16x16xf32>
    %158 = arith.mulf %142, %150 : vector<16x16xf32>
    %159 = arith.addf %157, %158 : vector<16x16xf32>
    %160 = math.tanh %159 : vector<16x16xf32>
    %161 = arith.mulf %156, %160 : vector<16x16xf32>
    %162 = arith.truncf %161 : vector<16x16xf32> to vector<16x16xbf16>
    %c0_68 = arith.constant 0 : index
    %c0_69 = arith.constant 0 : index
    %163 = vector.load %arg18[%c0_68, %c0_69] : memref<16x16xbf16, #tpu.memory_space<vmem>>, vector<16x16xbf16>
    %cst_70 = arith.constant dense<0.000000e+00> : vector<16x16xf32>
    %164 = tpu.matmul %162, %163, %cst_70 {dimension_numbers = #tpu.dot_dimension_numbers<[1], [0], [0], [1], [0, 0, 1, 1], [], []>} : vector<16x16xbf16>, vector<16x16xbf16>, vector<16x16xf32> -> vector<16x16xf32>
    %c0_71 = arith.constant 0 : index
    %c0_72 = arith.constant 0 : index
    %165 = vector.load %arg19[%c0_71, %c0_72] : memref<1x16xf32, #tpu.memory_space<vmem>>, vector<1x16xf32>
    %166 = vector.broadcast %165 : vector<1x16xf32> to vector<16x16xf32>
    %167 = arith.addf %164, %166 : vector<16x16xf32>
    %168 = arith.subf %167, %17 : vector<16x16xf32>
    %169 = arith.mulf %168, %168 : vector<16x16xf32>
    %cst_73 = arith.constant dense<0.000000e+00> : vector<16xf32>
    %170 = vector.multi_reduction <add>, %169, %cst_73 [1] : vector<16x16xf32> to vector<16xf32>
    %171 = vector.shape_cast %170 : vector<16xf32> to vector<16x1xf32>
    %cst_74 = arith.constant 0.000000e+00 : f32
    %172 = vector.broadcast %cst_74 : f32 to vector<16x1xf32>
    %173 = arith.select %7, %171, %172 : vector<16x1xi1>, vector<16x1xf32>
    %cst_75 = arith.constant dense<0.000000e+00> : vector<1xf32>
    %174 = vector.multi_reduction <add>, %173, %cst_75 [0] : vector<16x1xf32> to vector<1xf32>
    %175 = vector.shape_cast %174 : vector<1xf32> to vector<1x1xf32>
    %176 = arith.sitofp %1 : i32 to f32
    %cst_76 = arith.constant 5.000000e-03 : f32
    %177 = arith.divf %cst_76, %176 : f32
    %178 = vector.broadcast %177 : f32 to vector<1x1xf32>
    %179 = arith.mulf %175, %178 : vector<1x1xf32>
    %c0_i32_77 = arith.constant 0 : i32
    %180 = arith.cmpi ne, %arg1, %c0_i32_77 : i32
    %181 = arith.extui %180 : i1 to i32
    %c0_i32_78 = arith.constant 0 : i32
    %182 = arith.cmpi ne, %181, %c0_i32_78 : i32
    scf.if %182 {
      %c0_97 = arith.constant 0 : index
      %c0_98 = arith.constant 0 : index
      %218 = vector.load %arg29[%c0_97, %c0_98] : memref<1x1xf32, #tpu.memory_space<vmem>>, vector<1x1xf32>
      %219 = arith.addf %218, %179 : vector<1x1xf32>
      %c0_99 = arith.constant 0 : index
      %c0_100 = arith.constant 0 : index
      %220 = vector.load %arg29[%c0_99, %c0_100] : memref<1x1xf32, #tpu.memory_space<vmem>>, vector<1x1xf32>
      tpu.vector_store %arg29[%c0_99, %c0_100], %219 {strides = array<i32>} : memref<1x1xf32, #tpu.memory_space<vmem>>, vector<1x1xf32>,
    } else {
    }
    %c5_i32 = arith.constant 5 : i32
    %183 = arith.cmpi eq, %arg1, %c5_i32 : i32
    %184 = arith.extui %183 : i1 to i32
    %c0_i32_79 = arith.constant 0 : i32
    %185 = arith.cmpi ne, %184, %c0_i32_79 : i32
    scf.if %185 {
      %c0_97 = arith.constant 0 : index
      %c0_98 = arith.constant 0 : index
      %218 = vector.load %arg29[%c0_97, %c0_98] : memref<1x1xf32, #tpu.memory_space<vmem>>, vector<1x1xf32>
      %219 = vector.shape_cast %218 : vector<1x1xf32> to vector<1x1x1xf32>
      %c0_99 = arith.constant 0 : index
      %c0_100 = arith.constant 0 : index
      %c0_101 = arith.constant 0 : index
      %220 = vector.load %arg21[%c0_99, %c0_100, %c0_101] : memref<1x1x1xf32, #tpu.memory_space<vmem>>, vector<1x1x1xf32>
      tpu.vector_store %arg21[%c0_99, %c0_100, %c0_101], %219 {strides = array<i32>} : memref<1x1x1xf32, #tpu.memory_space<vmem>>, vector<1x1x1xf32>,
    } else {
    }
    %186 = vector.shape_cast %7 : vector<16x1xi1> to vector<16x1xi1>
    %187 = vector.broadcast %186 : vector<16x1xi1> to vector<16x16xi1>
    %188 = arith.select %187, %53, %11 : vector<16x16xi1>, vector<16x16xf32>
    %189 = vector.shape_cast %7 : vector<16x1xi1> to vector<16x1xi1>
    %190 = vector.broadcast %189 : vector<16x1xi1> to vector<16x16xi1>
    %191 = arith.select %190, %51, %12 : vector<16x16xi1>, vector<16x16xf32>
    %192 = vector.shape_cast %7 : vector<16x1xi1> to vector<16x1xi1>
    %193 = vector.broadcast %192 : vector<16x1xi1> to vector<16x16xi1>
    %194 = arith.select %193, %126, %13 : vector<16x16xi1>, vector<16x16xf32>
    %195 = vector.shape_cast %7 : vector<16x1xi1> to vector<16x1xi1>
    %196 = vector.broadcast %195 : vector<16x1xi1> to vector<16x16xi1>
    %197 = arith.select %196, %124, %14 : vector<16x16xi1>, vector<16x16xf32>
    %198 = vector.shape_cast %7 : vector<16x1xi1> to vector<16x1xi1>
    %199 = vector.broadcast %198 : vector<16x1xi1> to vector<16x16xi1>
    %200 = arith.select %199, %161, %15 : vector<16x16xi1>, vector<16x16xf32>
    %201 = vector.shape_cast %7 : vector<16x1xi1> to vector<16x1xi1>
    %202 = vector.broadcast %201 : vector<16x1xi1> to vector<16x16xi1>
    %203 = arith.select %202, %159, %16 : vector<16x16xi1>, vector<16x16xf32>
    %c0_80 = arith.constant 0 : index
    %c0_81 = arith.constant 0 : index
    %204 = vector.load %arg22[%c0_80, %c0_81] : memref<16x16xf32, #tpu.memory_space<vmem>>, vector<16x16xf32>
    tpu.vector_store %arg22[%c0_80, %c0_81], %188 {strides = array<i32>} : memref<16x16xf32, #tpu.memory_space<vmem>>, vector<16x16xf32>,
    %c0_82 = arith.constant 0 : index
    %c0_83 = arith.constant 0 : index
    %205 = vector.load %arg23[%c0_82, %c0_83] : memref<16x16xf32, #tpu.memory_space<vmem>>, vector<16x16xf32>
    tpu.vector_store %arg23[%c0_82, %c0_83], %191 {strides = array<i32>} : memref<16x16xf32, #tpu.memory_space<vmem>>, vector<16x16xf32>,
    %c0_84 = arith.constant 0 : index
    %c0_85 = arith.constant 0 : index
    %206 = vector.load %arg24[%c0_84, %c0_85] : memref<16x16xf32, #tpu.memory_space<vmem>>, vector<16x16xf32>
    tpu.vector_store %arg24[%c0_84, %c0_85], %194 {strides = array<i32>} : memref<16x16xf32, #tpu.memory_space<vmem>>, vector<16x16xf32>,
    %c0_86 = arith.constant 0 : index
    %c0_87 = arith.constant 0 : index
    %207 = vector.load %arg25[%c0_86, %c0_87] : memref<16x16xf32, #tpu.memory_space<vmem>>, vector<16x16xf32>
    tpu.vector_store %arg25[%c0_86, %c0_87], %197 {strides = array<i32>} : memref<16x16xf32, #tpu.memory_space<vmem>>, vector<16x16xf32>,
    %c0_88 = arith.constant 0 : index
    %c0_89 = arith.constant 0 : index
    %208 = vector.load %arg26[%c0_88, %c0_89] : memref<16x16xf32, #tpu.memory_space<vmem>>, vector<16x16xf32>
    tpu.vector_store %arg26[%c0_88, %c0_89], %200 {strides = array<i32>} : memref<16x16xf32, #tpu.memory_space<vmem>>, vector<16x16xf32>,
    %c0_90 = arith.constant 0 : index
    %c0_91 = arith.constant 0 : index
    %209 = vector.load %arg27[%c0_90, %c0_91] : memref<16x16xf32, #tpu.memory_space<vmem>>, vector<16x16xf32>
    tpu.vector_store %arg27[%c0_90, %c0_91], %203 {strides = array<i32>} : memref<16x16xf32, #tpu.memory_space<vmem>>, vector<16x16xf32>,
    %210 = vector.shape_cast %7 : vector<16x1xi1> to vector<16x1xi1>
    %211 = vector.broadcast %210 : vector<16x1xi1> to vector<16x16xi1>
    %212 = arith.select %211, %53, %17 : vector<16x16xi1>, vector<16x16xf32>
    %c0_92 = arith.constant 0 : index
    %c0_93 = arith.constant 0 : index
    %213 = vector.load %arg28[%c0_92, %c0_93] : memref<16x16xf32, #tpu.memory_space<vmem>>, vector<16x16xf32>
    tpu.vector_store %arg28[%c0_92, %c0_93], %212 {strides = array<i32>} : memref<16x16xf32, #tpu.memory_space<vmem>>, vector<16x16xf32>,
    %214 = arith.truncf %194 : vector<16x16xf32> to vector<16x16xbf16>
    %c0_94 = arith.constant 0 : index
    %c0_95 = arith.constant 0 : index
    %c0_96 = arith.constant 0 : index
    %215 = vector.load %arg20[%c0_94, %c0_95, %c0_96] : memref<1x16x16xbf16, #tpu.memory_space<vmem>>, vector<1x16x16xbf16>
    %216 = vector.shape_cast %215 : vector<1x16x16xbf16> to vector<16x16xbf16>
    %217 = vector.shape_cast %214 : vector<16x16xbf16> to vector<1x16x16xbf16>
    tpu.vector_store %arg20[%c0_94, %c0_95, %c0_96], %217 {strides = array<i32>} : memref<1x16x16xbf16, #tpu.memory_space<vmem>>, vector<1x16x16xbf16>,
    return
  }
  func.func @transform_0(%arg0: i32, %arg1: i32, %arg2: memref<6xi32, #tpu.memory_space<smem>>) -> (i32, i32, i32) {
    %c0_i32 = arith.constant 0 : i32
    %c0_i32_0 = arith.constant 0 : i32
    %c0_i32_1 = arith.constant 0 : i32
    return %arg0, %c0_i32, %c0_i32_0 : i32, i32, i32
  }
  func.func @transform_1(%arg0: i32, %arg1: i32, %arg2: memref<6xi32, #tpu.memory_space<smem>>) -> (i32, i32, i32) {
    %c0_i32 = arith.constant 0 : i32
    %c0_i32_0 = arith.constant 0 : i32
    %c0_i32_1 = arith.constant 0 : i32
    return %arg0, %c0_i32, %c0_i32_0 : i32, i32, i32
  }
  func.func @transform_2(%arg0: i32, %arg1: i32, %arg2: memref<6xi32, #tpu.memory_space<smem>>) -> (i32, i32, i32) {
    %c0_i32 = arith.constant 0 : i32
    %c0_i32_0 = arith.constant 0 : i32
    return %arg1, %arg0, %c0_i32 : i32, i32, i32
  }
  func.func @transform_3(%arg0: i32, %arg1: i32, %arg2: memref<6xi32, #tpu.memory_space<smem>>) -> (i32, i32) {
    %c0_i32 = arith.constant 0 : i32
    %c0_i32_0 = arith.constant 0 : i32
    %c0_i32_1 = arith.constant 0 : i32
    return %c0_i32, %c0_i32_0 : i32, i32
  }
  func.func @transform_4(%arg0: i32, %arg1: i32, %arg2: memref<6xi32, #tpu.memory_space<smem>>) -> (i32, i32) {
    %c0_i32 = arith.constant 0 : i32
    %c0_i32_0 = arith.constant 0 : i32
    %c0_i32_1 = arith.constant 0 : i32
    return %c0_i32, %c0_i32_0 : i32, i32
  }
  func.func @transform_5(%arg0: i32, %arg1: i32, %arg2: memref<6xi32, #tpu.memory_space<smem>>) -> (i32, i32) {
    %c0_i32 = arith.constant 0 : i32
    %c0_i32_0 = arith.constant 0 : i32
    %c0_i32_1 = arith.constant 0 : i32
    return %c0_i32, %c0_i32_0 : i32, i32
  }
  func.func @transform_6(%arg0: i32, %arg1: i32, %arg2: memref<6xi32, #tpu.memory_space<smem>>) -> (i32, i32) {
    %c0_i32 = arith.constant 0 : i32
    %c0_i32_0 = arith.constant 0 : i32
    %c0_i32_1 = arith.constant 0 : i32
    return %c0_i32, %c0_i32_0 : i32, i32
  }
  func.func @transform_7(%arg0: i32, %arg1: i32, %arg2: memref<6xi32, #tpu.memory_space<smem>>) -> (i32, i32) {
    %c0_i32 = arith.constant 0 : i32
    %c0_i32_0 = arith.constant 0 : i32
    %c0_i32_1 = arith.constant 0 : i32
    return %c0_i32, %c0_i32_0 : i32, i32
  }
  func.func @transform_8(%arg0: i32, %arg1: i32, %arg2: memref<6xi32, #tpu.memory_space<smem>>) -> (i32, i32) {
    %c0_i32 = arith.constant 0 : i32
    %c0_i32_0 = arith.constant 0 : i32
    %c0_i32_1 = arith.constant 0 : i32
    return %c0_i32, %c0_i32_0 : i32, i32
  }
  func.func @transform_9(%arg0: i32, %arg1: i32, %arg2: memref<6xi32, #tpu.memory_space<smem>>) -> (i32, i32) {
    %c0_i32 = arith.constant 0 : i32
    %c0_i32_0 = arith.constant 0 : i32
    %c0_i32_1 = arith.constant 0 : i32
    return %c0_i32, %c0_i32_0 : i32, i32
  }
  func.func @transform_10(%arg0: i32, %arg1: i32, %arg2: memref<6xi32, #tpu.memory_space<smem>>) -> (i32, i32) {
    %c0_i32 = arith.constant 0 : i32
    %c0_i32_0 = arith.constant 0 : i32
    %c0_i32_1 = arith.constant 0 : i32
    return %c0_i32, %c0_i32_0 : i32, i32
  }
  func.func @transform_11(%arg0: i32, %arg1: i32, %arg2: memref<6xi32, #tpu.memory_space<smem>>) -> (i32, i32) {
    %c0_i32 = arith.constant 0 : i32
    %c0_i32_0 = arith.constant 0 : i32
    %c0_i32_1 = arith.constant 0 : i32
    return %c0_i32, %c0_i32_0 : i32, i32
  }
  func.func @transform_12(%arg0: i32, %arg1: i32, %arg2: memref<6xi32, #tpu.memory_space<smem>>) -> (i32, i32) {
    %c0_i32 = arith.constant 0 : i32
    %c0_i32_0 = arith.constant 0 : i32
    %c0_i32_1 = arith.constant 0 : i32
    return %c0_i32, %c0_i32_0 : i32, i32
  }
  func.func @transform_13(%arg0: i32, %arg1: i32, %arg2: memref<6xi32, #tpu.memory_space<smem>>) -> (i32, i32) {
    %c0_i32 = arith.constant 0 : i32
    %c0_i32_0 = arith.constant 0 : i32
    %c0_i32_1 = arith.constant 0 : i32
    return %c0_i32, %c0_i32_0 : i32, i32
  }
  func.func @transform_14(%arg0: i32, %arg1: i32, %arg2: memref<6xi32, #tpu.memory_space<smem>>) -> (i32, i32) {
    %c0_i32 = arith.constant 0 : i32
    %c0_i32_0 = arith.constant 0 : i32
    %c0_i32_1 = arith.constant 0 : i32
    return %c0_i32, %c0_i32_0 : i32, i32
  }
  func.func @transform_15(%arg0: i32, %arg1: i32, %arg2: memref<6xi32, #tpu.memory_space<smem>>) -> (i32, i32) {
    %c0_i32 = arith.constant 0 : i32
    %c0_i32_0 = arith.constant 0 : i32
    %c0_i32_1 = arith.constant 0 : i32
    return %c0_i32, %c0_i32_0 : i32, i32
  }
  func.func @transform_16(%arg0: i32, %arg1: i32, %arg2: memref<6xi32, #tpu.memory_space<smem>>) -> (i32, i32) {
    %c0_i32 = arith.constant 0 : i32
    %c0_i32_0 = arith.constant 0 : i32
    %c0_i32_1 = arith.constant 0 : i32
    return %c0_i32, %c0_i32_0 : i32, i32
  }
  func.func @transform_17(%arg0: i32, %arg1: i32, %arg2: memref<6xi32, #tpu.memory_space<smem>>) -> (i32, i32, i32) {
    %c0_i32 = arith.constant 0 : i32
    %c0_i32_0 = arith.constant 0 : i32
    return %arg1, %arg0, %c0_i32 : i32, i32, i32
  }
  func.func @transform_18(%arg0: i32, %arg1: i32, %arg2: memref<6xi32, #tpu.memory_space<smem>>) -> (i32, i32, i32) {
    %c0_i32 = arith.constant 0 : i32
    %c0_i32_0 = arith.constant 0 : i32
    %c0_i32_1 = arith.constant 0 : i32
    return %arg0, %c0_i32, %c0_i32_0 : i32, i32, i32
  }
}

</mosaic_0001>

<llo_original>
// kernel: neg.1
$region0: #{neg.1}
  #allocation0 [shape = 's32[1]{0}', space=sflag, size = 0x4, scoped, tag = 'scoped memory for neg.1']
  %s0 = inlined_call_operand.vmem [shape: s32[4], index: 0, kind: input, shape index: {}]
  %s1 = inlined_call_operand.vmem [shape: s32[4], index: 1, kind: output, shape index: {}]
  %v2 = vld [vmem:[%s0] sm:$0x1]
  %3 = xla_tuple %v2
  %4 = xla_tuple %3
  %v5 = vsub.s32 0, %v2
  %6 = xla_tuple %v5
  %7 = vst [vmem:[%s1] sm:$0x1] %v5

// kernel: _forward_core.1
$region0: #{_forward_core.1}
  #allocation0 [shape = 'u32[]', space=smem, size = 0x4, offset = 0x4, fixed_abs, tag = 'smem constant byte address 0x4 - core index']
  #allocation1 [shape = 'u32[144,128]{1,0:T(1,128)}', space=vmem, size = 0x12000, scoped, tag = 'internal scratch']
  #allocation2 [shape = 'f32[16,16]{1,0:T(8,128)}', space=vmem, size = 0x2000, scoped, tag = 'scratch operand']
  #allocation3 [shape = 'f32[16,16]{1,0:T(8,128)}', space=vmem, size = 0x2000, scoped, tag = 'scratch operand']
  #allocation4 [shape = 'f32[16,16]{1,0:T(8,128)}', space=vmem, size = 0x2000, scoped, tag = 'scratch operand']
  #allocation5 [shape = 'f32[16,16]{1,0:T(8,128)}', space=vmem, size = 0x2000, scoped, tag = 'scratch operand']
  #allocation6 [shape = 'f32[16,16]{1,0:T(8,128)}', space=vmem, size = 0x2000, scoped, tag = 'scratch operand']
  #allocation7 [shape = 'f32[16,16]{1,0:T(8,128)}', space=vmem, size = 0x2000, scoped, tag = 'scratch operand']
  #allocation8 [shape = 'f32[16,16]{1,0:T(8,128)}', space=vmem, size = 0x2000, scoped, tag = 'scratch operand']
  #allocation9 [shape = 'f32[1,1]{1,0:T(1,128)}', space=vmem, size = 0x200, scoped, tag = 'scratch operand']
  #allocation10 [shape = 's32[1]{0}', space=sflag, size = 0x4, scoped, tag = 'scoped memory for _forward_core.1']
  #allocation11 [shape = 'u8[512]{0}', space=smem, size = 0x200, scoped, tag = 'prefetched SMEM operand 0']
  %s0 = inlined_call_operand.hbm [shape: s32[6], index: 0, kind: input, shape index: {}]
  %s1 = inlined_call_operand.hbm [shape: bf16[16,8,32], index: 1, kind: input, shape index: {}]
  %s2 = inlined_call_operand.hbm [shape: bf16[16,8,16], index: 2, kind: input, shape index: {}]
  %s3 = inlined_call_operand.hbm [shape: bf16[6,16,64], index: 3, kind: input, shape index: {}]
  %s4 = inlined_call_operand.hbm [shape: bf16[16,64], index: 4, kind: input, shape index: {}]
  %s5 = inlined_call_operand.hbm [shape: bf16[16,64], index: 5, kind: input, shape index: {}]
  %s6 = inlined_call_operand.hbm [shape: bf16[32,64], index: 6, kind: input, shape index: {}]
  %s7 = inlined_call_operand.hbm [shape: bf16[16,64], index: 7, kind: input, shape index: {}]
  %s8 = inlined_call_operand.hbm [shape: bf16[16,64], index: 8, kind: input, shape index: {}]
  %s9 = inlined_call_operand.hbm [shape: bf16[16,64], index: 9, kind: input, shape index: {}]
  %s10 = inlined_call_operand.hbm [shape: bf16[16,64], index: 10, kind: input, shape index: {}]
  %s11 = inlined_call_operand.hbm [shape: f32[1,64], index: 11, kind: input, shape index: {}]
  %s12 = inlined_call_operand.hbm [shape: f32[1,64], index: 12, kind: input, shape index: {}]
  %s13 = inlined_call_operand.hbm [shape: bf16[16,16], index: 13, kind: input, shape index: {}]
  %s14 = inlined_call_operand.hbm [shape: f32[1,16], index: 14, kind: input, shape index: {}]
  %s15 = inlined_call_operand.hbm [shape: f32[1,16], index: 15, kind: input, shape index: {}]
  %s16 = inlined_call_operand.hbm [shape: bf16[16,16], index: 16, kind: input, shape index: {}]
  %s17 = inlined_call_operand.hbm [shape: f32[1,16], index: 17, kind: input, shape index: {}]
  %s18 = inlined_call_operand.hbm [shape: bf16[6,16,16], index: 18, kind: output, shape index: {0}]
  %s19 = inlined_call_operand.hbm [shape: f32[1,1,1], index: 19, kind: output, shape index: {1}]
  %20 = xla_tuple %s18, %s19
  %s21 = sld [smem:[#allocation0]]
  $region189: #{_forward_core.1} parent=0
    _
  %s23 = ssub.s32 1, %s21
  %s24 = scalar_select 0, %s23, %s21
  %26 = dma.hbm_to_smem %s0, 16, [#allocation11], [#allocation10]
  %27 = dma.done [#allocation10], 16
  %28 = sfence
  $region1: #{_forward_core.1} parent=0
    #allocation12 [shape = 'u8[32768]{0}', space=vmem, size = 0x8000, scoped, tag = 'input window, operand 1, single buffered']
    #allocation13 [shape = 's32[2]{0}', space=sflag, size = 0x8, scoped, tag = 'scoped memory for _forward_core.1']
    #allocation14 [shape = 's32[2]{0}', space=sflag, size = 0x8, scoped, tag = 'scoped memory for _forward_core.1']
    #allocation15 [shape = 'u8[32768]{0}', space=vmem, size = 0x8000, scoped, tag = 'input window, operand 2, single buffered']
    #allocation16 [shape = 's32[1]{0}', space=sflag, size = 0x4, scoped, tag = 'scoped memory for _forward_core.1']
    #allocation17 [shape = 'u8[8192]{0}', space=vmem, size = 0x2000, scoped, tag = 'input window, operand 3']
    #allocation18 [shape = 'u8[4096]{0}', space=vmem, size = 0x1000, scoped, tag = 'input window, operand 4, single buffered']
    #allocation19 [shape = 'u8[4096]{0}', space=vmem, size = 0x1000, scoped, tag = 'input window, operand 5, single buffered']
    #allocation20 [shape = 's32[1]{0}', space=sflag, size = 0x4, scoped, tag = 'scoped memory for _forward_core.1']
    #allocation21 [shape = 'u8[8192]{0}', space=vmem, size = 0x2000, scoped, tag = 'input window, operand 6, single buffered']
    #allocation22 [shape = 'u8[4096]{0}', space=vmem, size = 0x1000, scoped, tag = 'input window, operand 7, single buffered']
    #allocation23 [shape = 's32[1]{0}', space=sflag, size = 0x4, scoped, tag = 'scoped memory for _forward_core.1']
    #allocation24 [shape = 'u8[4096]{0}', space=vmem, size = 0x1000, scoped, tag = 'input window, operand 8, single buffered']
    #allocation25 [shape = 'u8[4096]{0}', space=vmem, size = 0x1000, scoped, tag = 'input window, operand 9, single buffered']
    #allocation26 [shape = 's32[1]{0}', space=sflag, size = 0x4, scoped, tag = 'scoped memory for _forward_core.1']
    #allocation27 [shape = 'u8[4096]{0}', space=vmem, size = 0x1000, scoped, tag = 'input window, operand 10, single buffered']
    #allocation28 [shape = 'u8[512]{0}', space=vmem, size = 0x400, scoped, tag = 'input window, operand 11, single buffered']
    #allocation29 [shape = 's32[1]{0}', space=sflag, size = 0x4, scoped, tag = 'scoped memory for _forward_core.1']
    #allocation30 [shape = 'u8[512]{0}', space=vmem, size = 0x400, scoped, tag = 'input window, operand 12, single buffered']
    #allocation31 [shape = 'u8[4096]{0}', space=vmem, size = 0x1000, scoped, tag = 'input window, operand 13, single buffered']
    #allocation32 [shape = 's32[1]{0}', space=sflag, size = 0x4, scoped, tag = 'scoped memory for _forward_core.1']
    #allocation33 [shape = 'u8[512]{0}', space=vmem, size = 0x400, scoped, tag = 'input window, operand 14, single buffered']
    #allocation34 [shape = 'u8[512]{0}', space=vmem, size = 0x400, scoped, tag = 'input window, operand 15, single buffered']
    #allocation35 [shape = 's32[1]{0}', space=sflag, size = 0x4, scoped, tag = 'scoped memory for _forward_core.1']
    #allocation36 [shape = 'u8[4096]{0}', space=vmem, size = 0x1000, scoped, tag = 'input window, operand 16, single buffered']
    #allocation37 [shape = 'u8[512]{0}', space=vmem, size = 0x400, scoped, tag = 'input window, operand 17, single buffered']
    #allocation38 [shape = 's32[1]{0}', space=sflag, size = 0x4, scoped, tag = 'scoped memory for _forward_core.1']
    #allocation39 [shape = 'u8[8192]{0}', space=vmem, size = 0x2000, scoped, tag = 'output window, operand 0']
    #allocation40 [shape = 'u8[512]{0}', space=vmem, size = 0x400, scoped, tag = 'output window, operand 1, single buffered']
    #allocation41 [shape = 's32[1]{0}', space=sflag, size = 0x4, scoped, tag = 'scoped memory for _forward_core.1']
    %29 = vsyncpa [#allocation13], 0
    %30 = vsyncpa [#allocation16], 0
    %31 = vsyncpa [#allocation20], 0
    %32 = vsyncpa [#allocation23], 0
    %33 = vsyncpa [#allocation26], 0
    %34 = vsyncpa [#allocation29], 0
    %35 = vsyncpa [#allocation32], 0
    %36 = vsyncpa [#allocation35], 0
    %37 = vsyncpa [#allocation38], 0
    %38 = vsyncpa [#allocation14], 0
    %s39 = scalar_lea.sflag [#allocation14], 1
    %40 = vsyncpa %s39, 0
    %41 = vsyncpa [#allocation41], 0
    loop: start=0, step=1, limit=8
    $region2: #{_forward_core.1} parent=1 // loop_pre_header
      _
    $region3: #{_forward_core.1} parent=1 // loop_header
      %s43 = sphi 0, %s47
      %p44 = scmp.ge.s32.totalorder %s43, 8
      %s50 = sphi 0, %s62
      %s51 = sphi 0, %s58
      %s52 = sphi 0, %s50
      %s53 = sphi 0, %s51
      %s54 = sphi 0, %s52
      %s55 = sphi 0, %s53
      %s65 = sphi 0, %s67
      %s68 = sphi 0, %s65
      %s69 = sphi 0, %s68
      %s85 = sphi 0, %s69
      %s91 = sphi 0, %s93
      %s94 = sphi 0, %s91
      %s95 = sphi 0, %s94
      %s111 = sphi 0, %s95
      %s119 = sphi 0, %s121
      %s122 = sphi 0, %s119
      %s123 = sphi 0, %s122
      %s139 = sphi 0, %s123
      %s143 = sphi 0, %s143
      %s145 = sphi 0, %s143
      %s146 = sphi 0, %s145
      %s160 = sphi 0, %s146
      %s164 = sphi 0, %s164
      %s166 = sphi 0, %s164
      %s167 = sphi 0, %s166
      %s181 = sphi 0, %s167
      %s185 = sphi 0, %s185
      %s187 = sphi 0, %s185
      %s188 = sphi 0, %s187
      %s202 = sphi 0, %s188
      %s206 = sphi 0, %s206
      %s208 = sphi 0, %s206
      %s209 = sphi 0, %s208
      %s223 = sphi 0, %s209
      %s227 = sphi 0, %s227
      %s229 = sphi 0, %s227
      %s230 = sphi 0, %s229
      %s244 = sphi 0, %s230
      %s248 = sphi 0, %s248
      %s250 = sphi 0, %s248
      %s251 = sphi 0, %s250
      %s265 = sphi 0, %s251
      %s269 = sphi 0, %s269
      %s271 = sphi 0, %s269
      %s272 = sphi 0, %s271
      %s286 = sphi 0, %s272
      %s290 = sphi 0, %s290
      %s292 = sphi 0, %s290
      %s293 = sphi 0, %s292
      %s307 = sphi 0, %s293
      %s311 = sphi 0, %s311
      %s313 = sphi 0, %s311
      %s314 = sphi 0, %s313
      %s328 = sphi 0, %s314
      %s332 = sphi 0, %s332
      %s334 = sphi 0, %s332
      %s335 = sphi 0, %s334
      %s349 = sphi 0, %s335
      %s353 = sphi 0, %s353
      %s355 = sphi 0, %s353
      %s356 = sphi 0, %s355
      %s370 = sphi 0, %s356
      %s374 = sphi 0, %s374
      %s376 = sphi 0, %s374
      %s377 = sphi 0, %s376
      %s391 = sphi 0, %s377
      %s395 = sphi 0, %s395
      %s397 = sphi 0, %s395
      %s398 = sphi 0, %s397
      %s412 = sphi 0, %s398
      %s416 = sphi 0, %s416
      %s418 = sphi 0, %s416
      %s419 = sphi 0, %s418
      %s433 = sphi 0, %s419
      %s441 = sphi 0, %s443
      %s444 = sphi 0, %s441
      %s445 = sphi 0, %s444
      %s461 = sphi 0, %s445
      %s467 = sphi 0, %s469
      %s470 = sphi 0, %s467
      %s471 = sphi 0, %s470
      %s487 = sphi 0, %s471
    $region4: #{_forward_core.1} parent=1 // loop_header_branch
      %46 = sbr.rel (%p44) target = $region8
    $region5: #{_forward_core.1} parent=1 // loop_body
      %s48 = ssub.s32 %s43, 1
      %s49 = ssub.s32 %s43, 2
      %s56 = sadd.s32 1, %s51
      %p57 = scmp.ge.s32.totalorder %s56, 6
      %s58 = scalar_select %p57, 0, %s56
      %s59 = sadd.s32 1, %s50
      %s60 = scalar_select %p57, %s59, %s50
      %p61 = scmp.ge.s32.totalorder %s60, 1
      %s62 = scalar_select %p61, 0, %s60
      %s63 = ssub.s32 %s50, %s62
      %p64 = scmp.eq.s32.totalorder %s63, 0
      %s66 = sadd.s32 %s65, 1
      %s67 = scalar_select %p64, %s65, %s66
      %p70 = pneg %p64
      %p71 = scmp.eq.s32.totalorder %s43, 5
      %p72 = por %p70, %p71
      %p73 = scmp.ne.s32.totalorder %s65, %s68
      %p74 = scmp.eq.s32.totalorder %s43, 0
      %p75 = por %p73, %p74
      %p76 = scmp.ne.s32.totalorder %s65, %s68
      %p77 = scmp.eq.s32.totalorder %s48, 5
      %p78 = por %p76, %p77
      %p79 = scmp.ne.s32.totalorder %s68, %s69
      %p80 = scmp.eq.s32.totalorder %s48, 0
      %p81 = por %p79, %p80
      %p82 = scmp.ne.s32.totalorder %s68, %s69
      %p83 = scmp.eq.s32.totalorder %s49, 5
      %p84 = por %p82, %p83
      %p86 = scmp.ne.s32.totalorder %s69, %s85
      %p87 = scmp.eq.s32.totalorder %s49, 0
      %p88 = por %p86, %p87
      %s89 = ssub.s32 %s50, %s62
      %p90 = scmp.eq.s32.totalorder %s89, 0
      %s92 = sadd.s32 %s91, 1
      %s93 = scalar_select %p90, %s91, %s92
      %p96 = pneg %p90
      %p97 = scmp.eq.s32.totalorder %s43, 5
      %p98 = por %p96, %p97
      %p99 = scmp.ne.s32.totalorder %s91, %s94
      %p100 = scmp.eq.s32.totalorder %s43, 0
      %p101 = por %p99, %p100
      %p102 = scmp.ne.s32.totalorder %s91, %s94
      %p103 = scmp.eq.s32.totalorder %s48, 5
      %p104 = por %p102, %p103
      %p105 = scmp.ne.s32.totalorder %s94, %s95
      %p106 = scmp.eq.s32.totalorder %s48, 0
      %p107 = por %p105, %p106
      %p108 = scmp.ne.s32.totalorder %s94, %s95
      %p109 = scmp.eq.s32.totalorder %s49, 5
      %p110 = por %p108, %p109
      %p112 = scmp.ne.s32.totalorder %s95, %s111
      %p113 = scmp.eq.s32.totalorder %s49, 0
      %p114 = por %p112, %p113
      %s115 = ssub.s32 %s51, %s58
      %s116 = ssub.s32 %s50, %s62
      %s117 = sor.u32 %s115, %s116
      %p118 = scmp.eq.s32.totalorder %s117, 0
      %s120 = sadd.s32 %s119, 1
      %s121 = scalar_select %p118, %s119, %s120
      %p124 = pneg %p118
      %p125 = scmp.eq.s32.totalorder %s43, 5
      %p126 = por %p124, %p125
      %p127 = scmp.ne.s32.totalorder %s119, %s122
      %p128 = scmp.eq.s32.totalorder %s43, 0
      %p129 = por %p127, %p128
      %p130 = scmp.ne.s32.totalorder %s119, %s122
      %p131 = scmp.eq.s32.totalorder %s48, 5
      %p132 = por %p130, %p131
      %p133 = scmp.ne.s32.totalorder %s122, %s123
      %p134 = scmp.eq.s32.totalorder %s48, 0
      %p135 = por %p133, %p134
      %p136 = scmp.ne.s32.totalorder %s122, %s123
      %p137 = scmp.eq.s32.totalorder %s49, 5
      %p138 = por %p136, %p137
      %p140 = scmp.ne.s32.totalorder %s123, %s139
      %p141 = scmp.eq.s32.totalorder %s49, 0
      %p142 = por %p140, %p141
      %s144 = sadd.s32 %s143, 1
      %p147 = scmp.eq.s32.totalorder %s43, 5
      %p148 = scmp.ne.s32.totalorder %s143, %s145
      %p149 = scmp.eq.s32.totalorder %s43, 0
      %p150 = por %p148, %p149
      %p151 = scmp.ne.s32.totalorder %s143, %s145
      %p152 = scmp.eq.s32.totalorder %s48, 5
      %p153 = por %p151, %p152
      %p154 = scmp.ne.s32.totalorder %s145, %s146
      %p155 = scmp.eq.s32.totalorder %s48, 0
      %p156 = por %p154, %p155
      %p157 = scmp.ne.s32.totalorder %s145, %s146
      %p158 = scmp.eq.s32.totalorder %s49, 5
      %p159 = por %p157, %p158
      %p161 = scmp.ne.s32.totalorder %s146, %s160
      %p162 = scmp.eq.s32.totalorder %s49, 0
      %p163 = por %p161, %p162
      %s165 = sadd.s32 %s164, 1
      %p168 = scmp.eq.s32.totalorder %s43, 5
      %p169 = scmp.ne.s32.totalorder %s164, %s166
      %p170 = scmp.eq.s32.totalorder %s43, 0
      %p171 = por %p169, %p170
      %p172 = scmp.ne.s32.totalorder %s164, %s166
      %p173 = scmp.eq.s32.totalorder %s48, 5
      %p174 = por %p172, %p173
      %p175 = scmp.ne.s32.totalorder %s166, %s167
      %p176 = scmp.eq.s32.totalorder %s48, 0
      %p177 = por %p175, %p176
      %p178 = scmp.ne.s32.totalorder %s166, %s167
      %p179 = scmp.eq.s32.totalorder %s49, 5
      %p180 = por %p178, %p179
      %p182 = scmp.ne.s32.totalorder %s167, %s181
      %p183 = scmp.eq.s32.totalorder %s49, 0
      %p184 = por %p182, %p183
      %s186 = sadd.s32 %s185, 1
      %p189 = scmp.eq.s32.totalorder %s43, 5
      %p190 = scmp.ne.s32.totalorder %s185, %s187
      %p191 = scmp.eq.s32.totalorder %s43, 0
      %p192 = por %p190, %p191
      %p193 = scmp.ne.s32.totalorder %s185, %s187
      %p194 = scmp.eq.s32.totalorder %s48, 5
      %p195 = por %p193, %p194
      %p196 = scmp.ne.s32.totalorder %s187, %s188
      %p197 = scmp.eq.s32.totalorder %s48, 0
      %p198 = por %p196, %p197
      %p199 = scmp.ne.s32.totalorder %s187, %s188
      %p200 = scmp.eq.s32.totalorder %s49, 5
      %p201 = por %p199, %p200
      %p203 = scmp.ne.s32.totalorder %s188, %s202
      %p204 = scmp.eq.s32.totalorder %s49, 0
      %p205 = por %p203, %p204
      %s207 = sadd.s32 %s206, 1
      %p210 = scmp.eq.s32.totalorder %s43, 5
      %p211 = scmp.ne.s32.totalorder %s206, %s208
      %p212 = scmp.eq.s32.totalorder %s43, 0
      %p213 = por %p211, %p212
      %p214 = scmp.ne.s32.totalorder %s206, %s208
      %p215 = scmp.eq.s32.totalorder %s48, 5
      %p216 = por %p214, %p215
      %p217 = scmp.ne.s32.totalorder %s208, %s209
      %p218 = scmp.eq.s32.totalorder %s48, 0
      %p219 = por %p217, %p218
      %p220 = scmp.ne.s32.totalorder %s208, %s209
      %p221 = scmp.eq.s32.totalorder %s49, 5
      %p222 = por %p220, %p221
      %p224 = scmp.ne.s32.totalorder %s209, %s223
      %p225 = scmp.eq.s32.totalorder %s49, 0
      %p226 = por %p224, %p225
      %s228 = sadd.s32 %s227, 1
      %p231 = scmp.eq.s32.totalorder %s43, 5
      %p232 = scmp.ne.s32.totalorder %s227, %s229
      %p233 = scmp.eq.s32.totalorder %s43, 0
      %p234 = por %p232, %p233
      %p235 = scmp.ne.s32.totalorder %s227, %s229
      %p236 = scmp.eq.s32.totalorder %s48, 5
      %p237 = por %p235, %p236
      %p238 = scmp.ne.s32.totalorder %s229, %s230
      %p239 = scmp.eq.s32.totalorder %s48, 0
      %p240 = por %p238, %p239
      %p241 = scmp.ne.s32.totalorder %s229, %s230
      %p242 = scmp.eq.s32.totalorder %s49, 5
      %p243 = por %p241, %p242
      %p245 = scmp.ne.s32.totalorder %s230, %s244
      %p246 = scmp.eq.s32.totalorder %s49, 0
      %p247 = por %p245, %p246
      %s249 = sadd.s32 %s248, 1
      %p252 = scmp.eq.s32.totalorder %s43, 5
      %p253 = scmp.ne.s32.totalorder %s248, %s250
      %p254 = scmp.eq.s32.totalorder %s43, 0
      %p255 = por %p253, %p254
      %p256 = scmp.ne.s32.totalorder %s248, %s250
      %p257 = scmp.eq.s32.totalorder %s48, 5
      %p258 = por %p256, %p257
      %p259 = scmp.ne.s32.totalorder %s250, %s251
      %p260 = scmp.eq.s32.totalorder %s48, 0
      %p261 = por %p259, %p260
      %p262 = scmp.ne.s32.totalorder %s250, %s251
      %p263 = scmp.eq.s32.totalorder %s49, 5
      %p264 = por %p262, %p263
      %p266 = scmp.ne.s32.totalorder %s251, %s265
      %p267 = scmp.eq.s32.totalorder %s49, 0
      %p268 = por %p266, %p267
      %s270 = sadd.s32 %s269, 1
      %p273 = scmp.eq.s32.totalorder %s43, 5
      %p274 = scmp.ne.s32.totalorder %s269, %s271
      %p275 = scmp.eq.s32.totalorder %s43, 0
      %p276 = por %p274, %p275
      %p277 = scmp.ne.s32.totalorder %s269, %s271
      %p278 = scmp.eq.s32.totalorder %s48, 5
      %p279 = por %p277, %p278
      %p280 = scmp.ne.s32.totalorder %s271, %s272
      %p281 = scmp.eq.s32.totalorder %s48, 0
      %p282 = por %p280, %p281
      %p283 = scmp.ne.s32.totalorder %s271, %s272
      %p284 = scmp.eq.s32.totalorder %s49, 5
      %p285 = por %p283, %p284
      %p287 = scmp.ne.s32.totalorder %s272, %s286
      %p288 = scmp.eq.s32.totalorder %s49, 0
      %p289 = por %p287, %p288
      %s291 = sadd.s32 %s290, 1
      %p294 = scmp.eq.s32.totalorder %s43, 5
      %p295 = scmp.ne.s32.totalorder %s290, %s292
      %p296 = scmp.eq.s32.totalorder %s43, 0
      %p297 = por %p295, %p296
      %p298 = scmp.ne.s32.totalorder %s290, %s292
      %p299 = scmp.eq.s32.totalorder %s48, 5
      %p300 = por %p298, %p299
      %p301 = scmp.ne.s32.totalorder %s292, %s293
      %p302 = scmp.eq.s32.totalorder %s48, 0
      %p303 = por %p301, %p302
      %p304 = scmp.ne.s32.totalorder %s292, %s293
      %p305 = scmp.eq.s32.totalorder %s49, 5
      %p306 = por %p304, %p305
      %p308 = scmp.ne.s32.totalorder %s293, %s307
      %p309 = scmp.eq.s32.totalorder %s49, 0
      %p310 = por %p308, %p309
      %s312 = sadd.s32 %s311, 1
      %p315 = scmp.eq.s32.totalorder %s43, 5
      %p316 = scmp.ne.s32.totalorder %s311, %s313
      %p317 = scmp.eq.s32.totalorder %s43, 0
      %p318 = por %p316, %p317
      %p319 = scmp.ne.s32.totalorder %s311, %s313
      %p320 = scmp.eq.s32.totalorder %s48, 5
      %p321 = por %p319, %p320
      %p322 = scmp.ne.s32.totalorder %s313, %s314
      %p323 = scmp.eq.s32.totalorder %s48, 0
      %p324 = por %p322, %p323
      %p325 = scmp.ne.s32.totalorder %s313, %s314
      %p326 = scmp.eq.s32.totalorder %s49, 5
      %p327 = por %p325, %p326
      %p329 = scmp.ne.s32.totalorder %s314, %s328
      %p330 = scmp.eq.s32.totalorder %s49, 0
      %p331 = por %p329, %p330
      %s333 = sadd.s32 %s332, 1
      %p336 = scmp.eq.s32.totalorder %s43, 5
      %p337 = scmp.ne.s32.totalorder %s332, %s334
      %p338 = scmp.eq.s32.totalorder %s43, 0
      %p339 = por %p337, %p338
      %p340 = scmp.ne.s32.totalorder %s332, %s334
      %p341 = scmp.eq.s32.totalorder %s48, 5
      %p342 = por %p340, %p341
      %p343 = scmp.ne.s32.totalorder %s334, %s335
      %p344 = scmp.eq.s32.totalorder %s48, 0
      %p345 = por %p343, %p344
      %p346 = scmp.ne.s32.totalorder %s334, %s335
      %p347 = scmp.eq.s32.totalorder %s49, 5
      %p348 = por %p346, %p347
      %p350 = scmp.ne.s32.totalorder %s335, %s349
      %p351 = scmp.eq.s32.totalorder %s49, 0
      %p352 = por %p350, %p351
      %s354 = sadd.s32 %s353, 1
      %p357 = scmp.eq.s32.totalorder %s43, 5
      %p358 = scmp.ne.s32.totalorder %s353, %s355
      %p359 = scmp.eq.s32.totalorder %s43, 0
      %p360 = por %p358, %p359
      %p361 = scmp.ne.s32.totalorder %s353, %s355
      %p362 = scmp.eq.s32.totalorder %s48, 5
      %p363 = por %p361, %p362
      %p364 = scmp.ne.s32.totalorder %s355, %s356
      %p365 = scmp.eq.s32.totalorder %s48, 0
      %p366 = por %p364, %p365
      %p367 = scmp.ne.s32.totalorder %s355, %s356
      %p368 = scmp.eq.s32.totalorder %s49, 5
      %p369 = por %p367, %p368
      %p371 = scmp.ne.s32.totalorder %s356, %s370
      %p372 = scmp.eq.s32.totalorder %s49, 0
      %p373 = por %p371, %p372
      %s375 = sadd.s32 %s374, 1
      %p378 = scmp.eq.s32.totalorder %s43, 5
      %p379 = scmp.ne.s32.totalorder %s374, %s376
      %p380 = scmp.eq.s32.totalorder %s43, 0
      %p381 = por %p379, %p380
      %p382 = scmp.ne.s32.totalorder %s374, %s376
      %p383 = scmp.eq.s32.totalorder %s48, 5
      %p384 = por %p382, %p383
      %p385 = scmp.ne.s32.totalorder %s376, %s377
      %p386 = scmp.eq.s32.totalorder %s48, 0
      %p387 = por %p385, %p386
      %p388 = scmp.ne.s32.totalorder %s376, %s377
      %p389 = scmp.eq.s32.totalorder %s49, 5
      %p390 = por %p388, %p389
      %p392 = scmp.ne.s32.totalorder %s377, %s391
      %p393 = scmp.eq.s32.totalorder %s49, 0
      %p394 = por %p392, %p393
      %s396 = sadd.s32 %s395, 1
      %p399 = scmp.eq.s32.totalorder %s43, 5
      %p400 = scmp.ne.s32.totalorder %s395, %s397
      %p401 = scmp.eq.s32.totalorder %s43, 0
      %p402 = por %p400, %p401
      %p403 = scmp.ne.s32.totalorder %s395, %s397
      %p404 = scmp.eq.s32.totalorder %s48, 5
      %p405 = por %p403, %p404
      %p406 = scmp.ne.s32.totalorder %s397, %s398
      %p407 = scmp.eq.s32.totalorder %s48, 0
      %p408 = por %p406, %p407
      %p409 = scmp.ne.s32.totalorder %s397, %s398
      %p410 = scmp.eq.s32.totalorder %s49, 5
      %p411 = por %p409, %p410
      %p413 = scmp.ne.s32.totalorder %s398, %s412
      %p414 = scmp.eq.s32.totalorder %s49, 0
      %p415 = por %p413, %p414
      %s417 = sadd.s32 %s416, 1
      %p420 = scmp.eq.s32.totalorder %s43, 5
      %p421 = scmp.ne.s32.totalorder %s416, %s418
      %p422 = scmp.eq.s32.totalorder %s43, 0
      %p423 = por %p421, %p422
      %p424 = scmp.ne.s32.totalorder %s416, %s418
      %p425 = scmp.eq.s32.totalorder %s48, 5
      %p426 = por %p424, %p425
      %p427 = scmp.ne.s32.totalorder %s418, %s419
      %p428 = scmp.eq.s32.totalorder %s48, 0
      %p429 = por %p427, %p428
      %p430 = scmp.ne.s32.totalorder %s418, %s419
      %p431 = scmp.eq.s32.totalorder %s49, 5
      %p432 = por %p430, %p431
      %p434 = scmp.ne.s32.totalorder %s419, %s433
      %p435 = scmp.eq.s32.totalorder %s49, 0
      %p436 = por %p434, %p435
      %s437 = ssub.s32 %s51, %s58
      %s438 = ssub.s32 %s50, %s62
      %s439 = sor.u32 %s437, %s438
      %p440 = scmp.eq.s32.totalorder %s439, 0
      %s442 = sadd.s32 %s441, 1
      %s443 = scalar_select %p440, %s441, %s442
      %p446 = pneg %p440
      %p447 = scmp.eq.s32.totalorder %s43, 5
      %p448 = por %p446, %p447
      %p449 = scmp.ne.s32.totalorder %s441, %s444
      %p450 = scmp.eq.s32.totalorder %s43, 0
      %p451 = por %p449, %p450
      %p452 = scmp.ne.s32.totalorder %s441, %s444
      %p453 = scmp.eq.s32.totalorder %s48, 5
      %p454 = por %p452, %p453
      %p455 = scmp.ne.s32.totalorder %s444, %s445
      %p456 = scmp.eq.s32.totalorder %s48, 0
      %p457 = por %p455, %p456
      %p458 = scmp.ne.s32.totalorder %s444, %s445
      %p459 = scmp.eq.s32.totalorder %s49, 5
      %p460 = por %p458, %p459
      %p462 = scmp.ne.s32.totalorder %s445, %s461
      %p463 = scmp.eq.s32.totalorder %s49, 0
      %p464 = por %p462, %p463
      %s465 = ssub.s32 %s50, %s62
      %p466 = scmp.eq.s32.totalorder %s465, 0
      %s468 = sadd.s32 %s467, 1
      %s469 = scalar_select %p466, %s467, %s468
      %p472 = pneg %p466
      %p473 = scmp.eq.s32.totalorder %s43, 5
      %p474 = por %p472, %p473
      %p475 = scmp.ne.s32.totalorder %s467, %s470
      %p476 = scmp.eq.s32.totalorder %s43, 0
      %p477 = por %p475, %p476
      %p478 = scmp.ne.s32.totalorder %s467, %s470
      %p479 = scmp.eq.s32.totalorder %s48, 5
      %p480 = por %p478, %p479
      %p481 = scmp.ne.s32.totalorder %s470, %s471
      %p482 = scmp.eq.s32.totalorder %s48, 0
      %p483 = por %p481, %p482
      %p484 = scmp.ne.s32.totalorder %s470, %s471
      %p485 = scmp.eq.s32.totalorder %s49, 5
      %p486 = por %p484, %p485
      %p488 = scmp.ne.s32.totalorder %s471, %s487
      %p489 = scmp.eq.s32.totalorder %s49, 0
      %p490 = por %p488, %p489
      %p491 = scmp.le.s32.totalorder 1, %s43
      %p492 = scmp.lt.s32.totalorder %s43, 7
      %p493 = pnand %p491, %p492
      %p494 = pneg %p493
      // Predicated region
      $region9: #{_forward_core.1} parent=5 // pred_check
        _
      $region10: #{_forward_core.1} parent=5 // pred_check_branch
        %496 = sbr.rel (%p493) target = $region12
      $region11: #{_forward_core.1} parent=5 // pred_region
        %s497 = ssub.s32 %s43, 1
        // Predicated region
        $region13: #{_forward_core.1} parent=11 // pred_check
          %p498 = pneg %p81
        $region14: #{_forward_core.1} parent=11 // pred_check_branch
          %500 = sbr.rel (%p498) target = $region16
        $region15: #{_forward_core.1} parent=11 // pred_region
          %s501 = smul.u32 16, %s52
          %s503 = ssub.s32 1024, 1024
          %504 = vsyncadd [#allocation13], %s503
          %s505 = smul.addr %s501, 64
          %s506 = scalar_lea.hbm %s1, %s505
          %s507 = sshll.u32 [#allocation12], 4
          %s508 = int_to_ptr.vmem [resolvable:$true] %s507
          %513 = dma.hbm_to_vmem [thread:$0]  %s506, 1024, %s508, [#allocation13], 64, 64, 4
        $region16: #{_forward_core.1} parent=11 // pred_fallthru
          _
        // Predicated region
        $region17: #{_forward_core.1} parent=11 // pred_check
          %p514 = pneg %p107
        $region18: #{_forward_core.1} parent=11 // pred_check_branch
          %516 = sbr.rel (%p514) target = $region20
        $region19: #{_forward_core.1} parent=11 // pred_region
          %s517 = smul.u32 16, %s52
          %s519 = ssub.s32 1024, 1024
          %520 = vsyncadd [#allocation16], %s519
          %s521 = smul.addr %s517, 64
          %s522 = scalar_lea.hbm %s2, %s521
          %s523 = sshll.u32 [#allocation15], 4
          %s524 = int_to_ptr.vmem [resolvable:$true] %s523
          %529 = dma.hbm_to_vmem [thread:$0]  %s522, 1024, %s524, [#allocation16], 64, 64, 4
        $region20: #{_forward_core.1} parent=11 // pred_fallthru
          _
        // Predicated region
        $region21: #{_forward_core.1} parent=11 // pred_check
          %p530 = pneg %p156
        $region22: #{_forward_core.1} parent=11 // pred_check_branch
          %532 = sbr.rel (%p530) target = $region24
        $region23: #{_forward_core.1} parent=11 // pred_region
          %s534 = ssub.s32 128, 128
          %535 = vsyncadd [#allocation16], %s534
          %s536 = sshll.u32 [#allocation18], 4
          %s537 = int_to_ptr.vmem [resolvable:$true] %s536
          %542 = dma.hbm_to_vmem [thread:$0]  %s4, 128, %s537, [#allocation16], 64, 64, 4
        $region24: #{_forward_core.1} parent=11 // pred_fallthru
          _
        // Predicated region
        $region25: #{_forward_core.1} parent=11 // pred_check
          %p543 = pneg %p177
        $region26: #{_forward_core.1} parent=11 // pred_check_branch
          %545 = sbr.rel (%p543) target = $region28
        $region27: #{_forward_core.1} parent=11 // pred_region
          %s547 = ssub.s32 128, 128
          %548 = vsyncadd [#allocation20], %s547
          %s549 = sshll.u32 [#allocation19], 4
          %s550 = int_to_ptr.vmem [resolvable:$true] %s549
          %555 = dma.hbm_to_vmem [thread:$0]  %s5, 128, %s550, [#allocation20], 64, 64, 4
        $region28: #{_forward_core.1} parent=11 // pred_fallthru
          _
        // Predicated region
        $region29: #{_forward_core.1} parent=11 // pred_check
          %p556 = pneg %p198
        $region30: #{_forward_core.1} parent=11 // pred_check_branch
          %558 = sbr.rel (%p556) target = $region32
        $region31: #{_forward_core.1} parent=11 // pred_region
          %s560 = ssub.s32 256, 256
          %561 = vsyncadd [#allocation20], %s560
          %s562 = sshll.u32 [#allocation21], 4
          %s563 = int_to_ptr.vmem [resolvable:$true] %s562
          %568 = dma.hbm_to_vmem [thread:$0]  %s6, 256, %s563, [#allocation20], 64, 64, 4
        $region32: #{_forward_core.1} parent=11 // pred_fallthru
          _
        // Predicated region
        $region33: #{_forward_core.1} parent=11 // pred_check
          %p569 = pneg %p219
        $region34: #{_forward_core.1} parent=11 // pred_check_branch
          %571 = sbr.rel (%p569) target = $region36
        $region35: #{_forward_core.1} parent=11 // pred_region
          %s573 = ssub.s32 128, 128
          %574 = vsyncadd [#allocation23], %s573
          %s575 = sshll.u32 [#allocation22], 4
          %s576 = int_to_ptr.vmem [resolvable:$true] %s575
          %581 = dma.hbm_to_vmem [thread:$0]  %s7, 128, %s576, [#allocation23], 64, 64, 4
        $region36: #{_forward_core.1} parent=11 // pred_fallthru
          _
        // Predicated region
        $region37: #{_forward_core.1} parent=11 // pred_check
          %p582 = pneg %p240
        $region38: #{_forward_core.1} parent=11 // pred_check_branch
          %584 = sbr.rel (%p582) target = $region40
        $region39: #{_forward_core.1} parent=11 // pred_region
          %s586 = ssub.s32 128, 128
          %587 = vsyncadd [#allocation23], %s586
          %s588 = sshll.u32 [#allocation24], 4
          %s589 = int_to_ptr.vmem [resolvable:$true] %s588
          %594 = dma.hbm_to_vmem [thread:$0]  %s8, 128, %s589, [#allocation23], 64, 64, 4
        $region40: #{_forward_core.1} parent=11 // pred_fallthru
          _
        // Predicated region
        $region41: #{_forward_core.1} parent=11 // pred_check
          %p595 = pneg %p261
        $region42: #{_forward_core.1} parent=11 // pred_check_branch
          %597 = sbr.rel (%p595) target = $region44
        $region43: #{_forward_core.1} parent=11 // pred_region
          %s599 = ssub.s32 128, 128
          %600 = vsyncadd [#allocation26], %s599
          %s601 = sshll.u32 [#allocation25], 4
          %s602 = int_to_ptr.vmem [resolvable:$true] %s601
          %607 = dma.hbm_to_vmem [thread:$0]  %s9, 128, %s602, [#allocation26], 64, 64, 4
        $region44: #{_forward_core.1} parent=11 // pred_fallthru
          _
        // Predicated region
        $region45: #{_forward_core.1} parent=11 // pred_check
          %p608 = pneg %p282
        $region46: #{_forward_core.1} parent=11 // pred_check_branch
          %610 = sbr.rel (%p608) target = $region48
        $region47: #{_forward_core.1} parent=11 // pred_region
          %s612 = ssub.s32 128, 128
          %613 = vsyncadd [#allocation26], %s612
          %s614 = sshll.u32 [#allocation27], 4
          %s615 = int_to_ptr.vmem [resolvable:$true] %s614
          %620 = dma.hbm_to_vmem [thread:$0]  %s10, 128, %s615, [#allocation26], 64, 64, 4
        $region48: #{_forward_core.1} parent=11 // pred_fallthru
          _
        // Predicated region
        $region49: #{_forward_core.1} parent=11 // pred_check
          %p621 = pneg %p303
        $region50: #{_forward_core.1} parent=11 // pred_check_branch
          %623 = sbr.rel (%p621) target = $region52
        $region51: #{_forward_core.1} parent=11 // pred_region
          %s625 = ssub.s32 16, 16
          %626 = vsyncadd [#allocation29], %s625
          %s628 = sshll.u32 [#allocation28], 4
          %s629 = int_to_ptr.vmem [resolvable:$true] %s628
          %631 = dma.hbm_to_vmem [thread:$0]  %s11, 16, %s629, [#allocation29]
        $region52: #{_forward_core.1} parent=11 // pred_fallthru
          _
        // Predicated region
        $region53: #{_forward_core.1} parent=11 // pred_check
          %p632 = pneg %p324
        $region54: #{_forward_core.1} parent=11 // pred_check_branch
          %634 = sbr.rel (%p632) target = $region56
        $region55: #{_forward_core.1} parent=11 // pred_region
          %s636 = ssub.s32 16, 16
          %637 = vsyncadd [#allocation29], %s636
          %s639 = sshll.u32 [#allocation30], 4
          %s640 = int_to_ptr.vmem [resolvable:$true] %s639
          %642 = dma.hbm_to_vmem [thread:$0]  %s12, 16, %s640, [#allocation29]
        $region56: #{_forward_core.1} parent=11 // pred_fallthru
          _
        // Predicated region
        $region57: #{_forward_core.1} parent=11 // pred_check
          %p643 = pneg %p345
        $region58: #{_forward_core.1} parent=11 // pred_check_branch
          %645 = sbr.rel (%p643) target = $region60
        $region59: #{_forward_core.1} parent=11 // pred_region
          %s647 = ssub.s32 128, 128
          %648 = vsyncadd [#allocation32], %s647
          %s649 = sshll.u32 [#allocation31], 4
          %s650 = int_to_ptr.vmem [resolvable:$true] %s649
          %655 = dma.hbm_to_vmem [thread:$0]  %s13, 128, %s650, [#allocation32], 64, 64, 4
        $region60: #{_forward_core.1} parent=11 // pred_fallthru
          _
        // Predicated region
        $region61: #{_forward_core.1} parent=11 // pred_check
          %p656 = pneg %p366
        $region62: #{_forward_core.1} parent=11 // pred_check_branch
          %658 = sbr.rel (%p656) target = $region64
        $region63: #{_forward_core.1} parent=11 // pred_region
          %s660 = ssub.s32 16, 16
          %661 = vsyncadd [#allocation32], %s660
          %s663 = sshll.u32 [#allocation33], 4
          %s664 = int_to_ptr.vmem [resolvable:$true] %s663
          %666 = dma.hbm_to_vmem [thread:$0]  %s14, 16, %s664, [#allocation32]
        $region64: #{_forward_core.1} parent=11 // pred_fallthru
          _
        // Predicated region
        $region65: #{_forward_core.1} parent=11 // pred_check
          %p667 = pneg %p387
        $region66: #{_forward_core.1} parent=11 // pred_check_branch
          %669 = sbr.rel (%p667) target = $region68
        $region67: #{_forward_core.1} parent=11 // pred_region
          %s671 = ssub.s32 16, 16
          %672 = vsyncadd [#allocation35], %s671
          %s674 = sshll.u32 [#allocation34], 4
          %s675 = int_to_ptr.vmem [resolvable:$true] %s674
          %677 = dma.hbm_to_vmem [thread:$0]  %s15, 16, %s675, [#allocation35]
        $region68: #{_forward_core.1} parent=11 // pred_fallthru
          _
        // Predicated region
        $region69: #{_forward_core.1} parent=11 // pred_check
          %p678 = pneg %p408
        $region70: #{_forward_core.1} parent=11 // pred_check_branch
          %680 = sbr.rel (%p678) target = $region72
        $region71: #{_forward_core.1} parent=11 // pred_region
          %s682 = ssub.s32 128, 128
          %683 = vsyncadd [#allocation35], %s682
          %s684 = sshll.u32 [#allocation36], 4
          %s685 = int_to_ptr.vmem [resolvable:$true] %s684
          %690 = dma.hbm_to_vmem [thread:$0]  %s16, 128, %s685, [#allocation35], 64, 64, 4
        $region72: #{_forward_core.1} parent=11 // pred_fallthru
          _
        // Predicated region
        $region73: #{_forward_core.1} parent=11 // pred_check
          %p691 = pneg %p429
        $region74: #{_forward_core.1} parent=11 // pred_check_branch
          %693 = sbr.rel (%p691) target = $region76
        $region75: #{_forward_core.1} parent=11 // pred_region
          %s695 = ssub.s32 16, 16
          %696 = vsyncadd [#allocation38], %s695
          %s698 = sshll.u32 [#allocation37], 4
          %s699 = int_to_ptr.vmem [resolvable:$true] %s698
          %701 = dma.hbm_to_vmem [thread:$0]  %s17, 16, %s699, [#allocation38]
        $region76: #{_forward_core.1} parent=11 // pred_fallthru
          _
      $region12: #{_forward_core.1} parent=5 // pred_fallthru
        _
      %p702 = scmp.lt.s32.totalorder %s43, 6
      // Predicated region
      $region77: #{_forward_core.1} parent=5 // pred_check
        %p703 = pneg %p702
      $region78: #{_forward_core.1} parent=5 // pred_check_branch
        %705 = sbr.rel (%p703) target = $region80
      $region79: #{_forward_core.1} parent=5 // pred_region
        // Predicated region
        $region81: #{_forward_core.1} parent=79 // pred_check
          %p706 = pneg %p129
        $region82: #{_forward_core.1} parent=79 // pred_check_branch
          %708 = sbr.rel (%p706) target = $region84
        $region83: #{_forward_core.1} parent=79 // pred_region
          %s709 = sand.u32 %s43, 1
          %s710 = scalar_lea.sflag [#allocation13], %s709
          %s711 = sand.u32 %s119, 1
          %s712 = smul.addr %s711, 8
          %s713 = scalar_lea.vmem [#allocation17], %s712
          %s714 = smul.u32 2, %s50
          %s716 = ssub.s32 128, 128
          %717 = vsyncadd %s710, %s716
          %s718 = smul.addr %s51, 2
          %s719 = sadd.s32 %s714, %s718
          %s720 = smul.addr %s719, 64
          %s721 = scalar_lea.hbm %s3, %s720
          %s722 = sshll.u32 %s713, 4
          %s723 = int_to_ptr.vmem [resolvable:$true] %s722
          %728 = dma.hbm_to_vmem [thread:$0]  %s721, 128, %s723, %s710, 64, 64, 4
        $region84: #{_forward_core.1} parent=79 // pred_fallthru
          _
      $region80: #{_forward_core.1} parent=5 // pred_fallthru
        _
      %p729 = scmp.le.s32.totalorder 1, %s43
      %p730 = scmp.lt.s32.totalorder %s43, 7
      %p731 = pnand %p729, %p730
      %p732 = pneg %p731
      // Predicated region
      $region85: #{_forward_core.1} parent=5 // pred_check
        _
      $region86: #{_forward_core.1} parent=5 // pred_check_branch
        %734 = sbr.rel (%p731) target = $region88
      $region87: #{_forward_core.1} parent=5 // pred_region
        %s735 = ssub.s32 %s43, 1
        // Predicated region
        $region89: #{_forward_core.1} parent=87 // pred_check
          %p736 = pneg %p81
        $region90: #{_forward_core.1} parent=87 // pred_check_branch
          %738 = sbr.rel (%p736) target = $region92
        $region91: #{_forward_core.1} parent=87 // pred_region
          %739 = dma.done [#allocation13], 1024
        $region92: #{_forward_core.1} parent=87 // pred_fallthru
          _
        // Predicated region
        $region93: #{_forward_core.1} parent=87 // pred_check
          %p740 = pneg %p107
        $region94: #{_forward_core.1} parent=87 // pred_check_branch
          %742 = sbr.rel (%p740) target = $region96
        $region95: #{_forward_core.1} parent=87 // pred_region
          %743 = dma.done [#allocation16], 1024
        $region96: #{_forward_core.1} parent=87 // pred_fallthru
          _
        %s744 = sand.u32 %s48, 1
        %s745 = scalar_lea.sflag [#allocation13], %s744
        %s746 = sand.u32 %s122, 1
        %s747 = smul.addr %s746, 8
        %s748 = scalar_lea.vmem [#allocation17], %s747
        // Predicated region
        $region97: #{_forward_core.1} parent=87 // pred_check
          %p749 = pneg %p135
        $region98: #{_forward_core.1} parent=87 // pred_check_branch
          %751 = sbr.rel (%p749) target = $region100
        $region99: #{_forward_core.1} parent=87 // pred_region
          %752 = dma.done %s745, 128
        $region100: #{_forward_core.1} parent=87 // pred_fallthru
          _
        // Predicated region
        $region101: #{_forward_core.1} parent=87 // pred_check
          %p753 = pneg %p156
        $region102: #{_forward_core.1} parent=87 // pred_check_branch
          %755 = sbr.rel (%p753) target = $region104
        $region103: #{_forward_core.1} parent=87 // pred_region
          %756 = dma.done [#allocation16], 128
        $region104: #{_forward_core.1} parent=87 // pred_fallthru
          _
        // Predicated region
        $region105: #{_forward_core.1} parent=87 // pred_check
          %p757 = pneg %p177
        $region106: #{_forward_core.1} parent=87 // pred_check_branch
          %759 = sbr.rel (%p757) target = $region108
        $region107: #{_forward_core.1} parent=87 // pred_region
          %760 = dma.done [#allocation20], 128
        $region108: #{_forward_core.1} parent=87 // pred_fallthru
          _
        // Predicated region
        $region109: #{_forward_core.1} parent=87 // pred_check
          %p761 = pneg %p198
        $region110: #{_forward_core.1} parent=87 // pred_check_branch
          %763 = sbr.rel (%p761) target = $region112
        $region111: #{_forward_core.1} parent=87 // pred_region
          %764 = dma.done [#allocation20], 256
        $region112: #{_forward_core.1} parent=87 // pred_fallthru
          _
        // Predicated region
        $region113: #{_forward_core.1} parent=87 // pred_check
          %p765 = pneg %p219
        $region114: #{_forward_core.1} parent=87 // pred_check_branch
          %767 = sbr.rel (%p765) target = $region116
        $region115: #{_forward_core.1} parent=87 // pred_region
          %768 = dma.done [#allocation23], 128
        $region116: #{_forward_core.1} parent=87 // pred_fallthru
          _
        // Predicated region
        $region117: #{_forward_core.1} parent=87 // pred_check
          %p769 = pneg %p240
        $region118: #{_forward_core.1} parent=87 // pred_check_branch
          %771 = sbr.rel (%p769) target = $region120
        $region119: #{_forward_core.1} parent=87 // pred_region
          %772 = dma.done [#allocation23], 128
        $region120: #{_forward_core.1} parent=87 // pred_fallthru
          _
        // Predicated region
        $region121: #{_forward_core.1} parent=87 // pred_check
          %p773 = pneg %p261
        $region122: #{_forward_core.1} parent=87 // pred_check_branch
          %775 = sbr.rel (%p773) target = $region124
        $region123: #{_forward_core.1} parent=87 // pred_region
          %776 = dma.done [#allocation26], 128
        $region124: #{_forward_core.1} parent=87 // pred_fallthru
          _
        // Predicated region
        $region125: #{_forward_core.1} parent=87 // pred_check
          %p777 = pneg %p282
        $region126: #{_forward_core.1} parent=87 // pred_check_branch
          %779 = sbr.rel (%p777) target = $region128
        $region127: #{_forward_core.1} parent=87 // pred_region
          %780 = dma.done [#allocation26], 128
        $region128: #{_forward_core.1} parent=87 // pred_fallthru
          _
        // Predicated region
        $region129: #{_forward_core.1} parent=87 // pred_check
          %p781 = pneg %p303
        $region130: #{_forward_core.1} parent=87 // pred_check_branch
          %783 = sbr.rel (%p781) target = $region132
        $region131: #{_forward_core.1} parent=87 // pred_region
          %784 = dma.done [#allocation29], 16
        $region132: #{_forward_core.1} parent=87 // pred_fallthru
          _
        // Predicated region
        $region133: #{_forward_core.1} parent=87 // pred_check
          %p785 = pneg %p324
        $region134: #{_forward_core.1} parent=87 // pred_check_branch
          %787 = sbr.rel (%p785) target = $region136
        $region135: #{_forward_core.1} parent=87 // pred_region
          %788 = dma.done [#allocation29], 16
        $region136: #{_forward_core.1} parent=87 // pred_fallthru
          _
        // Predicated region
        $region137: #{_forward_core.1} parent=87 // pred_check
          %p789 = pneg %p345
        $region138: #{_forward_core.1} parent=87 // pred_check_branch
          %791 = sbr.rel (%p789) target = $region140
        $region139: #{_forward_core.1} parent=87 // pred_region
          %792 = dma.done [#allocation32], 128
        $region140: #{_forward_core.1} parent=87 // pred_fallthru
          _
        // Predicated region
        $region141: #{_forward_core.1} parent=87 // pred_check
          %p793 = pneg %p366
        $region142: #{_forward_core.1} parent=87 // pred_check_branch
          %795 = sbr.rel (%p793) target = $region144
        $region143: #{_forward_core.1} parent=87 // pred_region
          %796 = dma.done [#allocation32], 16
        $region144: #{_forward_core.1} parent=87 // pred_fallthru
          _
        // Predicated region
        $region145: #{_forward_core.1} parent=87 // pred_check
          %p797 = pneg %p387
        $region146: #{_forward_core.1} parent=87 // pred_check_branch
          %799 = sbr.rel (%p797) target = $region148
        $region147: #{_forward_core.1} parent=87 // pred_region
          %800 = dma.done [#allocation35], 16
        $region148: #{_forward_core.1} parent=87 // pred_fallthru
          _
        // Predicated region
        $region149: #{_forward_core.1} parent=87 // pred_check
          %p801 = pneg %p408
        $region150: #{_forward_core.1} parent=87 // pred_check_branch
          %803 = sbr.rel (%p801) target = $region152
        $region151: #{_forward_core.1} parent=87 // pred_region
          %804 = dma.done [#allocation35], 128
        $region152: #{_forward_core.1} parent=87 // pred_fallthru
          _
        // Predicated region
        $region153: #{_forward_core.1} parent=87 // pred_check
          %p805 = pneg %p429
        $region154: #{_forward_core.1} parent=87 // pred_check_branch
          %807 = sbr.rel (%p805) target = $region156
        $region155: #{_forward_core.1} parent=87 // pred_region
          %808 = dma.done [#allocation38], 16
        $region156: #{_forward_core.1} parent=87 // pred_fallthru
          _
        %p809 = pneg %p81
        %p810 = pneg %p78
        %p811 = pneg %p107
        %p812 = pneg %p104
        %s813 = sand.u32 %s48, 1
        %s814 = scalar_lea.sflag [#allocation13], %s813
        %s815 = sand.u32 %s122, 1
        %s816 = smul.addr %s815, 8
        %s817 = scalar_lea.vmem [#allocation17], %s816
        %p818 = pneg %p135
        %p819 = pneg %p132
        %p820 = pneg %p156
        %p821 = pneg %p153
        %p822 = pneg %p177
        %p823 = pneg %p174
        %p824 = pneg %p198
        %p825 = pneg %p195
        %p826 = pneg %p219
        %p827 = pneg %p216
        %p828 = pneg %p240
        %p829 = pneg %p237
        %p830 = pneg %p261
        %p831 = pneg %p258
        %p832 = pneg %p282
        %p833 = pneg %p279
        %p834 = pneg %p303
        %p835 = pneg %p300
        %p836 = pneg %p324
        %p837 = pneg %p321
        %p838 = pneg %p345
        %p839 = pneg %p342
        %p840 = pneg %p366
        %p841 = pneg %p363
        %p842 = pneg %p387
        %p843 = pneg %p384
        %p844 = pneg %p408
        %p845 = pneg %p405
        %p846 = pneg %p429
        %p847 = pneg %p426
        %p848 = pneg %p457
        %p849 = pneg %p454
        %s850 = sand.u32 %s444, 1
        %s851 = scalar_lea.sflag [#allocation14], %s850
        %s852 = sand.u32 %s444, 1
        %s853 = smul.addr %s852, 8
        %s854 = scalar_lea.vmem [#allocation39], %s853
        %p855 = pneg %p483
        %p856 = pneg %p480
        %s857 = smul.u32 16, %s52
        %s858 = smul.u32 16, %s52
        %s859 = smul.u32 2, %s52
        %s860 = smul.u32 2, %s52
        %s862 = sld [smem:[#allocation11 + %s53]]
        %v863 = vlaneseq
        %v864 = vshrl.u32 %v863, 7
        %v865 = vadd.s32 %v864, 8
        %s866 = smul.u32 %s52, 16
        %v867 = vstv %s866
        %v868 = vadd.s32 %v864, %v867
        %v869 = vadd.s32 %v865, %v867
        %v870 = vstv %s862
        %vm871 = vcmp.lt.s32.totalorder %v868, %v870
        %vm872 = vcmp.lt.s32.totalorder %v869, %v870
        %p873 = scmp.eq.s32.totalorder %s53, 0
        // Predicated region
        $region157: #{_forward_core.1} parent=87 // pred_check
          %p874 = pneg %p873
        $region158: #{_forward_core.1} parent=87 // pred_check_branch
          %876 = sbr.rel (%p874) target = $region160
        $region159: #{_forward_core.1} parent=87 // pred_region
          %vm877 = vcmask 130048
          %878 = vst.msk [vmem:[#allocation2] sm:$0xff] %vm877, 0.0
          %879 = vst.msk [vmem:[#allocation2 + $0x8] sm:$0xff] %vm877, 0.0
          %880 = vst.msk [vmem:[#allocation3] sm:$0xff] %vm877, 0.0
          %881 = vst.msk [vmem:[#allocation3 + $0x8] sm:$0xff] %vm877, 0.0
          %882 = vst.msk [vmem:[#allocation4] sm:$0xff] %vm877, 0.0
          %883 = vst.msk [vmem:[#allocation4 + $0x8] sm:$0xff] %vm877, 0.0
          %884 = vst.msk [vmem:[#allocation5] sm:$0xff] %vm877, 0.0
          %885 = vst.msk [vmem:[#allocation5 + $0x8] sm:$0xff] %vm877, 0.0
          %886 = vst.msk [vmem:[#allocation6] sm:$0xff] %vm877, 0.0
          %887 = vst.msk [vmem:[#allocation6 + $0x8] sm:$0xff] %vm877, 0.0
          %888 = vst.msk [vmem:[#allocation7] sm:$0xff] %vm877, 0.0
          %889 = vst.msk [vmem:[#allocation7 + $0x8] sm:$0xff] %vm877, 0.0
          %890 = vst.msk [vmem:[#allocation8] sm:$0xff] %vm877, 0.0
          %891 = vst.msk [vmem:[#allocation8 + $0x8] sm:$0xff] %vm877, 0.0
          %vm892 = vcmask 0
          %893 = vst.msk [vmem:[#allocation9] sm:$0x1] %vm892, 0.0
        $region160: #{_forward_core.1} parent=87 // pred_fallthru
          _
        %v894 = vld [vmem:[#allocation2] sm:$0xff]
        %v895 = vld [vmem:[#allocation2 + $0x8] sm:$0xff]
        %v896 = vld [vmem:[#allocation3] sm:$0xff]
        %v897 = vld [vmem:[#allocation3 + $0x8] sm:$0xff]
        %v898 = vld [vmem:[#allocation4] sm:$0xff]
        %v899 = vld [vmem:[#allocation4 + $0x8] sm:$0xff]
        %v900 = vld [vmem:[#allocation5] sm:$0xff]
        %v901 = vld [vmem:[#allocation5 + $0x8] sm:$0xff]
        %v902 = vld [vmem:[#allocation6] sm:$0xff]
        %v903 = vld [vmem:[#allocation6 + $0x8] sm:$0xff]
        %v904 = vld [vmem:[#allocation7] sm:$0xff]
        %v905 = vld [vmem:[#allocation7 + $0x8] sm:$0xff]
        %v906 = vld [vmem:[#allocation8] sm:$0xff]
        %v907 = vld [vmem:[#allocation8 + $0x8] sm:$0xff]
        %v908 = vpack.c.bf16 %v899, %v898
        %v909 = vld [vmem:[#allocation18] sm:$0xf]
        %v910 = vld [vmem:[#allocation18 + $0x4] sm:$0xf]
        %v911 = vpack.c.bf16 %v895, %v894
        %v912 = vld [vmem:[#allocation19] sm:$0xf]
        %v913 = vld [vmem:[#allocation19 + $0x4] sm:$0xf]
        %v916 = vunpack.c.l.b16 %v912
        %v917 = vunpack.c.l.b16 %v913
        %v918 = vpack.c.b16 %v917, %v916
        %vm920 = vcmask 130048
        %v922 = vsel %vm920, %v911, 0
        %924 = vmatprep.subr.bf16.mxu0 0
        %925 = vmatpush1.bf16.msra.mxu0 %v918
        %926 = vmatprep.subr.bf16.mxu0 0
        %927 = vmatpush1.bf16.msra.mxu0 0
        %928 = vmatprep.subr.bf16.mxu0 0
        %929 = vmatpush1.bf16.msra.mxu0 0
        %930 = vmatprep.subr.bf16.mxu0 0
        %931 = vmatpush1.bf16.msra.mxu0 0
        %932 = vmatprep.subr.bf16.mxu0 0
        %933 = vmatpush1.bf16.msra.mxu0 0
        %934 = vmatprep.subr.bf16.mxu0 0
        %935 = vmatpush1.bf16.msra.mxu0 0
        %936 = vmatprep.subr.bf16.mxu0 0
        %937 = vmatpush1.bf16.msra.mxu0 0
        %938 = vmatprep.subr.bf16.mxu0 0
        %939 = vmatpush1.bf16.msra.mxu0 0
        %940 = vmatprep.subr.bf16.mxu0 0
        %941 = vmatpush1.bf16.msra.mxu0 0
        %942 = vmatprep.subr.bf16.mxu0 0
        %943 = vmatpush1.bf16.msra.mxu0 0
        %944 = vmatprep.subr.bf16.mxu0 0
        %945 = vmatpush1.bf16.msra.mxu0 0
        %946 = vmatprep.subr.bf16.mxu0 0
        %947 = vmatpush1.bf16.msra.mxu0 0
        %948 = vmatprep.subr.bf16.mxu0 0
        %949 = vmatpush1.bf16.msra.mxu0 0
        %950 = vmatprep.subr.bf16.mxu0 0
        %951 = vmatpush1.bf16.msra.mxu0 0
        %952 = vmatprep.subr.bf16.mxu0 0
        %953 = vmatpush1.bf16.msra.mxu0 0
        %954 = vmatprep.subr.bf16.mxu0 0
        %955 = vmatpush1.bf16.msra.mxu0 0
        %956 = vmatprep.mubr.bf16.mxu0 0
        %957 = vmatmul.mubr.bf16.gmra.mrb[0].mxu0 %v922
        %v958 = vpop.f32.mrb[0].mxu0
        %v959 = vadd.f32 0.0, %v958
        %v960 = vpop.f32.mrb[0].mxu0
        %v961 = vpop.f32.mrb[0].mxu0
        %v962 = vadd.f32 0.0, %v961
        %v963 = vpop.f32.mrb[0].mxu0
        %964 = vdwg.mxu0
        %v967 = vunpack.c.l.b16 %v909
        %v968 = vunpack.c.l.b16 %v910
        %v969 = vpack.c.b16 %v968, %v967
        %v972 = vsel %vm920, %v908, 0
        %974 = vmatprep.subr.bf16.mxu0 0
        %975 = vmatpush1.bf16.msra.mxu0 %v969
        %976 = vmatprep.subr.bf16.mxu0 0
        %977 = vmatpush1.bf16.msra.mxu0 0
        %978 = vmatprep.subr.bf16.mxu0 0
        %979 = vmatpush1.bf16.msra.mxu0 0
        %980 = vmatprep.subr.bf16.mxu0 0
        %981 = vmatpush1.bf16.msra.mxu0 0
        %982 = vmatprep.subr.bf16.mxu0 0
        %983 = vmatpush1.bf16.msra.mxu0 0
        %984 = vmatprep.subr.bf16.mxu0 0
        %985 = vmatpush1.bf16.msra.mxu0 0
        %986 = vmatprep.subr.bf16.mxu0 0
        %987 = vmatpush1.bf16.msra.mxu0 0
        %988 = vmatprep.subr.bf16.mxu0 0
        %989 = vmatpush1.bf16.msra.mxu0 0
        %990 = vmatprep.subr.bf16.mxu0 0
        %991 = vmatpush1.bf16.msra.mxu0 0
        %992 = vmatprep.subr.bf16.mxu0 0
        %993 = vmatpush1.bf16.msra.mxu0 0
        %994 = vmatprep.subr.bf16.mxu0 0
        %995 = vmatpush1.bf16.msra.mxu0 0
        %996 = vmatprep.subr.bf16.mxu0 0
        %997 = vmatpush1.bf16.msra.mxu0 0
        %998 = vmatprep.subr.bf16.mxu0 0
        %999 = vmatpush1.bf16.msra.mxu0 0
        %1000 = vmatprep.subr.bf16.mxu0 0
        %1001 = vmatpush1.bf16.msra.mxu0 0
        %1002 = vmatprep.subr.bf16.mxu0 0
        %1003 = vmatpush1.bf16.msra.mxu0 0
        %1004 = vmatprep.subr.bf16.mxu0 0
        %1005 = vmatpush1.bf16.msra.mxu0 0
        %1006 = vmatprep.mubr.bf16.mxu0 0
        %1007 = vmatmul.mubr.bf16.gmra.mrb[0].mxu0 %v972
        %v1008 = vpop.f32.mrb[0].mxu0
        %v1009 = vadd.f32 %v959, %v1008
        %v1010 = vpop.f32.mrb[0].mxu0
        %v1011 = vpop.f32.mrb[0].mxu0
        %v1012 = vadd.f32 %v962, %v1011
        %v1013 = vpop.f32.mrb[0].mxu0
        %1014 = vdwg.mxu0
        %v1015 = vld [vmem:[%s748] sm:$0xf]
        %v1016 = vld [vmem:[%s748 + $0x4] sm:$0xf]
        %v1017 = vunpack.c.l.bf16 %v1015
        %v1018 = vunpack.c.l.bf16 %v1016
        %v1019 = vadd.f32 %v1009, %v1017
        %v1020 = vadd.f32 %v1012, %v1018
        %v1021 = vxor.u32 %v1019, 2147483648
        %v1022 = vxor.u32 %v1020, 2147483648
        %v1023 = vmul.f32 %v1021, 1.442695
        %v1024 = vpow.pop %v1023
        %v1025 = vmul.f32 %v1022, 1.442695
        %v1026 = vpow.pop %v1025
        %v1027 = vadd.f32 %v1024, 1.0
        %v1028 = vadd.f32 %v1026, 1.0
        %v1029 = vrcp.pop %v1027
        %v1030 = vmul.f32 1.0, %v1029
        %v1031 = vrcp.pop %v1028
        %v1032 = vmul.f32 1.0, %v1031
        %v1033 = vtanh.pop %v1019
        %v1034 = vtanh.pop %v1020
        %1037 = vrot.lane.b32.xlu0 %v896, 16
        %v1038 = vpop.permute.xlu0 %1037
        %1039 = vrot.lane.b32.xlu0 %v897, 16
        %v1040 = vpop.permute.xlu0 %1039
        %v1043 = vmul.f32 %v1030, %v1038
        %v1044 = vmul.f32 %v1032, %v1040
        %1047 = vrot.lane.b32.xlu0 %v1033, 96
        %v1048 = vpop.permute.xlu0 %1047
        %1049 = vrot.lane.b32.xlu0 %v1034, 96
        %v1050 = vpop.permute.xlu0 %1049
        %v1053 = vmul.f32 %v1030, %v1048
        %v1054 = vmul.f32 %v1032, %v1050
        %1057 = vrot.lane.b32.xlu0 %v1053, 16
        %v1058 = vpop.permute.xlu0 %1057
        %1059 = vrot.lane.b32.xlu0 %v1054, 16
        %v1060 = vpop.permute.xlu0 %1059
        %v1063 = vadd.f32 %v1043, %v1058
        %v1064 = vadd.f32 %v1044, %v1060
        %v1065 = vtanh.pop %v1063
        %v1066 = vtanh.pop %v1064
        %1069 = vrot.lane.b32.xlu0 %v1065, 32
        %v1070 = vpop.permute.xlu0 %1069
        %1071 = vrot.lane.b32.xlu0 %v1066, 32
        %v1072 = vpop.permute.xlu0 %1071
        %v1075 = vmul.f32 %v1030, %v1070
        %v1076 = vmul.f32 %v1032, %v1072
        %v1077 = vpack.c.bf16 %v1076, %v1075
        %v1078 = vld [vmem:[#allocation31] sm:$0xf]
        %v1079 = vld [vmem:[#allocation31 + $0x4] sm:$0xf]
        %v1080 = vld [vmem:[#allocation33] sm:$0x1]
        %v1082 = vlaneseq
        %v1083 = vshrl.u32 %v1082, 7
        %v1084 = vsub.s32 0, %v1083
        %v1085 = vrot.slane %v1080, %v1084
        %1088 = vrot.lane.b32.xlu0 %v1077, 80
        %v1089 = vpop.permute.xlu0 %1088
        %v1092 = vunpack.c.l.b16 %v1078
        %v1093 = vunpack.c.l.b16 %v1079
        %v1094 = vpack.c.b16 %v1093, %v1092
        %v1097 = vsel %vm920, %v1089, 0
        %1099 = vmatprep.subr.bf16.mxu0 0
        %1100 = vmatpush1.bf16.msra.mxu0 %v1094
        %1101 = vmatprep.subr.bf16.mxu0 0
        %1102 = vmatpush1.bf16.msra.mxu0 0
        %1103 = vmatprep.subr.bf16.mxu0 0
        %1104 = vmatpush1.bf16.msra.mxu0 0
        %1105 = vmatprep.subr.bf16.mxu0 0
        %1106 = vmatpush1.bf16.msra.mxu0 0
        %1107 = vmatprep.subr.bf16.mxu0 0
        %1108 = vmatpush1.bf16.msra.mxu0 0
        %1109 = vmatprep.subr.bf16.mxu0 0
        %1110 = vmatpush1.bf16.msra.mxu0 0
        %1111 = vmatprep.subr.bf16.mxu0 0
        %1112 = vmatpush1.bf16.msra.mxu0 0
        %1113 = vmatprep.subr.bf16.mxu0 0
        %1114 = vmatpush1.bf16.msra.mxu0 0
        %1115 = vmatprep.subr.bf16.mxu0 0
        %1116 = vmatpush1.bf16.msra.mxu0 0
        %1117 = vmatprep.subr.bf16.mxu0 0
        %1118 = vmatpush1.bf16.msra.mxu0 0
        %1119 = vmatprep.subr.bf16.mxu0 0
        %1120 = vmatpush1.bf16.msra.mxu0 0
        %1121 = vmatprep.subr.bf16.mxu0 0
        %1122 = vmatpush1.bf16.msra.mxu0 0
        %1123 = vmatprep.subr.bf16.mxu0 0
        %1124 = vmatpush1.bf16.msra.mxu0 0
        %1125 = vmatprep.subr.bf16.mxu0 0
        %1126 = vmatpush1.bf16.msra.mxu0 0
        %1127 = vmatprep.subr.bf16.mxu0 0
        %1128 = vmatpush1.bf16.msra.mxu0 0
        %1129 = vmatprep.subr.bf16.mxu0 0
        %1130 = vmatpush1.bf16.msra.mxu0 0
        %1131 = vmatprep.mubr.bf16.mxu0 0
        %1132 = vmatmul.mubr.bf16.gmra.mrb[0].mxu0 %v1097
        %v1133 = vpop.f32.mrb[0].mxu0
        %v1134 = vadd.f32 %v1085, %v1133
        %v1135 = vpop.f32.mrb[0].mxu0
        %v1136 = vpop.f32.mrb[0].mxu0
        %v1137 = vadd.f32 %v1085, %v1136
        %v1138 = vpop.f32.mrb[0].mxu0
        %1139 = vdwg.mxu0
        %v1140 = vld [vmem:[#allocation15] sm:$0xf]
        %v1141 = vld [vmem:[#allocation15 + $0x4] sm:$0xf]
        %v1142 = vld [vmem:[#allocation15 + $0x8] sm:$0xf]
        %v1143 = vld [vmem:[#allocation15 + $0xc] sm:$0xf]
        %v1144 = vld [vmem:[#allocation15 + $0x10] sm:$0xf]
        %v1145 = vld [vmem:[#allocation15 + $0x14] sm:$0xf]
        %v1146 = vld [vmem:[#allocation15 + $0x18] sm:$0xf]
        %v1147 = vld [vmem:[#allocation15 + $0x1c] sm:$0xf]
        %v1148 = vld [vmem:[#allocation15 + $0x20] sm:$0xf]
        %v1149 = vld [vmem:[#allocation15 + $0x24] sm:$0xf]
        %v1150 = vld [vmem:[#allocation15 + $0x28] sm:$0xf]
        %v1151 = vld [vmem:[#allocation15 + $0x2c] sm:$0xf]
        %v1152 = vld [vmem:[#allocation15 + $0x30] sm:$0xf]
        %v1153 = vld [vmem:[#allocation15 + $0x34] sm:$0xf]
        %v1154 = vld [vmem:[#allocation15 + $0x38] sm:$0xf]
        %v1155 = vld [vmem:[#allocation15 + $0x3c] sm:$0xf]
        %v1156 = vunpack.c.l.bf16 %v1140
        %v1157 = vunpack.c.l.bf16 %v1141
        %v1158 = vunpack.c.l.bf16 %v1142
        %v1159 = vunpack.c.l.bf16 %v1143
        %v1160 = vunpack.c.l.bf16 %v1144
        %v1161 = vunpack.c.l.bf16 %v1145
        %v1162 = vunpack.c.l.bf16 %v1146
        %v1163 = vunpack.c.l.bf16 %v1147
        %v1164 = vunpack.c.l.bf16 %v1148
        %v1165 = vunpack.c.l.bf16 %v1149
        %v1166 = vunpack.c.l.bf16 %v1150
        %v1167 = vunpack.c.l.bf16 %v1151
        %v1168 = vunpack.c.l.bf16 %v1152
        %v1169 = vunpack.c.l.bf16 %v1153
        %v1170 = vunpack.c.l.bf16 %v1154
        %v1171 = vunpack.c.l.bf16 %v1155
        %v1174 = vcombine.high %v1134, %v1134
        %v1176 = vunpack.c.l.s4 1966171168
        %v1177 = vunpack.c.0.s8 %v1176
        %v1178 = vlaneseq
        %v1179 = vshrl.u32 %v1178, 7
        %v1180 = vsub.s32 %v1177, %v1179
        %v1181 = vrot.slane %v1134, %v1180
        %v1183 = vunpack.c.l.s4 1966171168
        %v1184 = vunpack.c.0.s8 %v1183
        %v1185 = vlaneseq
        %v1186 = vshrl.u32 %v1185, 7
        %v1187 = vsub.s32 %v1184, %v1186
        %v1188 = vrot.slane %v1174, %v1187
        %v1189 = vcombine.high %v1181, %v1181
        %v1190 = vcombine.high %v1188, %v1188
        %v1192 = vunpack.c.l.s4 1966171168
        %v1193 = vunpack.c.0.s8 %v1192
        %v1194 = vlaneseq
        %v1195 = vshrl.u32 %v1194, 7
        %v1196 = vsub.s32 %v1193, %v1195
        %v1197 = vrot.slane %v1181, %v1196
        %v1199 = vunpack.c.l.s4 1966171168
        %v1200 = vunpack.c.0.s8 %v1199
        %v1201 = vlaneseq
        %v1202 = vshrl.u32 %v1201, 7
        %v1203 = vsub.s32 %v1200, %v1202
        %v1204 = vrot.slane %v1188, %v1203
        %v1206 = vunpack.c.l.s4 1966171168
        %v1207 = vunpack.c.0.s8 %v1206
        %v1208 = vlaneseq
        %v1209 = vshrl.u32 %v1208, 7
        %v1210 = vsub.s32 %v1207, %v1209
        %v1211 = vrot.slane %v1189, %v1210
        %v1213 = vunpack.c.l.s4 1966171168
        %v1214 = vunpack.c.0.s8 %v1213
        %v1215 = vlaneseq
        %v1216 = vshrl.u32 %v1215, 7
        %v1217 = vsub.s32 %v1214, %v1216
        %v1218 = vrot.slane %v1190, %v1217
        %v1219 = vcombine.high %v1197, %v1197
        %v1220 = vcombine.high %v1204, %v1204
        %v1221 = vcombine.high %v1211, %v1211
        %v1222 = vcombine.high %v1218, %v1218
        %v1223 = vcombine.high %v1137, %v1137
        %v1225 = vunpack.c.l.s4 1966171168
        %v1226 = vunpack.c.0.s8 %v1225
        %v1227 = vlaneseq
        %v1228 = vshrl.u32 %v1227, 7
        %v1229 = vsub.s32 %v1226, %v1228
        %v1230 = vrot.slane %v1137, %v1229
        %v1232 = vunpack.c.l.s4 1966171168
        %v1233 = vunpack.c.0.s8 %v1232
        %v1234 = vlaneseq
        %v1235 = vshrl.u32 %v1234, 7
        %v1236 = vsub.s32 %v1233, %v1235
        %v1237 = vrot.slane %v1223, %v1236
        %v1238 = vcombine.high %v1230, %v1230
        %v1239 = vcombine.high %v1237, %v1237
        %v1241 = vunpack.c.l.s4 1966171168
        %v1242 = vunpack.c.0.s8 %v1241
        %v1243 = vlaneseq
        %v1244 = vshrl.u32 %v1243, 7
        %v1245 = vsub.s32 %v1242, %v1244
        %v1246 = vrot.slane %v1230, %v1245
        %v1248 = vunpack.c.l.s4 1966171168
        %v1249 = vunpack.c.0.s8 %v1248
        %v1250 = vlaneseq
        %v1251 = vshrl.u32 %v1250, 7
        %v1252 = vsub.s32 %v1249, %v1251
        %v1253 = vrot.slane %v1237, %v1252
        %v1255 = vunpack.c.l.s4 1966171168
        %v1256 = vunpack.c.0.s8 %v1255
        %v1257 = vlaneseq
        %v1258 = vshrl.u32 %v1257, 7
        %v1259 = vsub.s32 %v1256, %v1258
        %v1260 = vrot.slane %v1238, %v1259
        %v1262 = vunpack.c.l.s4 1966171168
        %v1263 = vunpack.c.0.s8 %v1262
        %v1264 = vlaneseq
        %v1265 = vshrl.u32 %v1264, 7
        %v1266 = vsub.s32 %v1263, %v1265
        %v1267 = vrot.slane %v1239, %v1266
        %v1268 = vcombine.high %v1246, %v1246
        %v1269 = vcombine.high %v1253, %v1253
        %v1270 = vcombine.high %v1260, %v1260
        %v1271 = vcombine.high %v1267, %v1267
        %v1272 = vlaneseq
        %v1273 = vshrl.u32 %v1272, 7
        %v1274 = vsub.s32 0, %v1273
        %v1275 = vrot.slane %v1197, %v1274
        %v1276 = vlaneseq
        %v1277 = vshrl.u32 %v1276, 7
        %v1278 = vsub.s32 0, %v1277
        %v1279 = vrot.slane %v1211, %v1278
        %v1280 = vlaneseq
        %v1281 = vshrl.u32 %v1280, 7
        %v1282 = vsub.s32 0, %v1281
        %v1283 = vrot.slane %v1219, %v1282
        %v1284 = vlaneseq
        %v1285 = vshrl.u32 %v1284, 7
        %v1286 = vsub.s32 0, %v1285
        %v1287 = vrot.slane %v1221, %v1286
        %v1288 = vlaneseq
        %v1289 = vshrl.u32 %v1288, 7
        %v1290 = vsub.s32 0, %v1289
        %v1291 = vrot.slane %v1204, %v1290
        %v1292 = vlaneseq
        %v1293 = vshrl.u32 %v1292, 7
        %v1294 = vsub.s32 0, %v1293
        %v1295 = vrot.slane %v1218, %v1294
        %v1296 = vlaneseq
        %v1297 = vshrl.u32 %v1296, 7
        %v1298 = vsub.s32 0, %v1297
        %v1299 = vrot.slane %v1220, %v1298
        %v1300 = vlaneseq
        %v1301 = vshrl.u32 %v1300, 7
        %v1302 = vsub.s32 0, %v1301
        %v1303 = vrot.slane %v1222, %v1302
        %v1304 = vlaneseq
        %v1305 = vshrl.u32 %v1304, 7
        %v1306 = vsub.s32 0, %v1305
        %v1307 = vrot.slane %v1246, %v1306
        %v1308 = vlaneseq
        %v1309 = vshrl.u32 %v1308, 7
        %v1310 = vsub.s32 0, %v1309
        %v1311 = vrot.slane %v1260, %v1310
        %v1312 = vlaneseq
        %v1313 = vshrl.u32 %v1312, 7
        %v1314 = vsub.s32 0, %v1313
        %v1315 = vrot.slane %v1268, %v1314
        %v1316 = vlaneseq
        %v1317 = vshrl.u32 %v1316, 7
        %v1318 = vsub.s32 0, %v1317
        %v1319 = vrot.slane %v1270, %v1318
        %v1320 = vlaneseq
        %v1321 = vshrl.u32 %v1320, 7
        %v1322 = vsub.s32 0, %v1321
        %v1323 = vrot.slane %v1253, %v1322
        %v1324 = vlaneseq
        %v1325 = vshrl.u32 %v1324, 7
        %v1326 = vsub.s32 0, %v1325
        %v1327 = vrot.slane %v1267, %v1326
        %v1328 = vlaneseq
        %v1329 = vshrl.u32 %v1328, 7
        %v1330 = vsub.s32 0, %v1329
        %v1331 = vrot.slane %v1269, %v1330
        %v1332 = vlaneseq
        %v1333 = vshrl.u32 %v1332, 7
        %v1334 = vsub.s32 0, %v1333
        %v1335 = vrot.slane %v1271, %v1334
        %v1352 = vadd.f32 %v1156, %v1275
        %v1353 = vadd.f32 %v1157, %v1279
        %v1354 = vadd.f32 %v1158, %v1283
        %v1355 = vadd.f32 %v1159, %v1287
        %v1356 = vadd.f32 %v1160, %v1291
        %v1357 = vadd.f32 %v1161, %v1295
        %v1358 = vadd.f32 %v1162, %v1299
        %v1359 = vadd.f32 %v1163, %v1303
        %v1360 = vadd.f32 %v1164, %v1307
        %v1361 = vadd.f32 %v1165, %v1311
        %v1362 = vadd.f32 %v1166, %v1315
        %v1363 = vadd.f32 %v1167, %v1319
        %v1364 = vadd.f32 %v1168, %v1323
        %v1365 = vadd.f32 %v1169, %v1327
        %v1366 = vadd.f32 %v1170, %v1331
        %v1367 = vadd.f32 %v1171, %v1335
        %v1368 = vmax.f32 %v1352, 0.0
        %v1369 = vmax.f32 %v1353, 0.0
        %v1370 = vmax.f32 %v1354, 0.0
        %v1371 = vmax.f32 %v1355, 0.0
        %v1372 = vmax.f32 %v1356, 0.0
        %v1373 = vmax.f32 %v1357, 0.0
        %v1374 = vmax.f32 %v1358, 0.0
        %v1375 = vmax.f32 %v1359, 0.0
        %v1376 = vmax.f32 %v1360, 0.0
        %v1377 = vmax.f32 %v1361, 0.0
        %v1378 = vmax.f32 %v1362, 0.0
        %v1379 = vmax.f32 %v1363, 0.0
        %v1380 = vmax.f32 %v1364, 0.0
        %v1381 = vmax.f32 %v1365, 0.0
        %v1382 = vmax.f32 %v1366, 0.0
        %v1383 = vmax.f32 %v1367, 0.0
        %v1384 = vld [vmem:[#allocation34] sm:$0x1]
        %v1386 = vlaneseq
        %v1387 = vshrl.u32 %v1386, 7
        %v1388 = vsub.s32 0, %v1387
        %v1389 = vrot.slane %v1384, %v1388
        %v1391 = vmul.f32 %v1368, %v1389
        %v1392 = vmul.f32 %v1369, %v1389
        %v1393 = vmul.f32 %v1370, %v1389
        %v1394 = vmul.f32 %v1371, %v1389
        %v1395 = vmul.f32 %v1372, %v1389
        %v1396 = vmul.f32 %v1373, %v1389
        %v1397 = vmul.f32 %v1374, %v1389
        %v1398 = vmul.f32 %v1375, %v1389
        %v1399 = vmul.f32 %v1376, %v1389
        %v1400 = vmul.f32 %v1377, %v1389
        %v1401 = vmul.f32 %v1378, %v1389
        %v1402 = vmul.f32 %v1379, %v1389
        %v1403 = vmul.f32 %v1380, %v1389
        %v1404 = vmul.f32 %v1381, %v1389
        %v1405 = vmul.f32 %v1382, %v1389
        %v1406 = vmul.f32 %v1383, %v1389
        %v1407 = vsel %vm920, %v1391, 0.0
        %1408 = vadd.xlane.f32.xlu0 %v1407
        %v1409 = vpop.xlane.xlu0 %1408
        %v1410 = vsel %vm920, %v1392, 0.0
        %1411 = vadd.xlane.f32.xlu0 %v1410
        %v1412 = vpop.xlane.xlu0 %1411
        %v1413 = vsel %vm920, %v1393, 0.0
        %1414 = vadd.xlane.f32.xlu0 %v1413
        %v1415 = vpop.xlane.xlu0 %1414
        %v1416 = vsel %vm920, %v1394, 0.0
        %1417 = vadd.xlane.f32.xlu0 %v1416
        %v1418 = vpop.xlane.xlu0 %1417
        %v1419 = vsel %vm920, %v1395, 0.0
        %1420 = vadd.xlane.f32.xlu0 %v1419
        %v1421 = vpop.xlane.xlu0 %1420
        %v1422 = vsel %vm920, %v1396, 0.0
        %1423 = vadd.xlane.f32.xlu0 %v1422
        %v1424 = vpop.xlane.xlu0 %1423
        %v1425 = vsel %vm920, %v1397, 0.0
        %1426 = vadd.xlane.f32.xlu0 %v1425
        %v1427 = vpop.xlane.xlu0 %1426
        %v1428 = vsel %vm920, %v1398, 0.0
        %1429 = vadd.xlane.f32.xlu0 %v1428
        %v1430 = vpop.xlane.xlu0 %1429
        %v1431 = vsel %vm920, %v1399, 0.0
        %1432 = vadd.xlane.f32.xlu0 %v1431
        %v1433 = vpop.xlane.xlu0 %1432
        %v1434 = vsel %vm920, %v1400, 0.0
        %1435 = vadd.xlane.f32.xlu0 %v1434
        %v1436 = vpop.xlane.xlu0 %1435
        %v1437 = vsel %vm920, %v1401, 0.0
        %1438 = vadd.xlane.f32.xlu0 %v1437
        %v1439 = vpop.xlane.xlu0 %1438
        %v1440 = vsel %vm920, %v1402, 0.0
        %1441 = vadd.xlane.f32.xlu0 %v1440
        %v1442 = vpop.xlane.xlu0 %1441
        %v1443 = vsel %vm920, %v1403, 0.0
        %1444 = vadd.xlane.f32.xlu0 %v1443
        %v1445 = vpop.xlane.xlu0 %1444
        %v1446 = vsel %vm920, %v1404, 0.0
        %1447 = vadd.xlane.f32.xlu0 %v1446
        %v1448 = vpop.xlane.xlu0 %1447
        %v1449 = vsel %vm920, %v1405, 0.0
        %1450 = vadd.xlane.f32.xlu0 %v1449
        %v1451 = vpop.xlane.xlu0 %1450
        %v1452 = vsel %vm920, %v1406, 0.0
        %1453 = vadd.xlane.f32.xlu0 %v1452
        %v1454 = vpop.xlane.xlu0 %1453
        %v1471 = vlaneseq
        %v1472 = vand.u32 %v1471, 127
        %v1473 = vlaneseq
        %v1474 = vshrl.u32 %v1473, 7
        %v1475 = vsub.s32 %v1472, %v1474
        %v1476 = vrot.slane %v1409, %v1475
        %v1477 = vlaneseq
        %v1478 = vshrl.u32 %v1477, 7
        %v1479 = vsub.s32 %v1472, %v1478
        %v1480 = vrot.slane %v1412, %v1479
        %v1481 = vlaneseq
        %v1482 = vshrl.u32 %v1481, 7
        %v1483 = vsub.s32 %v1472, %v1482
        %v1484 = vrot.slane %v1415, %v1483
        %v1485 = vlaneseq
        %v1486 = vshrl.u32 %v1485, 7
        %v1487 = vsub.s32 %v1472, %v1486
        %v1488 = vrot.slane %v1418, %v1487
        %v1489 = vlaneseq
        %v1490 = vshrl.u32 %v1489, 7
        %v1491 = vsub.s32 %v1472, %v1490
        %v1492 = vrot.slane %v1421, %v1491
        %v1493 = vlaneseq
        %v1494 = vshrl.u32 %v1493, 7
        %v1495 = vsub.s32 %v1472, %v1494
        %v1496 = vrot.slane %v1424, %v1495
        %v1497 = vlaneseq
        %v1498 = vshrl.u32 %v1497, 7
        %v1499 = vsub.s32 %v1472, %v1498
        %v1500 = vrot.slane %v1427, %v1499
        %v1501 = vlaneseq
        %v1502 = vshrl.u32 %v1501, 7
        %v1503 = vsub.s32 %v1472, %v1502
        %v1504 = vrot.slane %v1430, %v1503
        %v1505 = vlaneseq
        %v1506 = vshrl.u32 %v1505, 7
        %v1507 = vsub.s32 %v1472, %v1506
        %v1508 = vrot.slane %v1433, %v1507
        %v1509 = vlaneseq
        %v1510 = vshrl.u32 %v1509, 7
        %v1511 = vsub.s32 %v1472, %v1510
        %v1512 = vrot.slane %v1436, %v1511
        %v1513 = vlaneseq
        %v1514 = vshrl.u32 %v1513, 7
        %v1515 = vsub.s32 %v1472, %v1514
        %v1516 = vrot.slane %v1439, %v1515
        %v1517 = vlaneseq
        %v1518 = vshrl.u32 %v1517, 7
        %v1519 = vsub.s32 %v1472, %v1518
        %v1520 = vrot.slane %v1442, %v1519
        %v1521 = vlaneseq
        %v1522 = vshrl.u32 %v1521, 7
        %v1523 = vsub.s32 %v1472, %v1522
        %v1524 = vrot.slane %v1445, %v1523
        %v1525 = vlaneseq
        %v1526 = vshrl.u32 %v1525, 7
        %v1527 = vsub.s32 %v1472, %v1526
        %v1528 = vrot.slane %v1448, %v1527
        %v1529 = vlaneseq
        %v1530 = vshrl.u32 %v1529, 7
        %v1531 = vsub.s32 %v1472, %v1530
        %v1532 = vrot.slane %v1451, %v1531
        %v1533 = vlaneseq
        %v1534 = vshrl.u32 %v1533, 7
        %v1535 = vsub.s32 %v1472, %v1534
        %v1536 = vrot.slane %v1454, %v1535
        %vm1537 = vcmask 1041409
        %v1538 = vsel %vm1537, %v1480, %v1476
        %vm1539 = vcmask 1042434
        %v1540 = vsel %vm1539, %v1484, %v1538
        %vm1541 = vcmask 1043459
        %v1542 = vsel %vm1541, %v1488, %v1540
        %vm1543 = vcmask 1044484
        %v1544 = vsel %vm1543, %v1492, %v1542
        %vm1545 = vcmask 1045509
        %v1546 = vsel %vm1545, %v1496, %v1544
        %vm1547 = vcmask 1046534
        %v1548 = vsel %vm1547, %v1500, %v1546
        %vm1549 = vcmask 1047559
        %v1550 = vsel %vm1549, %v1504, %v1548
        %v1551 = vsel %vm1537, %v1512, %v1508
        %v1552 = vsel %vm1539, %v1516, %v1551
        %v1553 = vsel %vm1541, %v1520, %v1552
        %v1554 = vsel %vm1543, %v1524, %v1553
        %v1555 = vsel %vm1545, %v1528, %v1554
        %v1556 = vsel %vm1547, %v1532, %v1555
        %v1557 = vsel %vm1549, %v1536, %v1556
        %vm1560 = vcmask 64512
        %v1561 = vsel %vm1560, %v1550, -inf
        %1562 = vmax.xlane.f32.xlu0 %v1561
        %v1563 = vpop.xlane.xlu0 %1562
        %v1564 = vsel %vm1560, %v1557, -inf
        %1565 = vmax.xlane.f32.xlu0 %v1564
        %v1566 = vpop.xlane.xlu0 %1565
        %v1569 = vlaneseq
        %v1570 = vshrl.u32 %v1569, 7
        %v1571 = vsub.s32 0, %v1570
        %v1572 = vrot.slane %v1563, %v1571
        %v1573 = vlaneseq
        %v1574 = vshrl.u32 %v1573, 7
        %v1575 = vsub.s32 1, %v1574
        %v1576 = vrot.slane %v1563, %v1575
        %v1577 = vlaneseq
        %v1578 = vshrl.u32 %v1577, 7
        %v1579 = vsub.s32 2, %v1578
        %v1580 = vrot.slane %v1563, %v1579
        %v1581 = vlaneseq
        %v1582 = vshrl.u32 %v1581, 7
        %v1583 = vsub.s32 3, %v1582
        %v1584 = vrot.slane %v1563, %v1583
        %v1585 = vlaneseq
        %v1586 = vshrl.u32 %v1585, 7
        %v1587 = vsub.s32 4, %v1586
        %v1588 = vrot.slane %v1563, %v1587
        %v1589 = vlaneseq
        %v1590 = vshrl.u32 %v1589, 7
        %v1591 = vsub.s32 5, %v1590
        %v1592 = vrot.slane %v1563, %v1591
        %v1593 = vlaneseq
        %v1594 = vshrl.u32 %v1593, 7
        %v1595 = vsub.s32 6, %v1594
        %v1596 = vrot.slane %v1563, %v1595
        %v1597 = vlaneseq
        %v1598 = vshrl.u32 %v1597, 7
        %v1599 = vsub.s32 7, %v1598
        %v1600 = vrot.slane %v1563, %v1599
        %v1601 = vlaneseq
        %v1602 = vshrl.u32 %v1601, 7
        %v1603 = vsub.s32 0, %v1602
        %v1604 = vrot.slane %v1566, %v1603
        %v1605 = vlaneseq
        %v1606 = vshrl.u32 %v1605, 7
        %v1607 = vsub.s32 1, %v1606
        %v1608 = vrot.slane %v1566, %v1607
        %v1609 = vlaneseq
        %v1610 = vshrl.u32 %v1609, 7
        %v1611 = vsub.s32 2, %v1610
        %v1612 = vrot.slane %v1566, %v1611
        %v1613 = vlaneseq
        %v1614 = vshrl.u32 %v1613, 7
        %v1615 = vsub.s32 3, %v1614
        %v1616 = vrot.slane %v1566, %v1615
        %v1617 = vlaneseq
        %v1618 = vshrl.u32 %v1617, 7
        %v1619 = vsub.s32 4, %v1618
        %v1620 = vrot.slane %v1566, %v1619
        %v1621 = vlaneseq
        %v1622 = vshrl.u32 %v1621, 7
        %v1623 = vsub.s32 5, %v1622
        %v1624 = vrot.slane %v1566, %v1623
        %v1625 = vlaneseq
        %v1626 = vshrl.u32 %v1625, 7
        %v1627 = vsub.s32 6, %v1626
        %v1628 = vrot.slane %v1566, %v1627
        %v1629 = vlaneseq
        %v1630 = vshrl.u32 %v1629, 7
        %v1631 = vsub.s32 7, %v1630
        %v1632 = vrot.slane %v1566, %v1631
        %v1649 = vsub.f32 %v1409, %v1572
        %v1650 = vsub.f32 %v1412, %v1576
        %v1651 = vsub.f32 %v1415, %v1580
        %v1652 = vsub.f32 %v1418, %v1584
        %v1653 = vsub.f32 %v1421, %v1588
        %v1654 = vsub.f32 %v1424, %v1592
        %v1655 = vsub.f32 %v1427, %v1596
        %v1656 = vsub.f32 %v1430, %v1600
        %v1657 = vsub.f32 %v1433, %v1604
        %v1658 = vsub.f32 %v1436, %v1608
        %v1659 = vsub.f32 %v1439, %v1612
        %v1660 = vsub.f32 %v1442, %v1616
        %v1661 = vsub.f32 %v1445, %v1620
        %v1662 = vsub.f32 %v1448, %v1624
        %v1663 = vsub.f32 %v1451, %v1628
        %v1664 = vsub.f32 %v1454, %v1632
        %v1665 = vmul.f32 %v1649, 1.442695
        %v1666 = vpow.pop %v1665
        %v1667 = vmul.f32 %v1650, 1.442695
        %v1668 = vpow.pop %v1667
        %v1669 = vmul.f32 %v1651, 1.442695
        %v1670 = vpow.pop %v1669
        %v1671 = vmul.f32 %v1652, 1.442695
        %v1672 = vpow.pop %v1671
        %v1673 = vmul.f32 %v1653, 1.442695
        %v1674 = vpow.pop %v1673
        %v1675 = vmul.f32 %v1654, 1.442695
        %v1676 = vpow.pop %v1675
        %v1677 = vmul.f32 %v1655, 1.442695
        %v1678 = vpow.pop %v1677
        %v1679 = vmul.f32 %v1656, 1.442695
        %v1680 = vpow.pop %v1679
        %v1681 = vmul.f32 %v1657, 1.442695
        %v1682 = vpow.pop %v1681
        %v1683 = vmul.f32 %v1658, 1.442695
        %v1684 = vpow.pop %v1683
        %v1685 = vmul.f32 %v1659, 1.442695
        %v1686 = vpow.pop %v1685
        %v1687 = vmul.f32 %v1660, 1.442695
        %v1688 = vpow.pop %v1687
        %v1689 = vmul.f32 %v1661, 1.442695
        %v1690 = vpow.pop %v1689
        %v1691 = vmul.f32 %v1662, 1.442695
        %v1692 = vpow.pop %v1691
        %v1693 = vmul.f32 %v1663, 1.442695
        %v1694 = vpow.pop %v1693
        %v1695 = vmul.f32 %v1664, 1.442695
        %v1696 = vpow.pop %v1695
        %1713 = vset.pattern.permute.xlu0 0
        %1714 = vperm.xlu0 %1713, %v1666
        %v1715 = vpop.permute.xlu0 %1714
        %1716 = vset.pattern.permute.xlu0 0
        %1717 = vperm.xlu0 %1716, %v1668
        %v1718 = vpop.permute.xlu0 %1717
        %1719 = vset.pattern.permute.xlu0 0
        %1720 = vperm.xlu0 %1719, %v1670
        %v1721 = vpop.permute.xlu0 %1720
        %1722 = vset.pattern.permute.xlu0 0
        %1723 = vperm.xlu0 %1722, %v1672
        %v1724 = vpop.permute.xlu0 %1723
        %1725 = vset.pattern.permute.xlu0 0
        %1726 = vperm.xlu0 %1725, %v1674
        %v1727 = vpop.permute.xlu0 %1726
        %1728 = vset.pattern.permute.xlu0 0
        %1729 = vperm.xlu0 %1728, %v1676
        %v1730 = vpop.permute.xlu0 %1729
        %1731 = vset.pattern.permute.xlu0 0
        %1732 = vperm.xlu0 %1731, %v1678
        %v1733 = vpop.permute.xlu0 %1732
        %1734 = vset.pattern.permute.xlu0 0
        %1735 = vperm.xlu0 %1734, %v1680
        %v1736 = vpop.permute.xlu0 %1735
        %1737 = vset.pattern.permute.xlu0 0
        %1738 = vperm.xlu0 %1737, %v1682
        %v1739 = vpop.permute.xlu0 %1738
        %1740 = vset.pattern.permute.xlu0 0
        %1741 = vperm.xlu0 %1740, %v1684
        %v1742 = vpop.permute.xlu0 %1741
        %1743 = vset.pattern.permute.xlu0 0
        %1744 = vperm.xlu0 %1743, %v1686
        %v1745 = vpop.permute.xlu0 %1744
        %1746 = vset.pattern.permute.xlu0 0
        %1747 = vperm.xlu0 %1746, %v1688
        %v1748 = vpop.permute.xlu0 %1747
        %1749 = vset.pattern.permute.xlu0 0
        %1750 = vperm.xlu0 %1749, %v1690
        %v1751 = vpop.permute.xlu0 %1750
        %1752 = vset.pattern.permute.xlu0 0
        %1753 = vperm.xlu0 %1752, %v1692
        %v1754 = vpop.permute.xlu0 %1753
        %1755 = vset.pattern.permute.xlu0 0
        %1756 = vperm.xlu0 %1755, %v1694
        %v1757 = vpop.permute.xlu0 %1756
        %1758 = vset.pattern.permute.xlu0 0
        %1759 = vperm.xlu0 %1758, %v1696
        %v1760 = vpop.permute.xlu0 %1759
        %v1761 = vlaneseq
        %v1762 = vshrl.u32 %v1761, 7
        %v1763 = vsub.s32 %v1472, %v1762
        %v1764 = vrot.slane %v1715, %v1763
        %v1765 = vlaneseq
        %v1766 = vshrl.u32 %v1765, 7
        %v1767 = vsub.s32 %v1472, %v1766
        %v1768 = vrot.slane %v1718, %v1767
        %v1769 = vlaneseq
        %v1770 = vshrl.u32 %v1769, 7
        %v1771 = vsub.s32 %v1472, %v1770
        %v1772 = vrot.slane %v1721, %v1771
        %v1773 = vlaneseq
        %v1774 = vshrl.u32 %v1773, 7
        %v1775 = vsub.s32 %v1472, %v1774
        %v1776 = vrot.slane %v1724, %v1775
        %v1777 = vlaneseq
        %v1778 = vshrl.u32 %v1777, 7
        %v1779 = vsub.s32 %v1472, %v1778
        %v1780 = vrot.slane %v1727, %v1779
        %v1781 = vlaneseq
        %v1782 = vshrl.u32 %v1781, 7
        %v1783 = vsub.s32 %v1472, %v1782
        %v1784 = vrot.slane %v1730, %v1783
        %v1785 = vlaneseq
        %v1786 = vshrl.u32 %v1785, 7
        %v1787 = vsub.s32 %v1472, %v1786
        %v1788 = vrot.slane %v1733, %v1787
        %v1789 = vlaneseq
        %v1790 = vshrl.u32 %v1789, 7
        %v1791 = vsub.s32 %v1472, %v1790
        %v1792 = vrot.slane %v1736, %v1791
        %v1793 = vlaneseq
        %v1794 = vshrl.u32 %v1793, 7
        %v1795 = vsub.s32 %v1472, %v1794
        %v1796 = vrot.slane %v1739, %v1795
        %v1797 = vlaneseq
        %v1798 = vshrl.u32 %v1797, 7
        %v1799 = vsub.s32 %v1472, %v1798
        %v1800 = vrot.slane %v1742, %v1799
        %v1801 = vlaneseq
        %v1802 = vshrl.u32 %v1801, 7
        %v1803 = vsub.s32 %v1472, %v1802
        %v1804 = vrot.slane %v1745, %v1803
        %v1805 = vlaneseq
        %v1806 = vshrl.u32 %v1805, 7
        %v1807 = vsub.s32 %v1472, %v1806
        %v1808 = vrot.slane %v1748, %v1807
        %v1809 = vlaneseq
        %v1810 = vshrl.u32 %v1809, 7
        %v1811 = vsub.s32 %v1472, %v1810
        %v1812 = vrot.slane %v1751, %v1811
        %v1813 = vlaneseq
        %v1814 = vshrl.u32 %v1813, 7
        %v1815 = vsub.s32 %v1472, %v1814
        %v1816 = vrot.slane %v1754, %v1815
        %v1817 = vlaneseq
        %v1818 = vshrl.u32 %v1817, 7
        %v1819 = vsub.s32 %v1472, %v1818
        %v1820 = vrot.slane %v1757, %v1819
        %v1821 = vlaneseq
        %v1822 = vshrl.u32 %v1821, 7
        %v1823 = vsub.s32 %v1472, %v1822
        %v1824 = vrot.slane %v1760, %v1823
        %v1825 = vsel %vm1537, %v1768, %v1764
        %v1826 = vsel %vm1539, %v1772, %v1825
        %v1827 = vsel %vm1541, %v1776, %v1826
        %v1828 = vsel %vm1543, %v1780, %v1827
        %v1829 = vsel %vm1545, %v1784, %v1828
        %v1830 = vsel %vm1547, %v1788, %v1829
        %v1831 = vsel %vm1549, %v1792, %v1830
        %v1832 = vsel %vm1537, %v1800, %v1796
        %v1833 = vsel %vm1539, %v1804, %v1832
        %v1834 = vsel %vm1541, %v1808, %v1833
        %v1835 = vsel %vm1543, %v1812, %v1834
        %v1836 = vsel %vm1545, %v1816, %v1835
        %v1837 = vsel %vm1547, %v1820, %v1836
        %v1838 = vsel %vm1549, %v1824, %v1837
        %v1841 = vsel %vm1560, %v1831, 0.0
        %1842 = vadd.xlane.f32.xlu0 %v1841
        %v1843 = vpop.xlane.xlu0 %1842
        %v1844 = vsel %vm1560, %v1838, 0.0
        %1845 = vadd.xlane.f32.xlu0 %v1844
        %v1846 = vpop.xlane.xlu0 %1845
        %v1847 = vrcp.pop %v1843
        %v1848 = vrcp.pop %v1846
        %v1851 = vlaneseq
        %v1852 = vshrl.u32 %v1851, 7
        %v1853 = vsub.s32 0, %v1852
        %v1854 = vrot.slane %v1847, %v1853
        %v1855 = vlaneseq
        %v1856 = vshrl.u32 %v1855, 7
        %v1857 = vsub.s32 1, %v1856
        %v1858 = vrot.slane %v1847, %v1857
        %v1859 = vlaneseq
        %v1860 = vshrl.u32 %v1859, 7
        %v1861 = vsub.s32 2, %v1860
        %v1862 = vrot.slane %v1847, %v1861
        %v1863 = vlaneseq
        %v1864 = vshrl.u32 %v1863, 7
        %v1865 = vsub.s32 3, %v1864
        %v1866 = vrot.slane %v1847, %v1865
        %v1867 = vlaneseq
        %v1868 = vshrl.u32 %v1867, 7
        %v1869 = vsub.s32 4, %v1868
        %v1870 = vrot.slane %v1847, %v1869
        %v1871 = vlaneseq
        %v1872 = vshrl.u32 %v1871, 7
        %v1873 = vsub.s32 5, %v1872
        %v1874 = vrot.slane %v1847, %v1873
        %v1875 = vlaneseq
        %v1876 = vshrl.u32 %v1875, 7
        %v1877 = vsub.s32 6, %v1876
        %v1878 = vrot.slane %v1847, %v1877
        %v1879 = vlaneseq
        %v1880 = vshrl.u32 %v1879, 7
        %v1881 = vsub.s32 7, %v1880
        %v1882 = vrot.slane %v1847, %v1881
        %v1883 = vlaneseq
        %v1884 = vshrl.u32 %v1883, 7
        %v1885 = vsub.s32 0, %v1884
        %v1886 = vrot.slane %v1848, %v1885
        %v1887 = vlaneseq
        %v1888 = vshrl.u32 %v1887, 7
        %v1889 = vsub.s32 1, %v1888
        %v1890 = vrot.slane %v1848, %v1889
        %v1891 = vlaneseq
        %v1892 = vshrl.u32 %v1891, 7
        %v1893 = vsub.s32 2, %v1892
        %v1894 = vrot.slane %v1848, %v1893
        %v1895 = vlaneseq
        %v1896 = vshrl.u32 %v1895, 7
        %v1897 = vsub.s32 3, %v1896
        %v1898 = vrot.slane %v1848, %v1897
        %v1899 = vlaneseq
        %v1900 = vshrl.u32 %v1899, 7
        %v1901 = vsub.s32 4, %v1900
        %v1902 = vrot.slane %v1848, %v1901
        %v1903 = vlaneseq
        %v1904 = vshrl.u32 %v1903, 7
        %v1905 = vsub.s32 5, %v1904
        %v1906 = vrot.slane %v1848, %v1905
        %v1907 = vlaneseq
        %v1908 = vshrl.u32 %v1907, 7
        %v1909 = vsub.s32 6, %v1908
        %v1910 = vrot.slane %v1848, %v1909
        %v1911 = vlaneseq
        %v1912 = vshrl.u32 %v1911, 7
        %v1913 = vsub.s32 7, %v1912
        %v1914 = vrot.slane %v1848, %v1913
        %v1931 = vmul.f32 %v1666, %v1854
        %v1932 = vmul.f32 %v1668, %v1858
        %v1933 = vmul.f32 %v1670, %v1862
        %v1934 = vmul.f32 %v1672, %v1866
        %v1935 = vmul.f32 %v1674, %v1870
        %v1936 = vmul.f32 %v1676, %v1874
        %v1937 = vmul.f32 %v1678, %v1878
        %v1938 = vmul.f32 %v1680, %v1882
        %v1939 = vmul.f32 %v1682, %v1886
        %v1940 = vmul.f32 %v1684, %v1890
        %v1941 = vmul.f32 %v1686, %v1894
        %v1942 = vmul.f32 %v1688, %v1898
        %v1943 = vmul.f32 %v1690, %v1902
        %v1944 = vmul.f32 %v1692, %v1906
        %v1945 = vmul.f32 %v1694, %v1910
        %v1946 = vmul.f32 %v1696, %v1914
        %v1947 = vld [vmem:[#allocation12] sm:$0xf]
        %v1948 = vld [vmem:[#allocation12 + $0x4] sm:$0xf]
        %v1949 = vld [vmem:[#allocation12 + $0x8] sm:$0xf]
        %v1950 = vld [vmem:[#allocation12 + $0xc] sm:$0xf]
        %v1951 = vld [vmem:[#allocation12 + $0x10] sm:$0xf]
        %v1952 = vld [vmem:[#allocation12 + $0x14] sm:$0xf]
        %v1953 = vld [vmem:[#allocation12 + $0x18] sm:$0xf]
        %v1954 = vld [vmem:[#allocation12 + $0x1c] sm:$0xf]
        %v1955 = vld [vmem:[#allocation12 + $0x20] sm:$0xf]
        %v1956 = vld [vmem:[#allocation12 + $0x24] sm:$0xf]
        %v1957 = vld [vmem:[#allocation12 + $0x28] sm:$0xf]
        %v1958 = vld [vmem:[#allocation12 + $0x2c] sm:$0xf]
        %v1959 = vld [vmem:[#allocation12 + $0x30] sm:$0xf]
        %v1960 = vld [vmem:[#allocation12 + $0x34] sm:$0xf]
        %v1961 = vld [vmem:[#allocation12 + $0x38] sm:$0xf]
        %v1962 = vld [vmem:[#allocation12 + $0x3c] sm:$0xf]
        %v1963 = vunpack.c.l.bf16 %v1947
        %v1964 = vunpack.c.l.bf16 %v1948
        %v1965 = vunpack.c.l.bf16 %v1949
        %v1966 = vunpack.c.l.bf16 %v1950
        %v1967 = vunpack.c.l.bf16 %v1951
        %v1968 = vunpack.c.l.bf16 %v1952
        %v1969 = vunpack.c.l.bf16 %v1953
        %v1970 = vunpack.c.l.bf16 %v1954
        %v1971 = vunpack.c.l.bf16 %v1955
        %v1972 = vunpack.c.l.bf16 %v1956
        %v1973 = vunpack.c.l.bf16 %v1957
        %v1974 = vunpack.c.l.bf16 %v1958
        %v1975 = vunpack.c.l.bf16 %v1959
        %v1976 = vunpack.c.l.bf16 %v1960
        %v1977 = vunpack.c.l.bf16 %v1961
        %v1978 = vunpack.c.l.bf16 %v1962
        %1980 = vset.pattern.permute.xlu0 0
        %1981 = vperm.xlu0 %1980, %v1931
        %v1982 = vpop.permute.xlu0 %1981
        %1985 = vset.pattern.permute.xlu0 0
        %1986 = vperm.xlu0 %1985, %v1932
        %v1987 = vpop.permute.xlu0 %1986
        %1990 = vset.pattern.permute.xlu0 0
        %1991 = vperm.xlu0 %1990, %v1933
        %v1992 = vpop.permute.xlu0 %1991
        %1995 = vset.pattern.permute.xlu0 0
        %1996 = vperm.xlu0 %1995, %v1934
        %v1997 = vpop.permute.xlu0 %1996
        %2000 = vset.pattern.permute.xlu0 0
        %2001 = vperm.xlu0 %2000, %v1935
        %v2002 = vpop.permute.xlu0 %2001
        %2005 = vset.pattern.permute.xlu0 0
        %2006 = vperm.xlu0 %2005, %v1936
        %v2007 = vpop.permute.xlu0 %2006
        %2010 = vset.pattern.permute.xlu0 0
        %2011 = vperm.xlu0 %2010, %v1937
        %v2012 = vpop.permute.xlu0 %2011
        %2015 = vset.pattern.permute.xlu0 0
        %2016 = vperm.xlu0 %2015, %v1938
        %v2017 = vpop.permute.xlu0 %2016
        %2020 = vset.pattern.permute.xlu0 0
        %2021 = vperm.xlu0 %2020, %v1939
        %v2022 = vpop.permute.xlu0 %2021
        %2025 = vset.pattern.permute.xlu0 0
        %2026 = vperm.xlu0 %2025, %v1940
        %v2027 = vpop.permute.xlu0 %2026
        %2030 = vset.pattern.permute.xlu0 0
        %2031 = vperm.xlu0 %2030, %v1941
        %v2032 = vpop.permute.xlu0 %2031
        %2035 = vset.pattern.permute.xlu0 0
        %2036 = vperm.xlu0 %2035, %v1942
        %v2037 = vpop.permute.xlu0 %2036
        %2040 = vset.pattern.permute.xlu0 0
        %2041 = vperm.xlu0 %2040, %v1943
        %v2042 = vpop.permute.xlu0 %2041
        %2045 = vset.pattern.permute.xlu0 0
        %2046 = vperm.xlu0 %2045, %v1944
        %v2047 = vpop.permute.xlu0 %2046
        %2050 = vset.pattern.permute.xlu0 0
        %2051 = vperm.xlu0 %2050, %v1945
        %v2052 = vpop.permute.xlu0 %2051
        %2055 = vset.pattern.permute.xlu0 0
        %2056 = vperm.xlu0 %2055, %v1946
        %v2057 = vpop.permute.xlu0 %2056
        %v2059 = vmul.f32 %v1963, %v1982
        %v2060 = vmul.f32 %v1964, %v1987
        %v2061 = vmul.f32 %v1965, %v1992
        %v2062 = vmul.f32 %v1966, %v1997
        %v2063 = vmul.f32 %v1967, %v2002
        %v2064 = vmul.f32 %v1968, %v2007
        %v2065 = vmul.f32 %v1969, %v2012
        %v2066 = vmul.f32 %v1970, %v2017
        %v2067 = vmul.f32 %v1971, %v2022
        %v2068 = vmul.f32 %v1972, %v2027
        %v2069 = vmul.f32 %v1973, %v2032
        %v2070 = vmul.f32 %v1974, %v2037
        %v2071 = vmul.f32 %v1975, %v2042
        %v2072 = vmul.f32 %v1976, %v2047
        %v2073 = vmul.f32 %v1977, %v2052
        %v2074 = vmul.f32 %v1978, %v2057
        %vm2075 = vcmask 261120
        %v2076 = vsel %vm2075, %v2059, 0.0
        %v2077 = vrot.slane %v2076, 4
        %v2078 = vadd.f32 %v2076, %v2077
        %v2079 = vrot.slane %v2078, 2
        %v2080 = vadd.f32 %v2078, %v2079
        %v2081 = vrot.slane %v2080, 1
        %v2082 = vadd.f32 %v2080, %v2081
        %v2083 = vsel %vm2075, %v2060, 0.0
        %v2084 = vrot.slane %v2083, 4
        %v2085 = vadd.f32 %v2083, %v2084
        %v2086 = vrot.slane %v2085, 2
        %v2087 = vadd.f32 %v2085, %v2086
        %v2088 = vrot.slane %v2087, 1
        %v2089 = vadd.f32 %v2087, %v2088
        %v2090 = vsel %vm2075, %v2061, 0.0
        %v2091 = vrot.slane %v2090, 4
        %v2092 = vadd.f32 %v2090, %v2091
        %v2093 = vrot.slane %v2092, 2
        %v2094 = vadd.f32 %v2092, %v2093
        %v2095 = vrot.slane %v2094, 1
        %v2096 = vadd.f32 %v2094, %v2095
        %v2097 = vsel %vm2075, %v2062, 0.0
        %v2098 = vrot.slane %v2097, 4
        %v2099 = vadd.f32 %v2097, %v2098
        %v2100 = vrot.slane %v2099, 2
        %v2101 = vadd.f32 %v2099, %v2100
        %v2102 = vrot.slane %v2101, 1
        %v2103 = vadd.f32 %v2101, %v2102
        %v2104 = vsel %vm2075, %v2063, 0.0
        %v2105 = vrot.slane %v2104, 4
        %v2106 = vadd.f32 %v2104, %v2105
        %v2107 = vrot.slane %v2106, 2
        %v2108 = vadd.f32 %v2106, %v2107
        %v2109 = vrot.slane %v2108, 1
        %v2110 = vadd.f32 %v2108, %v2109
        %v2111 = vsel %vm2075, %v2064, 0.0
        %v2112 = vrot.slane %v2111, 4
        %v2113 = vadd.f32 %v2111, %v2112
        %v2114 = vrot.slane %v2113, 2
        %v2115 = vadd.f32 %v2113, %v2114
        %v2116 = vrot.slane %v2115, 1
        %v2117 = vadd.f32 %v2115, %v2116
        %v2118 = vsel %vm2075, %v2065, 0.0
        %v2119 = vrot.slane %v2118, 4
        %v2120 = vadd.f32 %v2118, %v2119
        %v2121 = vrot.slane %v2120, 2
        %v2122 = vadd.f32 %v2120, %v2121
        %v2123 = vrot.slane %v2122, 1
        %v2124 = vadd.f32 %v2122, %v2123
        %v2125 = vsel %vm2075, %v2066, 0.0
        %v2126 = vrot.slane %v2125, 4
        %v2127 = vadd.f32 %v2125, %v2126
        %v2128 = vrot.slane %v2127, 2
        %v2129 = vadd.f32 %v2127, %v2128
        %v2130 = vrot.slane %v2129, 1
        %v2131 = vadd.f32 %v2129, %v2130
        %v2132 = vsel %vm2075, %v2067, 0.0
        %v2133 = vrot.slane %v2132, 4
        %v2134 = vadd.f32 %v2132, %v2133
        %v2135 = vrot.slane %v2134, 2
        %v2136 = vadd.f32 %v2134, %v2135
        %v2137 = vrot.slane %v2136, 1
        %v2138 = vadd.f32 %v2136, %v2137
        %v2139 = vsel %vm2075, %v2068, 0.0
        %v2140 = vrot.slane %v2139, 4
        %v2141 = vadd.f32 %v2139, %v2140
        %v2142 = vrot.slane %v2141, 2
        %v2143 = vadd.f32 %v2141, %v2142
        %v2144 = vrot.slane %v2143, 1
        %v2145 = vadd.f32 %v2143, %v2144
        %v2146 = vsel %vm2075, %v2069, 0.0
        %v2147 = vrot.slane %v2146, 4
        %v2148 = vadd.f32 %v2146, %v2147
        %v2149 = vrot.slane %v2148, 2
        %v2150 = vadd.f32 %v2148, %v2149
        %v2151 = vrot.slane %v2150, 1
        %v2152 = vadd.f32 %v2150, %v2151
        %v2153 = vsel %vm2075, %v2070, 0.0
        %v2154 = vrot.slane %v2153, 4
        %v2155 = vadd.f32 %v2153, %v2154
        %v2156 = vrot.slane %v2155, 2
        %v2157 = vadd.f32 %v2155, %v2156
        %v2158 = vrot.slane %v2157, 1
        %v2159 = vadd.f32 %v2157, %v2158
        %v2160 = vsel %vm2075, %v2071, 0.0
        %v2161 = vrot.slane %v2160, 4
        %v2162 = vadd.f32 %v2160, %v2161
        %v2163 = vrot.slane %v2162, 2
        %v2164 = vadd.f32 %v2162, %v2163
        %v2165 = vrot.slane %v2164, 1
        %v2166 = vadd.f32 %v2164, %v2165
        %v2167 = vsel %vm2075, %v2072, 0.0
        %v2168 = vrot.slane %v2167, 4
        %v2169 = vadd.f32 %v2167, %v2168
        %v2170 = vrot.slane %v2169, 2
        %v2171 = vadd.f32 %v2169, %v2170
        %v2172 = vrot.slane %v2171, 1
        %v2173 = vadd.f32 %v2171, %v2172
        %v2174 = vsel %vm2075, %v2073, 0.0
        %v2175 = vrot.slane %v2174, 4
        %v2176 = vadd.f32 %v2174, %v2175
        %v2177 = vrot.slane %v2176, 2
        %v2178 = vadd.f32 %v2176, %v2177
        %v2179 = vrot.slane %v2178, 1
        %v2180 = vadd.f32 %v2178, %v2179
        %v2181 = vsel %vm2075, %v2074, 0.0
        %v2182 = vrot.slane %v2181, 4
        %v2183 = vadd.f32 %v2181, %v2182
        %v2184 = vrot.slane %v2183, 2
        %v2185 = vadd.f32 %v2183, %v2184
        %v2186 = vrot.slane %v2185, 1
        %v2187 = vadd.f32 %v2185, %v2186
        %v2188 = vpack.c.bf16 %v2082, %v2082
        %v2189 = vpack.c.bf16 %v2089, %v2089
        %v2190 = vpack.c.bf16 %v2096, %v2096
        %v2191 = vpack.c.bf16 %v2103, %v2103
        %v2192 = vpack.c.bf16 %v2110, %v2110
        %v2193 = vpack.c.bf16 %v2117, %v2117
        %v2194 = vpack.c.bf16 %v2124, %v2124
        %v2195 = vpack.c.bf16 %v2131, %v2131
        %v2196 = vpack.c.bf16 %v2138, %v2138
        %v2197 = vpack.c.bf16 %v2145, %v2145
        %v2198 = vpack.c.bf16 %v2152, %v2152
        %v2199 = vpack.c.bf16 %v2159, %v2159
        %v2200 = vpack.c.bf16 %v2166, %v2166
        %v2201 = vpack.c.bf16 %v2173, %v2173
        %v2202 = vpack.c.bf16 %v2180, %v2180
        %v2203 = vpack.c.bf16 %v2187, %v2187
        %v2204 = vld [vmem:[#allocation21] sm:$0xf]
        %v2205 = vld [vmem:[#allocation21 + $0x4] sm:$0xf]
        %v2206 = vld [vmem:[#allocation21 + $0x8] sm:$0xf]
        %v2207 = vld [vmem:[#allocation21 + $0xc] sm:$0xf]
        %v2208 = vld [vmem:[#allocation22] sm:$0xf]
        %v2209 = vld [vmem:[#allocation22 + $0x4] sm:$0xf]
        %v2212 = vunpack.c.l.b16 %v2208
        %v2213 = vunpack.c.l.b16 %v2209
        %v2214 = vpack.c.b16 %v2213, %v2212
        %2216 = vmatprep.subr.bf16.mxu0 0
        %2217 = vmatpush1.bf16.msra.mxu0 %v2214
        %2218 = vmatprep.subr.bf16.mxu0 0
        %2219 = vmatpush1.bf16.msra.mxu0 0
        %2220 = vmatprep.subr.bf16.mxu0 0
        %2221 = vmatpush1.bf16.msra.mxu0 0
        %2222 = vmatprep.subr.bf16.mxu0 0
        %2223 = vmatpush1.bf16.msra.mxu0 0
        %2224 = vmatprep.subr.bf16.mxu0 0
        %2225 = vmatpush1.bf16.msra.mxu0 0
        %2226 = vmatprep.subr.bf16.mxu0 0
        %2227 = vmatpush1.bf16.msra.mxu0 0
        %2228 = vmatprep.subr.bf16.mxu0 0
        %2229 = vmatpush1.bf16.msra.mxu0 0
        %2230 = vmatprep.subr.bf16.mxu0 0
        %2231 = vmatpush1.bf16.msra.mxu0 0
        %2232 = vmatprep.subr.bf16.mxu0 0
        %2233 = vmatpush1.bf16.msra.mxu0 0
        %2234 = vmatprep.subr.bf16.mxu0 0
        %2235 = vmatpush1.bf16.msra.mxu0 0
        %2236 = vmatprep.subr.bf16.mxu0 0
        %2237 = vmatpush1.bf16.msra.mxu0 0
        %2238 = vmatprep.subr.bf16.mxu0 0
        %2239 = vmatpush1.bf16.msra.mxu0 0
        %2240 = vmatprep.subr.bf16.mxu0 0
        %2241 = vmatpush1.bf16.msra.mxu0 0
        %2242 = vmatprep.subr.bf16.mxu0 0
        %2243 = vmatpush1.bf16.msra.mxu0 0
        %2244 = vmatprep.subr.bf16.mxu0 0
        %2245 = vmatpush1.bf16.msra.mxu0 0
        %2246 = vmatprep.subr.bf16.mxu0 0
        %2247 = vmatpush1.bf16.msra.mxu0 0
        %2248 = vmatprep.mubr.bf16.mxu0 0
        %2249 = vmatmul.mubr.bf16.gmra.mrb[0].mxu0 %v1097
        %v2250 = vpop.f32.mrb[0].mxu0
        %v2251 = vadd.f32 0.0, %v2250
        %v2252 = vpop.f32.mrb[0].mxu0
        %v2253 = vpop.f32.mrb[0].mxu0
        %v2254 = vadd.f32 0.0, %v2253
        %v2255 = vpop.f32.mrb[0].mxu0
        %2256 = vdwg.mxu0
        %v2273 = vunpack.c.l.b16 %v2188
        %v2274 = vunpack.c.l.b16 %v2189
        %v2275 = vunpack.c.l.b16 %v2190
        %v2276 = vunpack.c.l.b16 %v2191
        %v2277 = vunpack.c.l.b16 %v2192
        %v2278 = vunpack.c.l.b16 %v2193
        %v2279 = vunpack.c.l.b16 %v2194
        %v2280 = vunpack.c.l.b16 %v2195
        %v2281 = vunpack.c.l.b16 %v2196
        %v2282 = vunpack.c.l.b16 %v2197
        %v2283 = vunpack.c.l.b16 %v2198
        %v2284 = vunpack.c.l.b16 %v2199
        %v2285 = vunpack.c.l.b16 %v2200
        %v2286 = vunpack.c.l.b16 %v2201
        %v2287 = vunpack.c.l.b16 %v2202
        %v2288 = vunpack.c.l.b16 %v2203
        %v2289 = vsel %vm1537, %v2274, %v2273
        %v2290 = vsel %vm1539, %v2275, %v2289
        %v2291 = vsel %vm1541, %v2276, %v2290
        %v2292 = vsel %vm1543, %v2277, %v2291
        %v2293 = vsel %vm1545, %v2278, %v2292
        %v2294 = vsel %vm1547, %v2279, %v2293
        %v2295 = vsel %vm1549, %v2280, %v2294
        %v2296 = vsel %vm1537, %v2282, %v2281
        %v2297 = vsel %vm1539, %v2283, %v2296
        %v2298 = vsel %vm1541, %v2284, %v2297
        %v2299 = vsel %vm1543, %v2285, %v2298
        %v2300 = vsel %vm1545, %v2286, %v2299
        %v2301 = vsel %vm1547, %v2287, %v2300
        %v2302 = vsel %vm1549, %v2288, %v2301
        %v2303 = vpack.c.b16 %v2302, %v2295
        %v2308 = vunpack.c.l.b16 %v2204
        %v2309 = vunpack.c.l.b16 %v2205
        %v2310 = vunpack.c.l.b16 %v2206
        %v2311 = vunpack.c.l.b16 %v2207
        %v2312 = vpack.c.b16 %v2309, %v2308
        %v2313 = vpack.c.b16 %v2311, %v2310
        %v2317 = vsel %vm2075, %v2303, 0
        %2319 = vmatprep.subr.bf16.mxu0 0
        %2320 = vmatpush1.bf16.msra.mxu0 %v2312
        %2321 = vmatprep.subr.bf16.mxu0 0
        %2322 = vmatpush1.bf16.msra.mxu0 %v2313
        %2323 = vmatprep.subr.bf16.mxu0 0
        %2324 = vmatpush1.bf16.msra.mxu0 0
        %2325 = vmatprep.subr.bf16.mxu0 0
        %2326 = vmatpush1.bf16.msra.mxu0 0
        %2327 = vmatprep.subr.bf16.mxu0 0
        %2328 = vmatpush1.bf16.msra.mxu0 0
        %2329 = vmatprep.subr.bf16.mxu0 0
        %2330 = vmatpush1.bf16.msra.mxu0 0
        %2331 = vmatprep.subr.bf16.mxu0 0
        %2332 = vmatpush1.bf16.msra.mxu0 0
        %2333 = vmatprep.subr.bf16.mxu0 0
        %2334 = vmatpush1.bf16.msra.mxu0 0
        %2335 = vmatprep.subr.bf16.mxu0 0
        %2336 = vmatpush1.bf16.msra.mxu0 0
        %2337 = vmatprep.subr.bf16.mxu0 0
        %2338 = vmatpush1.bf16.msra.mxu0 0
        %2339 = vmatprep.subr.bf16.mxu0 0
        %2340 = vmatpush1.bf16.msra.mxu0 0
        %2341 = vmatprep.subr.bf16.mxu0 0
        %2342 = vmatpush1.bf16.msra.mxu0 0
        %2343 = vmatprep.subr.bf16.mxu0 0
        %2344 = vmatpush1.bf16.msra.mxu0 0
        %2345 = vmatprep.subr.bf16.mxu0 0
        %2346 = vmatpush1.bf16.msra.mxu0 0
        %2347 = vmatprep.subr.bf16.mxu0 0
        %2348 = vmatpush1.bf16.msra.mxu0 0
        %2349 = vmatprep.subr.bf16.mxu0 0
        %2350 = vmatpush1.bf16.msra.mxu0 0
        %2351 = vmatprep.mubr.bf16.mxu0 0
        %2352 = vmatmul.mubr.bf16.gmra.mrb[0].mxu0 %v2317
        %v2353 = vpop.f32.mrb[0].mxu0
        %v2354 = vadd.f32 %v2251, %v2353
        %v2355 = vpop.f32.mrb[0].mxu0
        %v2356 = vpop.f32.mrb[0].mxu0
        %v2357 = vadd.f32 %v2254, %v2356
        %v2358 = vpop.f32.mrb[0].mxu0
        %2359 = vdwg.mxu0
        %v2360 = vld [vmem:[#allocation24] sm:$0xf]
        %v2361 = vld [vmem:[#allocation24 + $0x4] sm:$0xf]
        %v2364 = vunpack.c.l.b16 %v2360
        %v2365 = vunpack.c.l.b16 %v2361
        %v2366 = vpack.c.b16 %v2365, %v2364
        %2368 = vmatprep.subr.bf16.mxu0 0
        %2369 = vmatpush1.bf16.msra.mxu0 %v2366
        %2370 = vmatprep.subr.bf16.mxu0 0
        %2371 = vmatpush1.bf16.msra.mxu0 0
        %2372 = vmatprep.subr.bf16.mxu0 0
        %2373 = vmatpush1.bf16.msra.mxu0 0
        %2374 = vmatprep.subr.bf16.mxu0 0
        %2375 = vmatpush1.bf16.msra.mxu0 0
        %2376 = vmatprep.subr.bf16.mxu0 0
        %2377 = vmatpush1.bf16.msra.mxu0 0
        %2378 = vmatprep.subr.bf16.mxu0 0
        %2379 = vmatpush1.bf16.msra.mxu0 0
        %2380 = vmatprep.subr.bf16.mxu0 0
        %2381 = vmatpush1.bf16.msra.mxu0 0
        %2382 = vmatprep.subr.bf16.mxu0 0
        %2383 = vmatpush1.bf16.msra.mxu0 0
        %2384 = vmatprep.subr.bf16.mxu0 0
        %2385 = vmatpush1.bf16.msra.mxu0 0
        %2386 = vmatprep.subr.bf16.mxu0 0
        %2387 = vmatpush1.bf16.msra.mxu0 0
        %2388 = vmatprep.subr.bf16.mxu0 0
        %2389 = vmatpush1.bf16.msra.mxu0 0
        %2390 = vmatprep.subr.bf16.mxu0 0
        %2391 = vmatpush1.bf16.msra.mxu0 0
        %2392 = vmatprep.subr.bf16.mxu0 0
        %2393 = vmatpush1.bf16.msra.mxu0 0
        %2394 = vmatprep.subr.bf16.mxu0 0
        %2395 = vmatpush1.bf16.msra.mxu0 0
        %2396 = vmatprep.subr.bf16.mxu0 0
        %2397 = vmatpush1.bf16.msra.mxu0 0
        %2398 = vmatprep.subr.bf16.mxu0 0
        %2399 = vmatpush1.bf16.msra.mxu0 0
        %2400 = vmatprep.mubr.bf16.mxu0 0
        %2401 = vmatmul.mubr.bf16.gmra.mrb[0].mxu0 %v972
        %v2402 = vpop.f32.mrb[0].mxu0
        %v2403 = vadd.f32 0.0, %v2402
        %v2404 = vpop.f32.mrb[0].mxu0
        %v2405 = vpop.f32.mrb[0].mxu0
        %v2406 = vadd.f32 0.0, %v2405
        %v2407 = vpop.f32.mrb[0].mxu0
        %2408 = vdwg.mxu0
        %v2409 = vadd.f32 %v2354, %v2403
        %v2410 = vadd.f32 %v2357, %v2406
        %v2411 = vld [vmem:[#allocation28] sm:$0x1]
        %v2413 = vlaneseq
        %v2414 = vshrl.u32 %v2413, 7
        %v2415 = vsub.s32 0, %v2414
        %v2416 = vrot.slane %v2411, %v2415
        %v2418 = vadd.f32 %v2409, %v2416
        %v2419 = vadd.f32 %v2410, %v2416
        %v2420 = vxor.u32 %v2418, 2147483648
        %v2421 = vxor.u32 %v2419, 2147483648
        %v2422 = vmul.f32 %v2420, 1.442695
        %v2423 = vpow.pop %v2422
        %v2424 = vmul.f32 %v2421, 1.442695
        %v2425 = vpow.pop %v2424
        %v2426 = vadd.f32 %v2423, 1.0
        %v2427 = vadd.f32 %v2425, 1.0
        %v2428 = vrcp.pop %v2426
        %v2429 = vmul.f32 1.0, %v2428
        %v2430 = vrcp.pop %v2427
        %v2431 = vmul.f32 1.0, %v2430
        %v2432 = vtanh.pop %v2418
        %v2433 = vtanh.pop %v2419
        %2436 = vrot.lane.b32.xlu0 %v900, 16
        %v2437 = vpop.permute.xlu0 %2436
        %2438 = vrot.lane.b32.xlu0 %v901, 16
        %v2439 = vpop.permute.xlu0 %2438
        %v2442 = vmul.f32 %v2429, %v2437
        %v2443 = vmul.f32 %v2431, %v2439
        %2446 = vrot.lane.b32.xlu0 %v2432, 96
        %v2447 = vpop.permute.xlu0 %2446
        %2448 = vrot.lane.b32.xlu0 %v2433, 96
        %v2449 = vpop.permute.xlu0 %2448
        %v2452 = vmul.f32 %v2429, %v2447
        %v2453 = vmul.f32 %v2431, %v2449
        %2456 = vrot.lane.b32.xlu0 %v2452, 16
        %v2457 = vpop.permute.xlu0 %2456
        %2458 = vrot.lane.b32.xlu0 %v2453, 16
        %v2459 = vpop.permute.xlu0 %2458
        %v2462 = vadd.f32 %v2442, %v2457
        %v2463 = vadd.f32 %v2443, %v2459
        %v2464 = vtanh.pop %v2462
        %v2465 = vtanh.pop %v2463
        %2468 = vrot.lane.b32.xlu0 %v2464, 32
        %v2469 = vpop.permute.xlu0 %2468
        %2470 = vrot.lane.b32.xlu0 %v2465, 32
        %v2471 = vpop.permute.xlu0 %2470
        %v2474 = vmul.f32 %v2429, %v2469
        %v2475 = vmul.f32 %v2431, %v2471
        %v2476 = vld [vmem:[#allocation25] sm:$0xf]
        %v2477 = vld [vmem:[#allocation25 + $0x4] sm:$0xf]
        %v2478 = vpack.c.bf16 %v903, %v902
        %v2479 = vld [vmem:[#allocation27] sm:$0xf]
        %v2480 = vld [vmem:[#allocation27 + $0x4] sm:$0xf]
        %v2483 = vunpack.c.l.b16 %v2479
        %v2484 = vunpack.c.l.b16 %v2480
        %v2485 = vpack.c.b16 %v2484, %v2483
        %v2488 = vsel %vm920, %v2478, 0
        %2490 = vmatprep.subr.bf16.mxu0 0
        %2491 = vmatpush1.bf16.msra.mxu0 %v2485
        %2492 = vmatprep.subr.bf16.mxu0 0
        %2493 = vmatpush1.bf16.msra.mxu0 0
        %2494 = vmatprep.subr.bf16.mxu0 0
        %2495 = vmatpush1.bf16.msra.mxu0 0
        %2496 = vmatprep.subr.bf16.mxu0 0
        %2497 = vmatpush1.bf16.msra.mxu0 0
        %2498 = vmatprep.subr.bf16.mxu0 0
        %2499 = vmatpush1.bf16.msra.mxu0 0
        %2500 = vmatprep.subr.bf16.mxu0 0
        %2501 = vmatpush1.bf16.msra.mxu0 0
        %2502 = vmatprep.subr.bf16.mxu0 0
        %2503 = vmatpush1.bf16.msra.mxu0 0
        %2504 = vmatprep.subr.bf16.mxu0 0
        %2505 = vmatpush1.bf16.msra.mxu0 0
        %2506 = vmatprep.subr.bf16.mxu0 0
        %2507 = vmatpush1.bf16.msra.mxu0 0
        %2508 = vmatprep.subr.bf16.mxu0 0
        %2509 = vmatpush1.bf16.msra.mxu0 0
        %2510 = vmatprep.subr.bf16.mxu0 0
        %2511 = vmatpush1.bf16.msra.mxu0 0
        %2512 = vmatprep.subr.bf16.mxu0 0
        %2513 = vmatpush1.bf16.msra.mxu0 0
        %2514 = vmatprep.subr.bf16.mxu0 0
        %2515 = vmatpush1.bf16.msra.mxu0 0
        %2516 = vmatprep.subr.bf16.mxu0 0
        %2517 = vmatpush1.bf16.msra.mxu0 0
        %2518 = vmatprep.subr.bf16.mxu0 0
        %2519 = vmatpush1.bf16.msra.mxu0 0
        %2520 = vmatprep.subr.bf16.mxu0 0
        %2521 = vmatpush1.bf16.msra.mxu0 0
        %2522 = vmatprep.mubr.bf16.mxu0 0
        %2523 = vmatmul.mubr.bf16.gmra.mrb[0].mxu0 %v2488
        %v2524 = vpop.f32.mrb[0].mxu0
        %v2525 = vadd.f32 0.0, %v2524
        %v2526 = vpop.f32.mrb[0].mxu0
        %v2527 = vpop.f32.mrb[0].mxu0
        %v2528 = vadd.f32 0.0, %v2527
        %v2529 = vpop.f32.mrb[0].mxu0
        %2530 = vdwg.mxu0
        %v2533 = vunpack.c.l.b16 %v2476
        %v2534 = vunpack.c.l.b16 %v2477
        %v2535 = vpack.c.b16 %v2534, %v2533
        %2537 = vmatprep.subr.bf16.mxu0 0
        %2538 = vmatpush1.bf16.msra.mxu0 %v2535
        %2539 = vmatprep.subr.bf16.mxu0 0
        %2540 = vmatpush1.bf16.msra.mxu0 0
        %2541 = vmatprep.subr.bf16.mxu0 0
        %2542 = vmatpush1.bf16.msra.mxu0 0
        %2543 = vmatprep.subr.bf16.mxu0 0
        %2544 = vmatpush1.bf16.msra.mxu0 0
        %2545 = vmatprep.subr.bf16.mxu0 0
        %2546 = vmatpush1.bf16.msra.mxu0 0
        %2547 = vmatprep.subr.bf16.mxu0 0
        %2548 = vmatpush1.bf16.msra.mxu0 0
        %2549 = vmatprep.subr.bf16.mxu0 0
        %2550 = vmatpush1.bf16.msra.mxu0 0
        %2551 = vmatprep.subr.bf16.mxu0 0
        %2552 = vmatpush1.bf16.msra.mxu0 0
        %2553 = vmatprep.subr.bf16.mxu0 0
        %2554 = vmatpush1.bf16.msra.mxu0 0
        %2555 = vmatprep.subr.bf16.mxu0 0
        %2556 = vmatpush1.bf16.msra.mxu0 0
        %2557 = vmatprep.subr.bf16.mxu0 0
        %2558 = vmatpush1.bf16.msra.mxu0 0
        %2559 = vmatprep.subr.bf16.mxu0 0
        %2560 = vmatpush1.bf16.msra.mxu0 0
        %2561 = vmatprep.subr.bf16.mxu0 0
        %2562 = vmatpush1.bf16.msra.mxu0 0
        %2563 = vmatprep.subr.bf16.mxu0 0
        %2564 = vmatpush1.bf16.msra.mxu0 0
        %2565 = vmatprep.subr.bf16.mxu0 0
        %2566 = vmatpush1.bf16.msra.mxu0 0
        %2567 = vmatprep.subr.bf16.mxu0 0
        %2568 = vmatpush1.bf16.msra.mxu0 0
        %2569 = vmatprep.mubr.bf16.mxu0 0
        %2570 = vmatmul.mubr.bf16.gmra.mrb[0].mxu0 %v1097
        %v2571 = vpop.f32.mrb[0].mxu0
        %v2572 = vadd.f32 %v2525, %v2571
        %v2573 = vpop.f32.mrb[0].mxu0
        %v2574 = vpop.f32.mrb[0].mxu0
        %v2575 = vadd.f32 %v2528, %v2574
        %v2576 = vpop.f32.mrb[0].mxu0
        %2577 = vdwg.mxu0
        %v2578 = vld [vmem:[#allocation30] sm:$0x1]
        %v2580 = vlaneseq
        %v2581 = vshrl.u32 %v2580, 7
        %v2582 = vsub.s32 0, %v2581
        %v2583 = vrot.slane %v2578, %v2582
        %v2585 = vadd.f32 %v2572, %v2583
        %v2586 = vadd.f32 %v2575, %v2583
        %v2587 = vxor.u32 %v2585, 2147483648
        %v2588 = vxor.u32 %v2586, 2147483648
        %v2589 = vmul.f32 %v2587, 1.442695
        %v2590 = vpow.pop %v2589
        %v2591 = vmul.f32 %v2588, 1.442695
        %v2592 = vpow.pop %v2591
        %v2593 = vadd.f32 %v2590, 1.0
        %v2594 = vadd.f32 %v2592, 1.0
        %v2595 = vrcp.pop %v2593
        %v2596 = vmul.f32 1.0, %v2595
        %v2597 = vrcp.pop %v2594
        %v2598 = vmul.f32 1.0, %v2597
        %v2599 = vtanh.pop %v2585
        %v2600 = vtanh.pop %v2586
        %2603 = vrot.lane.b32.xlu0 %v904, 16
        %v2604 = vpop.permute.xlu0 %2603
        %2605 = vrot.lane.b32.xlu0 %v905, 16
        %v2606 = vpop.permute.xlu0 %2605
        %v2609 = vmul.f32 %v2596, %v2604
        %v2610 = vmul.f32 %v2598, %v2606
        %2613 = vrot.lane.b32.xlu0 %v2599, 96
        %v2614 = vpop.permute.xlu0 %2613
        %2615 = vrot.lane.b32.xlu0 %v2600, 96
        %v2616 = vpop.permute.xlu0 %2615
        %v2619 = vmul.f32 %v2596, %v2614
        %v2620 = vmul.f32 %v2598, %v2616
        %2623 = vrot.lane.b32.xlu0 %v2619, 16
        %v2624 = vpop.permute.xlu0 %2623
        %2625 = vrot.lane.b32.xlu0 %v2620, 16
        %v2626 = vpop.permute.xlu0 %2625
        %v2629 = vadd.f32 %v2609, %v2624
        %v2630 = vadd.f32 %v2610, %v2626
        %v2631 = vtanh.pop %v2629
        %v2632 = vtanh.pop %v2630
        %2635 = vrot.lane.b32.xlu0 %v2631, 32
        %v2636 = vpop.permute.xlu0 %2635
        %2637 = vrot.lane.b32.xlu0 %v2632, 32
        %v2638 = vpop.permute.xlu0 %2637
        %v2641 = vmul.f32 %v2596, %v2636
        %v2642 = vmul.f32 %v2598, %v2638
        %v2643 = vpack.c.bf16 %v2642, %v2641
        %v2644 = vld [vmem:[#allocation36] sm:$0xf]
        %v2645 = vld [vmem:[#allocation36 + $0x4] sm:$0xf]
        %v2646 = vld [vmem:[#allocation37] sm:$0x1]
        %v2648 = vlaneseq
        %v2649 = vshrl.u32 %v2648, 7
        %v2650 = vsub.s32 0, %v2649
        %v2651 = vrot.slane %v2646, %v2650
        %2654 = vrot.lane.b32.xlu0 %v2643, 80
        %v2655 = vpop.permute.xlu0 %2654
        %v2658 = vunpack.c.l.b16 %v2644
        %v2659 = vunpack.c.l.b16 %v2645
        %v2660 = vpack.c.b16 %v2659, %v2658
        %v2663 = vsel %vm920, %v2655, 0
        %2665 = vmatprep.subr.bf16.mxu0 0
        %2666 = vmatpush1.bf16.msra.mxu0 %v2660
        %2667 = vmatprep.subr.bf16.mxu0 0
        %2668 = vmatpush1.bf16.msra.mxu0 0
        %2669 = vmatprep.subr.bf16.mxu0 0
        %2670 = vmatpush1.bf16.msra.mxu0 0
        %2671 = vmatprep.subr.bf16.mxu0 0
        %2672 = vmatpush1.bf16.msra.mxu0 0
        %2673 = vmatprep.subr.bf16.mxu0 0
        %2674 = vmatpush1.bf16.msra.mxu0 0
        %2675 = vmatprep.subr.bf16.mxu0 0
        %2676 = vmatpush1.bf16.msra.mxu0 0
        %2677 = vmatprep.subr.bf16.mxu0 0
        %2678 = vmatpush1.bf16.msra.mxu0 0
        %2679 = vmatprep.subr.bf16.mxu0 0
        %2680 = vmatpush1.bf16.msra.mxu0 0
        %2681 = vmatprep.subr.bf16.mxu0 0
        %2682 = vmatpush1.bf16.msra.mxu0 0
        %2683 = vmatprep.subr.bf16.mxu0 0
        %2684 = vmatpush1.bf16.msra.mxu0 0
        %2685 = vmatprep.subr.bf16.mxu0 0
        %2686 = vmatpush1.bf16.msra.mxu0 0
        %2687 = vmatprep.subr.bf16.mxu0 0
        %2688 = vmatpush1.bf16.msra.mxu0 0
        %2689 = vmatprep.subr.bf16.mxu0 0
        %2690 = vmatpush1.bf16.msra.mxu0 0
        %2691 = vmatprep.subr.bf16.mxu0 0
        %2692 = vmatpush1.bf16.msra.mxu0 0
        %2693 = vmatprep.subr.bf16.mxu0 0
        %2694 = vmatpush1.bf16.msra.mxu0 0
        %2695 = vmatprep.subr.bf16.mxu0 0
        %2696 = vmatpush1.bf16.msra.mxu0 0
        %2697 = vmatprep.mubr.bf16.mxu0 0
        %2698 = vmatmul.mubr.bf16.gmra.mrb[0].mxu0 %v2663
        %v2699 = vpop.f32.mrb[0].mxu0
        %v2700 = vadd.f32 %v2651, %v2699
        %v2701 = vpop.f32.mrb[0].mxu0
        %v2702 = vpop.f32.mrb[0].mxu0
        %v2703 = vadd.f32 %v2651, %v2702
        %v2704 = vpop.f32.mrb[0].mxu0
        %2705 = vdwg.mxu0
        %v2706 = vsub.f32 %v2700, %v906
        %v2707 = vsub.f32 %v2703, %v907
        %v2708 = vmul.f32 %v2706, %v2706
        %v2709 = vmul.f32 %v2707, %v2707
        %v2710 = vsel %vm920, %v2708, 0.0
        %2711 = vadd.xlane.f32.xlu0 %v2710
        %v2712 = vpop.xlane.xlu0 %2711
        %v2713 = vsel %vm920, %v2709, 0.0
        %2714 = vadd.xlane.f32.xlu0 %v2713
        %v2715 = vpop.xlane.xlu0 %2714
        %v2716 = vsel %vm871, %v2712, 0.0
        %v2717 = vsel %vm872, %v2715, 0.0
        %v2718 = vadd.f32 %v2716, %v2717
        %v2719 = vrot.slane %v2718, 4
        %v2720 = vadd.f32 %v2718, %v2719
        %v2721 = vrot.slane %v2720, 2
        %v2722 = vadd.f32 %v2720, %v2721
        %v2723 = vrot.slane %v2722, 1
        %v2724 = vadd.f32 %v2722, %v2723
        %s2725 = scvt.s32.f32 %s862
        %v2726 = vstv %s2725
        %v2727 = vrcp.pop %v2726
        %s2728 = vtos %v2727
        %s2729 = smul.f32 0.005, %s2728
        %v2730 = vstv %s2729
        %v2731 = vmul.f32 %v2724, %v2730
        %p2732 = scmp.ne.s32.totalorder %s53, 0
        // Predicated region
        $region161: #{_forward_core.1} parent=87 // pred_check
          %p2733 = pneg %p2732
        $region162: #{_forward_core.1} parent=87 // pred_check_branch
          %2735 = sbr.rel (%p2733) target = $region164
        $region163: #{_forward_core.1} parent=87 // pred_region
          %v2736 = vld [vmem:[#allocation9] sm:$0x1]
          %v2737 = vadd.f32 %v2736, %v2731
          %vm2738 = vcmask 0
          %2739 = vst.msk [vmem:[#allocation9] sm:$0x1] %vm2738, %v2737
        $region164: #{_forward_core.1} parent=87 // pred_fallthru
          _
        %p2740 = scmp.eq.s32.totalorder %s53, 5
        // Predicated region
        $region165: #{_forward_core.1} parent=87 // pred_check
          %p2741 = pneg %p2740
        $region166: #{_forward_core.1} parent=87 // pred_check_branch
          %2743 = sbr.rel (%p2741) target = $region168
        $region167: #{_forward_core.1} parent=87 // pred_region
          %v2744 = vld [vmem:[#allocation9] sm:$0x1]
          %vm2745 = vcmask 0
          %2746 = vst.msk [vmem:[#allocation40] sm:$0x1] %vm2745, %v2744
        $region168: #{_forward_core.1} parent=87 // pred_fallthru
          _
        %v2747 = vsel %vm871, 1, 0
        %v2748 = vsel %vm872, 1, 0
        %vm2749 = vcmp.eq.s32.totalorder %v2747, 1
        %vm2750 = vcmp.eq.s32.totalorder %v2748, 1
        %2753 = vrot.lane.b32.xlu0 %v894, 48
        %v2754 = vpop.permute.xlu0 %2753
        %2755 = vrot.lane.b32.xlu0 %v895, 48
        %v2756 = vpop.permute.xlu0 %2755
        %v2759 = vsel %vm2749, %v1075, %v2754
        %v2760 = vsel %vm2750, %v1076, %v2756
        %v2761 = vsel %vm2749, %v1063, %v1038
        %v2762 = vsel %vm2750, %v1064, %v1040
        %2765 = vrot.lane.b32.xlu0 %v898, 48
        %v2766 = vpop.permute.xlu0 %2765
        %2767 = vrot.lane.b32.xlu0 %v899, 48
        %v2768 = vpop.permute.xlu0 %2767
        %v2771 = vsel %vm2749, %v2474, %v2766
        %v2772 = vsel %vm2750, %v2475, %v2768
        %v2773 = vsel %vm2749, %v2462, %v2437
        %v2774 = vsel %vm2750, %v2463, %v2439
        %2777 = vrot.lane.b32.xlu0 %v902, 48
        %v2778 = vpop.permute.xlu0 %2777
        %2779 = vrot.lane.b32.xlu0 %v903, 48
        %v2780 = vpop.permute.xlu0 %2779
        %v2783 = vsel %vm2749, %v2641, %v2778
        %v2784 = vsel %vm2750, %v2642, %v2780
        %v2785 = vsel %vm2749, %v2629, %v2604
        %v2786 = vsel %vm2750, %v2630, %v2606
        %2789 = vrot.lane.b32.xlu0 %v2759, 80
        %v2790 = vpop.permute.xlu0 %2789
        %2791 = vrot.lane.b32.xlu0 %v2760, 80
        %v2792 = vpop.permute.xlu0 %2791
        %2795 = vst.msk [vmem:[#allocation2] sm:$0xff] %vm920, %v2790
        %2796 = vst.msk [vmem:[#allocation2 + $0x8] sm:$0xff] %vm920, %v2792
        %2799 = vrot.lane.b32.xlu0 %v2761, 112
        %v2800 = vpop.permute.xlu0 %2799
        %2801 = vrot.lane.b32.xlu0 %v2762, 112
        %v2802 = vpop.permute.xlu0 %2801
        %2805 = vst.msk [vmem:[#allocation3] sm:$0xff] %vm920, %v2800
        %2806 = vst.msk [vmem:[#allocation3 + $0x8] sm:$0xff] %vm920, %v2802
        %2809 = vrot.lane.b32.xlu0 %v2771, 80
        %v2810 = vpop.permute.xlu0 %2809
        %2811 = vrot.lane.b32.xlu0 %v2772, 80
        %v2812 = vpop.permute.xlu0 %2811
        %2815 = vst.msk [vmem:[#allocation4] sm:$0xff] %vm920, %v2810
        %2816 = vst.msk [vmem:[#allocation4 + $0x8] sm:$0xff] %vm920, %v2812
        %2819 = vrot.lane.b32.xlu0 %v2773, 112
        %v2820 = vpop.permute.xlu0 %2819
        %2821 = vrot.lane.b32.xlu0 %v2774, 112
        %v2822 = vpop.permute.xlu0 %2821
        %2825 = vst.msk [vmem:[#allocation5] sm:$0xff] %vm920, %v2820
        %2826 = vst.msk [vmem:[#allocation5 + $0x8] sm:$0xff] %vm920, %v2822
        %2829 = vrot.lane.b32.xlu0 %v2783, 80
        %v2830 = vpop.permute.xlu0 %2829
        %2831 = vrot.lane.b32.xlu0 %v2784, 80
        %v2832 = vpop.permute.xlu0 %2831
        %2835 = vst.msk [vmem:[#allocation6] sm:$0xff] %vm920, %v2830
        %2836 = vst.msk [vmem:[#allocation6 + $0x8] sm:$0xff] %vm920, %v2832
        %2839 = vrot.lane.b32.xlu0 %v2785, 112
        %v2840 = vpop.permute.xlu0 %2839
        %2841 = vrot.lane.b32.xlu0 %v2786, 112
        %v2842 = vpop.permute.xlu0 %2841
        %2845 = vst.msk [vmem:[#allocation7] sm:$0xff] %vm920, %v2840
        %2846 = vst.msk [vmem:[#allocation7 + $0x8] sm:$0xff] %vm920, %v2842
        %2849 = vrot.lane.b32.xlu0 %v906, 48
        %v2850 = vpop.permute.xlu0 %2849
        %2851 = vrot.lane.b32.xlu0 %v907, 48
        %v2852 = vpop.permute.xlu0 %2851
        %v2855 = vsel %vm2749, %v1075, %v2850
        %v2856 = vsel %vm2750, %v1076, %v2852
        %2859 = vrot.lane.b32.xlu0 %v2855, 80
        %v2860 = vpop.permute.xlu0 %2859
        %2861 = vrot.lane.b32.xlu0 %v2856, 80
        %v2862 = vpop.permute.xlu0 %2861
        %2865 = vst.msk [vmem:[#allocation8] sm:$0xff] %vm920, %v2860
        %2866 = vst.msk [vmem:[#allocation8 + $0x8] sm:$0xff] %vm920, %v2862
        %v2867 = vpack.c.bf16 %v2772, %v2771
        %v2869 = vunpack.c.l.b16 %v2867
        %v2870 = vunpack.c.h.b16 %v2867
        %v2871 = vpack.c.b16 %v2869, %v2869
        %v2872 = vpack.c.b16 %v2870, %v2870
        %2873 = vrot.lane.b32.xlu0 %v2871, 80
        %v2874 = vpop.permute.xlu0 %2873
        %2875 = vrot.lane.b32.xlu0 %v2872, 80
        %v2876 = vpop.permute.xlu0 %2875
        %vm2879 = vcmask 125952
        %2880 = vst.msk [vmem:[%s854] sm:$0xf] %vm2879, %v2874
        %2881 = vst.msk [vmem:[%s854 + $0x4] sm:$0xf] %vm2879, %v2876
        %s2882 = sand.u32 %s444, 1
        %s2883 = scalar_lea.sflag [#allocation14], %s2882
        %s2884 = sand.u32 %s444, 1
        %s2885 = smul.addr %s2884, 8
        %s2886 = scalar_lea.vmem [#allocation39], %s2885
        // Predicated region
        $region169: #{_forward_core.1} parent=87 // pred_check
          %p2887 = pneg %p454
        $region170: #{_forward_core.1} parent=87 // pred_check_branch
          %2889 = sbr.rel (%p2887) target = $region172
        $region171: #{_forward_core.1} parent=87 // pred_region
          %s2890 = smul.u32 2, %s52
          %s2892 = ssub.s32 128, 128
          %2893 = vsyncadd %s2883, %s2892
          %s2894 = smul.addr %s53, 2
          %s2895 = sadd.s32 %s2890, %s2894
          %s2896 = smul.addr %s2895, 64
          %s2897 = scalar_lea.hbm %s18, %s2896
          %s2898 = sshll.u32 %s2886, 4
          %s2899 = int_to_ptr.vmem [resolvable:$true] %s2898
          %2904 = dma.vmem_to_hbm [thread:$0]  %s2899, 128, %s2897, %s2883, 64, 64, 4
        $region172: #{_forward_core.1} parent=87 // pred_fallthru
          _
        // Predicated region
        $region173: #{_forward_core.1} parent=87 // pred_check
          %p2905 = pneg %p480
        $region174: #{_forward_core.1} parent=87 // pred_check_branch
          %2907 = sbr.rel (%p2905) target = $region176
        $region175: #{_forward_core.1} parent=87 // pred_region
          %s2909 = ssub.s32 16, 16
          %2910 = vsyncadd [#allocation41], %s2909
          %s2911 = smul.addr %s52, 16
          %s2912 = scalar_lea.hbm %s19, %s2911
          %s2914 = sshll.u32 [#allocation40], 4
          %s2915 = int_to_ptr.vmem [resolvable:$true] %s2914
          %2917 = dma.vmem_to_hbm [thread:$0]  %s2915, 16, %s2912, [#allocation41]
        $region176: #{_forward_core.1} parent=87 // pred_fallthru
          _
        // Predicated region
        $region177: #{_forward_core.1} parent=87 // pred_check
          %p2918 = pneg %p480
        $region178: #{_forward_core.1} parent=87 // pred_check_branch
          %2920 = sbr.rel (%p2918) target = $region180
        $region179: #{_forward_core.1} parent=87 // pred_region
          %2921 = dma.done [#allocation41], 16
        $region180: #{_forward_core.1} parent=87 // pred_fallthru
          _
      $region88: #{_forward_core.1} parent=5 // pred_fallthru
        _
      %p2922 = scmp.le.s32.totalorder 2, %s43
      // Predicated region
      $region181: #{_forward_core.1} parent=5 // pred_check
        %p2923 = pneg %p2922
      $region182: #{_forward_core.1} parent=5 // pred_check_branch
        %2925 = sbr.rel (%p2923) target = $region184
      $region183: #{_forward_core.1} parent=5 // pred_region
        %s2926 = ssub.s32 %s43, 2
        // Predicated region
        $region185: #{_forward_core.1} parent=183 // pred_check
          %p2927 = pneg %p460
        $region186: #{_forward_core.1} parent=183 // pred_check_branch
          %2929 = sbr.rel (%p2927) target = $region188
        $region187: #{_forward_core.1} parent=183 // pred_region
          %s2930 = sand.u32 %s445, 1
          %s2931 = scalar_lea.sflag [#allocation14], %s2930
          %s2932 = sand.u32 %s445, 1
          %s2933 = smul.addr %s2932, 8
          %s2934 = scalar_lea.vmem [#allocation39], %s2933
          %2935 = dma.done %s2931, 128
        $region188: #{_forward_core.1} parent=183 // pred_fallthru
          _
      $region184: #{_forward_core.1} parent=5 // pred_fallthru
        _
    $region6: #{_forward_core.1} parent=1 // loop_footer
      %s47 = sadd.s32 1, %s43
    $region7: #{_forward_core.1} parent=1 // loop_footer_branch
      %42 = sbr.rel target = $region3
    $region8: #{_forward_core.1} parent=1 // loop_exit
      _
    %2936 = vsyncpa [#allocation13], 1
    %s2937 = scalar_lea.sflag [#allocation13], 1
    %2938 = vsyncpa %s2937, 1
    %2939 = vsyncpa [#allocation16], 1
    %2940 = vsyncpa [#allocation20], 1
    %2941 = vsyncpa [#allocation23], 1
    %2942 = vsyncpa [#allocation26], 1
    %2943 = vsyncpa [#allocation29], 1
    %2944 = vsyncpa [#allocation32], 1
    %2945 = vsyncpa [#allocation35], 1
    %2946 = vsyncpa [#allocation38], 1
    %2947 = vsyncpa [#allocation14], 1
    %s2948 = scalar_lea.sflag [#allocation14], 1
    %2949 = vsyncpa %s2948, 1
    %2950 = vsyncpa [#allocation41], 1

</llo_original>
